<compile_context>
chip_gen: v7x
topology: tpu7x:2x2x1
jax: 0.10.0
libtpu: 0.0.40
codegen_flags: <defaults>
</compile_context>

<pallas_src>
import math
import functools

import jax
import jax.numpy as jnp
from jax import lax
from jax.experimental import pallas as pl
from jax.experimental.pallas import tpu as pltpu

# ------------------------------- configuration -------------------------------
DIM = 256          # embedding dim (divisible by num_heads)
NUM_HEADS = 4
HEAD_DIM = DIM // NUM_HEADS
LQ = 64            # query sequence length
LK = 128           # key / value sequence length
BATCH = 2
LN_EPS = 1e-5


# --------------------------------- kernel ------------------------------------
def _cross_attention_kernel(q_ref, k_ref, bias_ref,
                            wq_ref, wkv_ref, wo_ref,
                            bq_ref, bkv_ref, bo_ref,
                            g_ref, beta_ref, scale_ref,
                            o_ref, *, num_heads):
    mq, d = q_ref.shape          # (B*Lq, D) batch-interleaved rows
    dh = d // num_heads

    q_in = q_ref[...]            # f32, kept for the residual path
    k_in = k_ref[...]            # f32

    # ---- in-projections: bf16 MXU operands, f32 accumulation ----
    q_bf = q_in.astype(jnp.bfloat16)
    k_bf = k_in.astype(jnp.bfloat16)
    # sm_scale is already folded into Wq / bq.
    q = jnp.dot(q_bf, wq_ref[...], preferred_element_type=jnp.float32) + bq_ref[...]
    kv = jnp.dot(k_bf, wkv_ref[...], preferred_element_type=jnp.float32) + bkv_ref[...]
    k = kv[:, :d]                # 128-aligned lane slices (cheap)
    v = kv[:, d:]

    bias = bias_ref[...]         # 0 for same-batch pairs, -1e30 otherwise

    # ---- per-head attention (static unroll over 4 heads) ----
    heads = []
    for h in range(num_heads):
        lo = h * dh
        qh = q[:, lo:lo + dh].astype(jnp.bfloat16)     # (B*Lq, dh)
        kh = k[:, lo:lo + dh].astype(jnp.bfloat16)     # (B*Lk, dh)
        vh = v[:, lo:lo + dh].astype(jnp.bfloat16)     # (B*Lk, dh)
        # contract last dims directly (no kh.T materialization)
        s = lax.dot_general(qh, kh, (((1,), (1,)), ((), ())),
                            preferred_element_type=jnp.float32) + bias
        m = jnp.max(s, axis=-1, keepdims=True)
        p = jnp.exp(s - m)                              # unnormalized
        l = jnp.sum(p, axis=-1, keepdims=True)
        oh = jnp.dot(p.astype(jnp.bfloat16), vh,
                     preferred_element_type=jnp.float32)   # (B*Lq, dh)
        heads.append(oh * pl.reciprocal(l, approx=True))

    # ---- single full-width out-projection (K = D = 256 fills the MXU) ----
    o_all = jnp.concatenate(heads, axis=-1).astype(jnp.bfloat16)   # (B*Lq, D)
    attn = jnp.dot(o_all, wo_ref[...],
                   preferred_element_type=jnp.float32) + bo_ref[...]

    # torch.nan_to_num(nan=0, posinf=1, neginf=-1); the torch module only
    # applies it when NaN/Inf is present — unconditional application is
    # identical on finite data.
    attn = jnp.where(jnp.isnan(attn), jnp.float32(0.0), attn)
    attn = jnp.where(attn == jnp.inf, jnp.float32(1.0), attn)
    attn = jnp.where(attn == -jnp.inf, jnp.float32(-1.0), attn)

    # ---- residual (learnable scale) + LayerNorm, f32 statistics ----
    resid = q_in + scale_ref[0] * attn
    mu = jnp.mean(resid, axis=-1, keepdims=True)
    var = jnp.mean(jnp.square(resid - mu), axis=-1, keepdims=True)
    o_ref[...] = (resid - mu) * lax.rsqrt(var + LN_EPS) * g_ref[...] + beta_ref[...]


# -------------------------------- wrapper -------------------------------------
def cross_attention(kparams, query, key_seq):
    """query: (Lq, B, D), key_seq: (Lk, B, D) — seq-first like nn.MultiheadAttention."""
    lq, b, d = query.shape
    lk = key_seq.shape[0]
    d2 = 2 * d

    # Row-major reshape (Lq, B, D) -> (Lq*B, D): FREE (no transpose, no copy);
    # rows are batch-interleaved (row r belongs to batch r % B).
    q_in = query.reshape(lq * b, d).astype(jnp.float32)
    k_in = key_seq.reshape(lk * b, d).astype(jnp.float32)

    # Additive mask that suppresses cross-batch attention in the joint
    # (Lq*B, Lk*B) score matrix.  Constant under jit.
    row_b = (jnp.arange(lq * b, dtype=jnp.int32) % b)[:, None]
    col_b = (jnp.arange(lk * b, dtype=jnp.int32) % b)[None, :]
    attn_bias = jnp.where(row_b == col_b, 0.0, -1e30).astype(jnp.float32)

    kernel = functools.partial(_cross_attention_kernel, num_heads=NUM_HEADS)

    out = pl.pallas_call(
        kernel,
        out_shape=jax.ShapeDtypeStruct((lq * b, d), jnp.float32),
        grid=(1,),   # single step: no per-step pipeline overhead on v5e/v6e
        in_specs=[
            pl.BlockSpec((lq * b, d), lambda i: (0, 0)),        # query rows (interleaved)
            pl.BlockSpec((lk * b, d), lambda i: (0, 0)),        # key rows   (interleaved)
            pl.BlockSpec((lq * b, lk * b), lambda i: (0, 0)),   # cross-batch mask bias
            pl.BlockSpec((d, d), lambda i: (0, 0)),             # Wq (bf16, sm_scale folded)
            pl.BlockSpec((d, d2), lambda i: (0, 0)),            # Wk|Wv fused (bf16)
            pl.BlockSpec((d, d), lambda i: (0, 0)),             # Wo (bf16)
            pl.BlockSpec((1, d), lambda i: (0, 0)),             # bq (scaled)
            pl.BlockSpec((1, d2), lambda i: (0, 0)),            # bk|bv fused
            pl.BlockSpec((1, d), lambda i: (0, 0)),             # bo
            pl.BlockSpec((1, d), lambda i: (0, 0)),             # LayerNorm gamma
            pl.BlockSpec((1, d), lambda i: (0, 0)),             # LayerNorm beta
            pl.BlockSpec(memory_space=pltpu.MemorySpace.SMEM),  # scale scalar
        ],
        out_specs=pl.BlockSpec((lq * b, d), lambda i: (0, 0)),
        compiler_params=pltpu.CompilerParams(
            dimension_semantics=("arbitrary",)),
    )(q_in, k_in, attn_bias,
      kparams["wq"], kparams["wkv"], kparams["wo"],
      kparams["bq"], kparams["bkv"], kparams["bo"],
      kparams["ln_g"], kparams["ln_b"], kparams["scale"])

    # Free reshape back to seq-first (Lq, B, D) — no transpose needed.
    return out.reshape(lq, b, d)


# ------------------------- pure-JAX reference (f32) ---------------------------
def cross_attention_ref(params, query, key_seq):
    lq, b, d = query.shape
    lk = key_seq.shape[0]
    nh, dh = NUM_HEADS, d // NUM_HEADS
    q = jnp.einsum("lbd,de->lbe", query, params["wq"]) + params["bq"]
    k = jnp.einsum("lbd,de->lbe", key_seq, params["wk"]) + params["bk"]
    v = jnp.einsum("lbd,de->lbe", key_seq, params["wv"]) + params["bv"]
    q = q.reshape(lq, b, nh, dh)
    k = k.reshape(lk, b, nh, dh)
    v = v.reshape(lk, b, nh, dh)
    s = jnp.einsum("qbhd,kbhd->bhqk", q, k) / math.sqrt(dh)
    p = jax.nn.softmax(s, axis=-1)
    o = jnp.einsum("bhqk,kbhd->qbhd", p, v).reshape(lq, b, d)
    attn = jnp.einsum("lbd,de->lbe", o, params["wo"]) + params["bo"]
    attn = jnp.nan_to_num(attn, nan=0.0, posinf=1.0, neginf=-1.0)
    resid = query + params["scale"] * attn
    mu = resid.mean(-1, keepdims=True)
    var = ((resid - mu) ** 2).mean(-1, keepdims=True)
    return (resid - mu) / jnp.sqrt(var + LN_EPS) * params["ln_g"] + params["ln_b"]


# -------------------------------- parameters ----------------------------------
def init_params(key):
    """f32 master parameters (what the torch module would hold)."""
    ks = jax.random.split(key, 8)
    nrm = lambda k, shape, s=0.02: s * jax.random.normal(k, shape, jnp.float32)
    d = DIM
    return dict(
        wq=nrm(ks[0], (d, d)), wk=nrm(ks[1], (d, d)),
        wv=nrm(ks[2], (d, d)), wo=nrm(ks[3], (d, d)),
        bq=nrm(ks[4], (d,)), bk=nrm(ks[5], (d,)),
        bv=nrm(ks[6], (d,)), bo=nrm(ks[7], (d,)),
        ln_g=jnp.ones((d,), jnp.float32),
        ln_b=jnp.zeros((d,), jnp.float32),
        scale=jnp.asarray(0.1, jnp.float32),   # nn.Parameter(torch.tensor(0.1))
    )


def prepare_kernel_params(p):
    """One-time packing: fold sm_scale into f32 Wq/bq BEFORE the bf16 cast,
    fuse Wk|Wv and bk|bv, cast matmul weights to bf16 (MXU-native)."""
    sm = 1.0 / math.sqrt(HEAD_DIM)
    row = lambda x: x.reshape(1, -1)
    return dict(
        wq=(p["wq"] * sm).astype(jnp.bfloat16),
        wkv=jnp.concatenate([p["wk"], p["wv"]], axis=1).astype(jnp.bfloat16),
        wo=p["wo"].astype(jnp.bfloat16),
        bq=row(p["bq"] * sm),
        bkv=row(jnp.concatenate([p["bk"], p["bv"]])),
        bo=row(p["bo"]),
        ln_g=row(p["ln_g"]),
        ln_b=row(p["ln_b"]),
        scale=p["scale"].reshape(1),
    )


# ----------------------------------- main --------------------------------------
if __name__ == "__main__":
    root = jax.random.PRNGKey(0)
    pkey, qkey, kkey = jax.random.split(root, 3)

    params = init_params(pkey)
    kparams = prepare_kernel_params(params)
    query = jax.random.normal(qkey, (LQ, BATCH, DIM), jnp.float32)
    key_seq = jax.random.normal(kkey, (LK, BATCH, DIM), jnp.float32)

    fwd = jax.jit(cross_attention)
    out = fwd(kparams, query, key_seq)
    jax.block_until_ready(out)

    assert out.shape == (LQ, BATCH, DIM)
    assert bool(jnp.all(jnp.isfinite(out)))

    ref = cross_attention_ref(params, query, key_seq)
    err = float(jnp.max(jnp.abs(out - ref)))
    assert err < 5e-2, f"max |pallas - ref| = {err}"

    print("KERNEL_OK")
</pallas_src>

<mosaic_0001>
module attributes {stable_mosaic.version = 11 : i64} {
  func.func @_cross_attention_kernel(%arg0: i32, %arg1: memref<128x256xf32, #tpu.memory_space<vmem>>, %arg2: memref<256x256xf32, #tpu.memory_space<vmem>>, %arg3: memref<128x256xf32, #tpu.memory_space<vmem>>, %arg4: memref<256x256xbf16, #tpu.memory_space<vmem>>, %arg5: memref<256x512xbf16, #tpu.memory_space<vmem>>, %arg6: memref<256x256xbf16, #tpu.memory_space<vmem>>, %arg7: memref<1x256xf32, #tpu.memory_space<vmem>>, %arg8: memref<1x512xf32, #tpu.memory_space<vmem>>, %arg9: memref<1x256xf32, #tpu.memory_space<vmem>>, %arg10: memref<1x256xf32, #tpu.memory_space<vmem>>, %arg11: memref<1x256xf32, #tpu.memory_space<vmem>>, %arg12: memref<1xf32, #tpu.memory_space<smem>>, %arg13: memref<128x256xf32, #tpu.memory_space<vmem>>) attributes {dimension_semantics = [#tpu.dimension_semantics<arbitrary>], iteration_bounds = array<i64: 1>, scalar_prefetch = 0 : i64, scratch_operands = 0 : i64, tpu.core_type = #tpu.core_type<tc>, window_params = [{pipeline_mode = #tpu.pipeline_mode<synchronous>, transform_indices = @transform_0, window_bounds = array<i64: 128, 256>}, {pipeline_mode = #tpu.pipeline_mode<synchronous>, transform_indices = @transform_1, window_bounds = array<i64: 256, 256>}, {pipeline_mode = #tpu.pipeline_mode<synchronous>, transform_indices = @transform_2, window_bounds = array<i64: 128, 256>}, {pipeline_mode = #tpu.pipeline_mode<synchronous>, transform_indices = @transform_3, window_bounds = array<i64: 256, 256>}, {pipeline_mode = #tpu.pipeline_mode<synchronous>, transform_indices = @transform_4, window_bounds = array<i64: 256, 512>}, {pipeline_mode = #tpu.pipeline_mode<synchronous>, transform_indices = @transform_5, window_bounds = array<i64: 256, 256>}, {pipeline_mode = #tpu.pipeline_mode<synchronous>, transform_indices = @transform_6, window_bounds = array<i64: 1, 256>}, {pipeline_mode = #tpu.pipeline_mode<synchronous>, transform_indices = @transform_7, window_bounds = array<i64: 1, 512>}, {pipeline_mode = #tpu.pipeline_mode<synchronous>, transform_indices = @transform_8, window_bounds = array<i64: 1, 256>}, {pipeline_mode = #tpu.pipeline_mode<synchronous>, transform_indices = @transform_9, window_bounds = array<i64: 1, 256>}, {pipeline_mode = #tpu.pipeline_mode<synchronous>, transform_indices = @transform_10, window_bounds = array<i64: 1, 256>}, {transform_indices = @transform_11, window_bounds = array<i64: 1>}, {pipeline_mode = #tpu.pipeline_mode<synchronous>, transform_indices = @transform_12, window_bounds = array<i64: 128, 256>}]} {
    %c0 = arith.constant 0 : index
    %c0_0 = arith.constant 0 : index
    %0 = vector.load %arg1[%c0, %c0_0] : memref<128x256xf32, #tpu.memory_space<vmem>>, vector<128x256xf32>
    %c0_1 = arith.constant 0 : index
    %c0_2 = arith.constant 0 : index
    %1 = vector.load %arg2[%c0_1, %c0_2] : memref<256x256xf32, #tpu.memory_space<vmem>>, vector<256x256xf32>
    %2 = arith.truncf %0 : vector<128x256xf32> to vector<128x256xbf16>
    %3 = arith.truncf %1 : vector<256x256xf32> to vector<256x256xbf16>
    %c0_3 = arith.constant 0 : index
    %c0_4 = arith.constant 0 : index
    %4 = vector.load %arg4[%c0_3, %c0_4] : memref<256x256xbf16, #tpu.memory_space<vmem>>, vector<256x256xbf16>
    %cst = arith.constant dense<0.000000e+00> : vector<128x256xf32>
    %5 = tpu.matmul %2, %4, %cst {dimension_numbers = #tpu.dot_dimension_numbers<[1], [0], [0], [1], [0, 0, 1, 1], [], []>} : vector<128x256xbf16>, vector<256x256xbf16>, vector<128x256xf32> -> vector<128x256xf32>
    %c0_5 = arith.constant 0 : index
    %c0_6 = arith.constant 0 : index
    %6 = vector.load %arg7[%c0_5, %c0_6] : memref<1x256xf32, #tpu.memory_space<vmem>>, vector<1x256xf32>
    %7 = vector.broadcast %6 : vector<1x256xf32> to vector<128x256xf32>
    %8 = arith.addf %5, %7 : vector<128x256xf32>
    %c0_7 = arith.constant 0 : index
    %c0_8 = arith.constant 0 : index
    %9 = vector.load %arg5[%c0_7, %c0_8] : memref<256x512xbf16, #tpu.memory_space<vmem>>, vector<256x512xbf16>
    %cst_9 = arith.constant dense<0.000000e+00> : vector<256x512xf32>
    %10 = tpu.matmul %3, %9, %cst_9 {dimension_numbers = #tpu.dot_dimension_numbers<[1], [0], [0], [1], [0, 0, 1, 1], [], []>} : vector<256x256xbf16>, vector<256x512xbf16>, vector<256x512xf32> -> vector<256x512xf32>
    %c0_10 = arith.constant 0 : index
    %c0_11 = arith.constant 0 : index
    %11 = vector.load %arg8[%c0_10, %c0_11] : memref<1x512xf32, #tpu.memory_space<vmem>>, vector<1x512xf32>
    %12 = vector.broadcast %11 : vector<1x512xf32> to vector<256x512xf32>
    %13 = arith.addf %10, %12 : vector<256x512xf32>
    %14 = vector.extract_strided_slice %13 {offsets = [0, 0], sizes = [256, 256], strides = [1, 1]} : vector<256x512xf32> to vector<256x256xf32>
    %15 = vector.extract_strided_slice %13 {offsets = [0, 256], sizes = [256, 256], strides = [1, 1]} : vector<256x512xf32> to vector<256x256xf32>
    %c0_12 = arith.constant 0 : index
    %c0_13 = arith.constant 0 : index
    %16 = vector.load %arg3[%c0_12, %c0_13] : memref<128x256xf32, #tpu.memory_space<vmem>>, vector<128x256xf32>
    %17 = vector.extract_strided_slice %8 {offsets = [0, 0], sizes = [128, 64], strides = [1, 1]} : vector<128x256xf32> to vector<128x64xf32>
    %18 = arith.truncf %17 : vector<128x64xf32> to vector<128x64xbf16>
    %19 = vector.extract_strided_slice %14 {offsets = [0, 0], sizes = [256, 64], strides = [1, 1]} : vector<256x256xf32> to vector<256x64xf32>
    %20 = arith.truncf %19 : vector<256x64xf32> to vector<256x64xbf16>
    %21 = vector.extract_strided_slice %15 {offsets = [0, 0], sizes = [256, 64], strides = [1, 1]} : vector<256x256xf32> to vector<256x64xf32>
    %22 = arith.truncf %21 : vector<256x64xf32> to vector<256x64xbf16>
    %cst_14 = arith.constant dense<0.000000e+00> : vector<128x256xf32>
    %23 = tpu.matmul %18, %20, %cst_14 {dimension_numbers = #tpu.dot_dimension_numbers<[1], [1], [0], [0], [0, 0, 1, 0], [], []>} : vector<128x64xbf16>, vector<256x64xbf16>, vector<128x256xf32> -> vector<128x256xf32>
    %24 = arith.addf %23, %16 : vector<128x256xf32>
    %cst_15 = arith.constant dense<0xFF800000> : vector<128xf32>
    %25 = vector.multi_reduction <maximumf>, %24, %cst_15 [1] : vector<128x256xf32> to vector<128xf32>
    %26 = vector.shape_cast %25 : vector<128xf32> to vector<128x1xf32>
    %27 = vector.broadcast %26 : vector<128x1xf32> to vector<128x256xf32>
    %28 = arith.subf %24, %27 : vector<128x256xf32>
    %29 = math.exp %28 : vector<128x256xf32>
    %cst_16 = arith.constant dense<0.000000e+00> : vector<128xf32>
    %30 = vector.multi_reduction <add>, %29, %cst_16 [1] : vector<128x256xf32> to vector<128xf32>
    %31 = vector.shape_cast %30 : vector<128xf32> to vector<128x1xf32>
    %32 = arith.truncf %29 : vector<128x256xf32> to vector<128x256xbf16>
    %cst_17 = arith.constant dense<0.000000e+00> : vector<128x64xf32>
    %33 = tpu.matmul %32, %22, %cst_17 {dimension_numbers = #tpu.dot_dimension_numbers<[1], [0], [0], [1], [0, 0, 1, 1], [], []>} : vector<128x256xbf16>, vector<256x64xbf16>, vector<128x64xf32> -> vector<128x64xf32>
    %34 = tpu.reciprocal %31 {approx = true} : vector<128x1xf32> -> vector<128x1xf32>
    %35 = vector.broadcast %34 : vector<128x1xf32> to vector<128x64xf32>
    %36 = arith.mulf %33, %35 : vector<128x64xf32>
    %37 = vector.extract_strided_slice %8 {offsets = [0, 64], sizes = [128, 64], strides = [1, 1]} : vector<128x256xf32> to vector<128x64xf32>
    %38 = arith.truncf %37 : vector<128x64xf32> to vector<128x64xbf16>
    %39 = vector.extract_strided_slice %14 {offsets = [0, 64], sizes = [256, 64], strides = [1, 1]} : vector<256x256xf32> to vector<256x64xf32>
    %40 = arith.truncf %39 : vector<256x64xf32> to vector<256x64xbf16>
    %41 = vector.extract_strided_slice %15 {offsets = [0, 64], sizes = [256, 64], strides = [1, 1]} : vector<256x256xf32> to vector<256x64xf32>
    %42 = arith.truncf %41 : vector<256x64xf32> to vector<256x64xbf16>
    %cst_18 = arith.constant dense<0.000000e+00> : vector<128x256xf32>
    %43 = tpu.matmul %38, %40, %cst_18 {dimension_numbers = #tpu.dot_dimension_numbers<[1], [1], [0], [0], [0, 0, 1, 0], [], []>} : vector<128x64xbf16>, vector<256x64xbf16>, vector<128x256xf32> -> vector<128x256xf32>
    %44 = arith.addf %43, %16 : vector<128x256xf32>
    %cst_19 = arith.constant dense<0xFF800000> : vector<128xf32>
    %45 = vector.multi_reduction <maximumf>, %44, %cst_19 [1] : vector<128x256xf32> to vector<128xf32>
    %46 = vector.shape_cast %45 : vector<128xf32> to vector<128x1xf32>
    %47 = vector.broadcast %46 : vector<128x1xf32> to vector<128x256xf32>
    %48 = arith.subf %44, %47 : vector<128x256xf32>
    %49 = math.exp %48 : vector<128x256xf32>
    %cst_20 = arith.constant dense<0.000000e+00> : vector<128xf32>
    %50 = vector.multi_reduction <add>, %49, %cst_20 [1] : vector<128x256xf32> to vector<128xf32>
    %51 = vector.shape_cast %50 : vector<128xf32> to vector<128x1xf32>
    %52 = arith.truncf %49 : vector<128x256xf32> to vector<128x256xbf16>
    %cst_21 = arith.constant dense<0.000000e+00> : vector<128x64xf32>
    %53 = tpu.matmul %52, %42, %cst_21 {dimension_numbers = #tpu.dot_dimension_numbers<[1], [0], [0], [1], [0, 0, 1, 1], [], []>} : vector<128x256xbf16>, vector<256x64xbf16>, vector<128x64xf32> -> vector<128x64xf32>
    %54 = tpu.reciprocal %51 {approx = true} : vector<128x1xf32> -> vector<128x1xf32>
    %55 = vector.broadcast %54 : vector<128x1xf32> to vector<128x64xf32>
    %56 = arith.mulf %53, %55 : vector<128x64xf32>
    %57 = vector.extract_strided_slice %8 {offsets = [0, 128], sizes = [128, 64], strides = [1, 1]} : vector<128x256xf32> to vector<128x64xf32>
    %58 = arith.truncf %57 : vector<128x64xf32> to vector<128x64xbf16>
    %59 = vector.extract_strided_slice %14 {offsets = [0, 128], sizes = [256, 64], strides = [1, 1]} : vector<256x256xf32> to vector<256x64xf32>
    %60 = arith.truncf %59 : vector<256x64xf32> to vector<256x64xbf16>
    %61 = vector.extract_strided_slice %15 {offsets = [0, 128], sizes = [256, 64], strides = [1, 1]} : vector<256x256xf32> to vector<256x64xf32>
    %62 = arith.truncf %61 : vector<256x64xf32> to vector<256x64xbf16>
    %cst_22 = arith.constant dense<0.000000e+00> : vector<128x256xf32>
    %63 = tpu.matmul %58, %60, %cst_22 {dimension_numbers = #tpu.dot_dimension_numbers<[1], [1], [0], [0], [0, 0, 1, 0], [], []>} : vector<128x64xbf16>, vector<256x64xbf16>, vector<128x256xf32> -> vector<128x256xf32>
    %64 = arith.addf %63, %16 : vector<128x256xf32>
    %cst_23 = arith.constant dense<0xFF800000> : vector<128xf32>
    %65 = vector.multi_reduction <maximumf>, %64, %cst_23 [1] : vector<128x256xf32> to vector<128xf32>
    %66 = vector.shape_cast %65 : vector<128xf32> to vector<128x1xf32>
    %67 = vector.broadcast %66 : vector<128x1xf32> to vector<128x256xf32>
    %68 = arith.subf %64, %67 : vector<128x256xf32>
    %69 = math.exp %68 : vector<128x256xf32>
    %cst_24 = arith.constant dense<0.000000e+00> : vector<128xf32>
    %70 = vector.multi_reduction <add>, %69, %cst_24 [1] : vector<128x256xf32> to vector<128xf32>
    %71 = vector.shape_cast %70 : vector<128xf32> to vector<128x1xf32>
    %72 = arith.truncf %69 : vector<128x256xf32> to vector<128x256xbf16>
    %cst_25 = arith.constant dense<0.000000e+00> : vector<128x64xf32>
    %73 = tpu.matmul %72, %62, %cst_25 {dimension_numbers = #tpu.dot_dimension_numbers<[1], [0], [0], [1], [0, 0, 1, 1], [], []>} : vector<128x256xbf16>, vector<256x64xbf16>, vector<128x64xf32> -> vector<128x64xf32>
    %74 = tpu.reciprocal %71 {approx = true} : vector<128x1xf32> -> vector<128x1xf32>
    %75 = vector.broadcast %74 : vector<128x1xf32> to vector<128x64xf32>
    %76 = arith.mulf %73, %75 : vector<128x64xf32>
    %77 = vector.extract_strided_slice %8 {offsets = [0, 192], sizes = [128, 64], strides = [1, 1]} : vector<128x256xf32> to vector<128x64xf32>
    %78 = arith.truncf %77 : vector<128x64xf32> to vector<128x64xbf16>
    %79 = vector.extract_strided_slice %14 {offsets = [0, 192], sizes = [256, 64], strides = [1, 1]} : vector<256x256xf32> to vector<256x64xf32>
    %80 = arith.truncf %79 : vector<256x64xf32> to vector<256x64xbf16>
    %81 = vector.extract_strided_slice %15 {offsets = [0, 192], sizes = [256, 64], strides = [1, 1]} : vector<256x256xf32> to vector<256x64xf32>
    %82 = arith.truncf %81 : vector<256x64xf32> to vector<256x64xbf16>
    %cst_26 = arith.constant dense<0.000000e+00> : vector<128x256xf32>
    %83 = tpu.matmul %78, %80, %cst_26 {dimension_numbers = #tpu.dot_dimension_numbers<[1], [1], [0], [0], [0, 0, 1, 0], [], []>} : vector<128x64xbf16>, vector<256x64xbf16>, vector<128x256xf32> -> vector<128x256xf32>
    %84 = arith.addf %83, %16 : vector<128x256xf32>
    %cst_27 = arith.constant dense<0xFF800000> : vector<128xf32>
    %85 = vector.multi_reduction <maximumf>, %84, %cst_27 [1] : vector<128x256xf32> to vector<128xf32>
    %86 = vector.shape_cast %85 : vector<128xf32> to vector<128x1xf32>
    %87 = vector.broadcast %86 : vector<128x1xf32> to vector<128x256xf32>
    %88 = arith.subf %84, %87 : vector<128x256xf32>
    %89 = math.exp %88 : vector<128x256xf32>
    %cst_28 = arith.constant dense<0.000000e+00> : vector<128xf32>
    %90 = vector.multi_reduction <add>, %89, %cst_28 [1] : vector<128x256xf32> to vector<128xf32>
    %91 = vector.shape_cast %90 : vector<128xf32> to vector<128x1xf32>
    %92 = arith.truncf %89 : vector<128x256xf32> to vector<128x256xbf16>
    %cst_29 = arith.constant dense<0.000000e+00> : vector<128x64xf32>
    %93 = tpu.matmul %92, %82, %cst_29 {dimension_numbers = #tpu.dot_dimension_numbers<[1], [0], [0], [1], [0, 0, 1, 1], [], []>} : vector<128x256xbf16>, vector<256x64xbf16>, vector<128x64xf32> -> vector<128x64xf32>
    %94 = tpu.reciprocal %91 {approx = true} : vector<128x1xf32> -> vector<128x1xf32>
    %95 = vector.broadcast %94 : vector<128x1xf32> to vector<128x64xf32>
    %96 = arith.mulf %93, %95 : vector<128x64xf32>
    %97 = tpu.concatenate %36, %56, %76, %96 in 1 : vector<128x64xf32>, vector<128x64xf32>, vector<128x64xf32>, vector<128x64xf32> -> vector<128x256xf32>
    %98 = arith.truncf %97 : vector<128x256xf32> to vector<128x256xbf16>
    %c0_30 = arith.constant 0 : index
    %c0_31 = arith.constant 0 : index
    %99 = vector.load %arg6[%c0_30, %c0_31] : memref<256x256xbf16, #tpu.memory_space<vmem>>, vector<256x256xbf16>
    %cst_32 = arith.constant dense<0.000000e+00> : vector<128x256xf32>
    %100 = tpu.matmul %98, %99, %cst_32 {dimension_numbers = #tpu.dot_dimension_numbers<[1], [0], [0], [1], [0, 0, 1, 1], [], []>} : vector<128x256xbf16>, vector<256x256xbf16>, vector<128x256xf32> -> vector<128x256xf32>
    %c0_33 = arith.constant 0 : index
    %c0_34 = arith.constant 0 : index
    %101 = vector.load %arg9[%c0_33, %c0_34] : memref<1x256xf32, #tpu.memory_space<vmem>>, vector<1x256xf32>
    %102 = vector.broadcast %101 : vector<1x256xf32> to vector<128x256xf32>
    %103 = arith.addf %100, %102 : vector<128x256xf32>
    %104 = arith.cmpf one, %103, %103 : vector<128x256xf32>
    %cst_35 = arith.constant 0.000000e+00 : f32
    %105 = vector.broadcast %cst_35 : f32 to vector<128x256xf32>
    %106 = arith.select %104, %105, %103 : vector<128x256xi1>, vector<128x256xf32>
    %cst_36 = arith.constant 0x7F800000 : f32
    %107 = vector.broadcast %cst_36 : f32 to vector<128x256xf32>
    %108 = arith.cmpf oeq, %106, %107 : vector<128x256xf32>
    %cst_37 = arith.constant 1.000000e+00 : f32
    %109 = vector.broadcast %cst_37 : f32 to vector<128x256xf32>
    %110 = arith.select %108, %109, %106 : vector<128x256xi1>, vector<128x256xf32>
    %cst_38 = arith.constant 0xFF800000 : f32
    %111 = vector.broadcast %cst_38 : f32 to vector<128x256xf32>
    %112 = arith.cmpf oeq, %110, %111 : vector<128x256xf32>
    %cst_39 = arith.constant -1.000000e+00 : f32
    %113 = vector.broadcast %cst_39 : f32 to vector<128x256xf32>
    %114 = arith.select %112, %113, %110 : vector<128x256xi1>, vector<128x256xf32>
    %c0_40 = arith.constant 0 : index
    %115 = memref.load %arg12[%c0_40] : memref<1xf32, #tpu.memory_space<smem>>
    %116 = vector.broadcast %115 : f32 to vector<128x256xf32>
    %117 = arith.mulf %116, %114 : vector<128x256xf32>
    %118 = arith.addf %0, %117 : vector<128x256xf32>
    %cst_41 = arith.constant dense<0.000000e+00> : vector<128xf32>
    %119 = vector.multi_reduction <add>, %118, %cst_41 [1] : vector<128x256xf32> to vector<128xf32>
    %120 = vector.shape_cast %119 : vector<128xf32> to vector<128x1xf32>
    %cst_42 = arith.constant 2.560000e+02 : f32
    %121 = vector.broadcast %cst_42 : f32 to vector<128x1xf32>
    %122 = arith.divf %120, %121 : vector<128x1xf32>
    %123 = vector.broadcast %122 : vector<128x1xf32> to vector<128x256xf32>
    %124 = arith.subf %118, %123 : vector<128x256xf32>
    %125 = arith.mulf %124, %124 : vector<128x256xf32>
    %cst_43 = arith.constant dense<0.000000e+00> : vector<128xf32>
    %126 = vector.multi_reduction <add>, %125, %cst_43 [1] : vector<128x256xf32> to vector<128xf32>
    %127 = vector.shape_cast %126 : vector<128xf32> to vector<128x1xf32>
    %cst_44 = arith.constant 2.560000e+02 : f32
    %128 = vector.broadcast %cst_44 : f32 to vector<128x1xf32>
    %129 = arith.divf %127, %128 : vector<128x1xf32>
    %130 = vector.broadcast %122 : vector<128x1xf32> to vector<128x256xf32>
    %131 = arith.subf %118, %130 : vector<128x256xf32>
    %cst_45 = arith.constant 9.99999974E-6 : f32
    %132 = vector.broadcast %cst_45 : f32 to vector<128x1xf32>
    %133 = arith.addf %129, %132 : vector<128x1xf32>
    %134 = math.rsqrt %133 : vector<128x1xf32>
    %135 = vector.broadcast %134 : vector<128x1xf32> to vector<128x256xf32>
    %136 = arith.mulf %131, %135 : vector<128x256xf32>
    %c0_46 = arith.constant 0 : index
    %c0_47 = arith.constant 0 : index
    %137 = vector.load %arg10[%c0_46, %c0_47] : memref<1x256xf32, #tpu.memory_space<vmem>>, vector<1x256xf32>
    %138 = vector.broadcast %137 : vector<1x256xf32> to vector<128x256xf32>
    %139 = arith.mulf %136, %138 : vector<128x256xf32>
    %c0_48 = arith.constant 0 : index
    %c0_49 = arith.constant 0 : index
    %140 = vector.load %arg11[%c0_48, %c0_49] : memref<1x256xf32, #tpu.memory_space<vmem>>, vector<1x256xf32>
    %141 = vector.broadcast %140 : vector<1x256xf32> to vector<128x256xf32>
    %142 = arith.addf %139, %141 : vector<128x256xf32>
    %c0_50 = arith.constant 0 : index
    %c0_51 = arith.constant 0 : index
    %143 = vector.load %arg13[%c0_50, %c0_51] : memref<128x256xf32, #tpu.memory_space<vmem>>, vector<128x256xf32>
    tpu.vector_store %arg13[%c0_50, %c0_51], %142 {strides = array<i32>} : memref<128x256xf32, #tpu.memory_space<vmem>>, vector<128x256xf32>,
    return
  }
  func.func @transform_0(%arg0: i32) -> (i32, i32) {
    %c0_i32 = arith.constant 0 : i32
    %c0_i32_0 = arith.constant 0 : i32
    %c0_i32_1 = arith.constant 0 : i32
    return %c0_i32, %c0_i32_0 : i32, i32
  }
  func.func @transform_1(%arg0: i32) -> (i32, i32) {
    %c0_i32 = arith.constant 0 : i32
    %c0_i32_0 = arith.constant 0 : i32
    %c0_i32_1 = arith.constant 0 : i32
    return %c0_i32, %c0_i32_0 : i32, i32
  }
  func.func @transform_2(%arg0: i32) -> (i32, i32) {
    %c0_i32 = arith.constant 0 : i32
    %c0_i32_0 = arith.constant 0 : i32
    %c0_i32_1 = arith.constant 0 : i32
    return %c0_i32, %c0_i32_0 : i32, i32
  }
  func.func @transform_3(%arg0: i32) -> (i32, i32) {
    %c0_i32 = arith.constant 0 : i32
    %c0_i32_0 = arith.constant 0 : i32
    %c0_i32_1 = arith.constant 0 : i32
    return %c0_i32, %c0_i32_0 : i32, i32
  }
  func.func @transform_4(%arg0: i32) -> (i32, i32) {
    %c0_i32 = arith.constant 0 : i32
    %c0_i32_0 = arith.constant 0 : i32
    %c0_i32_1 = arith.constant 0 : i32
    return %c0_i32, %c0_i32_0 : i32, i32
  }
  func.func @transform_5(%arg0: i32) -> (i32, i32) {
    %c0_i32 = arith.constant 0 : i32
    %c0_i32_0 = arith.constant 0 : i32
    %c0_i32_1 = arith.constant 0 : i32
    return %c0_i32, %c0_i32_0 : i32, i32
  }
  func.func @transform_6(%arg0: i32) -> (i32, i32) {
    %c0_i32 = arith.constant 0 : i32
    %c0_i32_0 = arith.constant 0 : i32
    %c0_i32_1 = arith.constant 0 : i32
    return %c0_i32, %c0_i32_0 : i32, i32
  }
  func.func @transform_7(%arg0: i32) -> (i32, i32) {
    %c0_i32 = arith.constant 0 : i32
    %c0_i32_0 = arith.constant 0 : i32
    %c0_i32_1 = arith.constant 0 : i32
    return %c0_i32, %c0_i32_0 : i32, i32
  }
  func.func @transform_8(%arg0: i32) -> (i32, i32) {
    %c0_i32 = arith.constant 0 : i32
    %c0_i32_0 = arith.constant 0 : i32
    %c0_i32_1 = arith.constant 0 : i32
    return %c0_i32, %c0_i32_0 : i32, i32
  }
  func.func @transform_9(%arg0: i32) -> (i32, i32) {
    %c0_i32 = arith.constant 0 : i32
    %c0_i32_0 = arith.constant 0 : i32
    %c0_i32_1 = arith.constant 0 : i32
    return %c0_i32, %c0_i32_0 : i32, i32
  }
  func.func @transform_10(%arg0: i32) -> (i32, i32) {
    %c0_i32 = arith.constant 0 : i32
    %c0_i32_0 = arith.constant 0 : i32
    %c0_i32_1 = arith.constant 0 : i32
    return %c0_i32, %c0_i32_0 : i32, i32
  }
  func.func @transform_11(%arg0: i32) -> i32 {
    %c0_i32 = arith.constant 0 : i32
    %c0_i32_0 = arith.constant 0 : i32
    return %c0_i32 : i32
  }
  func.func @transform_12(%arg0: i32) -> (i32, i32) {
    %c0_i32 = arith.constant 0 : i32
    %c0_i32_0 = arith.constant 0 : i32
    %c0_i32_1 = arith.constant 0 : i32
    return %c0_i32, %c0_i32_0 : i32, i32
  }
}

</mosaic_0001>

<llo_original>
// kernel: cross_attention.1
$region0: #{cross_attention.1}
  #allocation0 [shape = 'u32[]', space=smem, size = 0x4, offset = 0x4, fixed_abs, tag = 'smem constant byte address 0x4 - core index']
  #allocation1 [shape = 'u32[144,128]{1,0:T(1,128)}', space=vmem, size = 0x12000, scoped, tag = 'internal scratch']
  #allocation2 [shape = 'f32[1]{0:T(128)S(6)}', space=smem, size = 0x200, scoped, tag = 'scoped memory for cross_attention.1']
  %s0 = inlined_call_operand.vmem [shape: f32[128,256], index: 0, kind: input, shape index: {}]
  %s1 = inlined_call_operand.vmem [shape: f32[256,256], index: 1, kind: input, shape index: {}]
  %s2 = inlined_call_operand.vmem [shape: f32[128,256], index: 2, kind: input, shape index: {}]
  %s3 = inlined_call_operand.vmem [shape: bf16[256,256], index: 3, kind: input, shape index: {}]
  %s4 = inlined_call_operand.vmem [shape: bf16[256,512], index: 4, kind: input, shape index: {}]
  %s5 = inlined_call_operand.vmem [shape: bf16[256,256], index: 5, kind: input, shape index: {}]
  %s6 = inlined_call_operand.vmem [shape: f32[1,256], index: 6, kind: input, shape index: {}]
  %s7 = inlined_call_operand.vmem [shape: f32[1,512], index: 7, kind: input, shape index: {}]
  %s8 = inlined_call_operand.vmem [shape: f32[1,256], index: 8, kind: input, shape index: {}]
  %s9 = inlined_call_operand.vmem [shape: f32[1,256], index: 9, kind: input, shape index: {}]
  %s10 = inlined_call_operand.vmem [shape: f32[1,256], index: 10, kind: input, shape index: {}]
  %s11 = inlined_call_operand.<no memory space> [shape: f32[1], index: 11, kind: input, shape index: {}]
  %s12 = inlined_call_operand.vmem [shape: f32[128,256], index: 12, kind: output, shape index: {}]
  %s13 = sld [smem:[#allocation0]]
  $region58: #{cross_attention.1} parent=0
    _
  %s15 = ssub.s32 1, %s13
  %s16 = scalar_select 0, %s15, %s13
  %17 = sst [smem:[#allocation2]] %s11
  // Predicated region
  $region2: #{cross_attention.1} parent=0 // pred_check
    _
  $region3: #{cross_attention.1} parent=0 // pred_check_branch
    %19 = sbr.rel (0) target = $region5
  $region4: #{cross_attention.1} parent=0 // pred_region
    _
  $region5: #{cross_attention.1} parent=0 // pred_fallthru
    _
  // Predicated region
  $region6: #{cross_attention.1} parent=0 // pred_check
    _
  $region7: #{cross_attention.1} parent=0 // pred_check_branch
    %21 = sbr.rel (0) target = $region9
  $region8: #{cross_attention.1} parent=0 // pred_region
    _
  $region9: #{cross_attention.1} parent=0 // pred_fallthru
    _
  // Predicated region
  $region10: #{cross_attention.1} parent=0 // pred_check
    _
  $region11: #{cross_attention.1} parent=0 // pred_check_branch
    %23 = sbr.rel (0) target = $region13
  $region12: #{cross_attention.1} parent=0 // pred_region
    _
  $region13: #{cross_attention.1} parent=0 // pred_fallthru
    _
  // Predicated region
  $region14: #{cross_attention.1} parent=0 // pred_check
    _
  $region15: #{cross_attention.1} parent=0 // pred_check_branch
    %25 = sbr.rel (0) target = $region17
  $region16: #{cross_attention.1} parent=0 // pred_region
    _
  $region17: #{cross_attention.1} parent=0 // pred_fallthru
    _
  // Predicated region
  $region18: #{cross_attention.1} parent=0 // pred_check
    _
  $region19: #{cross_attention.1} parent=0 // pred_check_branch
    %27 = sbr.rel (0) target = $region21
  $region20: #{cross_attention.1} parent=0 // pred_region
    _
  $region21: #{cross_attention.1} parent=0 // pred_fallthru
    _
  // Predicated region
  $region22: #{cross_attention.1} parent=0 // pred_check
    _
  $region23: #{cross_attention.1} parent=0 // pred_check_branch
    %29 = sbr.rel (0) target = $region25
  $region24: #{cross_attention.1} parent=0 // pred_region
    _
  $region25: #{cross_attention.1} parent=0 // pred_fallthru
    _
  // Predicated region
  $region26: #{cross_attention.1} parent=0 // pred_check
    _
  $region27: #{cross_attention.1} parent=0 // pred_check_branch
    %31 = sbr.rel (0) target = $region29
  $region28: #{cross_attention.1} parent=0 // pred_region
    _
  $region29: #{cross_attention.1} parent=0 // pred_fallthru
    _
  // Predicated region
  $region30: #{cross_attention.1} parent=0 // pred_check
    _
  $region31: #{cross_attention.1} parent=0 // pred_check_branch
    %33 = sbr.rel (0) target = $region33
  $region32: #{cross_attention.1} parent=0 // pred_region
    _
  $region33: #{cross_attention.1} parent=0 // pred_fallthru
    _
  // Predicated region
  $region34: #{cross_attention.1} parent=0 // pred_check
    _
  $region35: #{cross_attention.1} parent=0 // pred_check_branch
    %35 = sbr.rel (0) target = $region37
  $region36: #{cross_attention.1} parent=0 // pred_region
    _
  $region37: #{cross_attention.1} parent=0 // pred_fallthru
    _
  // Predicated region
  $region38: #{cross_attention.1} parent=0 // pred_check
    _
  $region39: #{cross_attention.1} parent=0 // pred_check_branch
    %37 = sbr.rel (0) target = $region41
  $region40: #{cross_attention.1} parent=0 // pred_region
    _
  $region41: #{cross_attention.1} parent=0 // pred_fallthru
    _
  // Predicated region
  $region42: #{cross_attention.1} parent=0 // pred_check
    _
  $region43: #{cross_attention.1} parent=0 // pred_check_branch
    %39 = sbr.rel (0) target = $region45
  $region44: #{cross_attention.1} parent=0 // pred_region
    _
  $region45: #{cross_attention.1} parent=0 // pred_fallthru
    _
  // Predicated region
  $region46: #{cross_attention.1} parent=0 // pred_check
    _
  $region47: #{cross_attention.1} parent=0 // pred_check_branch
    %41 = sbr.rel (0) target = $region49
  $region48: #{cross_attention.1} parent=0 // pred_region
    _
  $region49: #{cross_attention.1} parent=0 // pred_fallthru
    _
  %v43 = vld [vmem:[%s0] sm:$0xff]
  %v44 = vld [vmem:[%s0 + $0x8] sm:$0xff]
  %v45 = vld [vmem:[%s0 + $0x10] sm:$0xff]
  %v46 = vld [vmem:[%s0 + $0x18] sm:$0xff]
  %v47 = vld [vmem:[%s0 + $0x20] sm:$0xff]
  %v48 = vld [vmem:[%s0 + $0x28] sm:$0xff]
  %v49 = vld [vmem:[%s0 + $0x30] sm:$0xff]
  %v50 = vld [vmem:[%s0 + $0x38] sm:$0xff]
  %v51 = vld [vmem:[%s0 + $0x40] sm:$0xff]
  %v52 = vld [vmem:[%s0 + $0x48] sm:$0xff]
  %v53 = vld [vmem:[%s0 + $0x50] sm:$0xff]
  %v54 = vld [vmem:[%s0 + $0x58] sm:$0xff]
  %v55 = vld [vmem:[%s0 + $0x60] sm:$0xff]
  %v56 = vld [vmem:[%s0 + $0x68] sm:$0xff]
  %v57 = vld [vmem:[%s0 + $0x70] sm:$0xff]
  %v58 = vld [vmem:[%s0 + $0x78] sm:$0xff]
  %v59 = vld [vmem:[%s0 + $0x80] sm:$0xff]
  %v60 = vld [vmem:[%s0 + $0x88] sm:$0xff]
  %v61 = vld [vmem:[%s0 + $0x90] sm:$0xff]
  %v62 = vld [vmem:[%s0 + $0x98] sm:$0xff]
  %v63 = vld [vmem:[%s0 + $0xa0] sm:$0xff]
  %v64 = vld [vmem:[%s0 + $0xa8] sm:$0xff]
  %v65 = vld [vmem:[%s0 + $0xb0] sm:$0xff]
  %v66 = vld [vmem:[%s0 + $0xb8] sm:$0xff]
  %v67 = vld [vmem:[%s0 + $0xc0] sm:$0xff]
  %v68 = vld [vmem:[%s0 + $0xc8] sm:$0xff]
  %v69 = vld [vmem:[%s0 + $0xd0] sm:$0xff]
  %v70 = vld [vmem:[%s0 + $0xd8] sm:$0xff]
  %v71 = vld [vmem:[%s0 + $0xe0] sm:$0xff]
  %v72 = vld [vmem:[%s0 + $0xe8] sm:$0xff]
  %v73 = vld [vmem:[%s0 + $0xf0] sm:$0xff]
  %v74 = vld [vmem:[%s0 + $0xf8] sm:$0xff]
  %v75 = vld [vmem:[%s1] sm:$0xff]
  %v76 = vld [vmem:[%s1 + $0x8] sm:$0xff]
  %v77 = vld [vmem:[%s1 + $0x10] sm:$0xff]
  %v78 = vld [vmem:[%s1 + $0x18] sm:$0xff]
  %v79 = vld [vmem:[%s1 + $0x20] sm:$0xff]
  %v80 = vld [vmem:[%s1 + $0x28] sm:$0xff]
  %v81 = vld [vmem:[%s1 + $0x30] sm:$0xff]
  %v82 = vld [vmem:[%s1 + $0x38] sm:$0xff]
  %v83 = vld [vmem:[%s1 + $0x40] sm:$0xff]
  %v84 = vld [vmem:[%s1 + $0x48] sm:$0xff]
  %v85 = vld [vmem:[%s1 + $0x50] sm:$0xff]
  %v86 = vld [vmem:[%s1 + $0x58] sm:$0xff]
  %v87 = vld [vmem:[%s1 + $0x60] sm:$0xff]
  %v88 = vld [vmem:[%s1 + $0x68] sm:$0xff]
  %v89 = vld [vmem:[%s1 + $0x70] sm:$0xff]
  %v90 = vld [vmem:[%s1 + $0x78] sm:$0xff]
  %v91 = vld [vmem:[%s1 + $0x80] sm:$0xff]
  %v92 = vld [vmem:[%s1 + $0x88] sm:$0xff]
  %v93 = vld [vmem:[%s1 + $0x90] sm:$0xff]
  %v94 = vld [vmem:[%s1 + $0x98] sm:$0xff]
  %v95 = vld [vmem:[%s1 + $0xa0] sm:$0xff]
  %v96 = vld [vmem:[%s1 + $0xa8] sm:$0xff]
  %v97 = vld [vmem:[%s1 + $0xb0] sm:$0xff]
  %v98 = vld [vmem:[%s1 + $0xb8] sm:$0xff]
  %v99 = vld [vmem:[%s1 + $0xc0] sm:$0xff]
  %v100 = vld [vmem:[%s1 + $0xc8] sm:$0xff]
  %v101 = vld [vmem:[%s1 + $0xd0] sm:$0xff]
  %v102 = vld [vmem:[%s1 + $0xd8] sm:$0xff]
  %v103 = vld [vmem:[%s1 + $0xe0] sm:$0xff]
  %v104 = vld [vmem:[%s1 + $0xe8] sm:$0xff]
  %v105 = vld [vmem:[%s1 + $0xf0] sm:$0xff]
  %v106 = vld [vmem:[%s1 + $0xf8] sm:$0xff]
  %v107 = vld [vmem:[%s1 + $0x100] sm:$0xff]
  %v108 = vld [vmem:[%s1 + $0x108] sm:$0xff]
  %v109 = vld [vmem:[%s1 + $0x110] sm:$0xff]
  %v110 = vld [vmem:[%s1 + $0x118] sm:$0xff]
  %v111 = vld [vmem:[%s1 + $0x120] sm:$0xff]
  %v112 = vld [vmem:[%s1 + $0x128] sm:$0xff]
  %v113 = vld [vmem:[%s1 + $0x130] sm:$0xff]
  %v114 = vld [vmem:[%s1 + $0x138] sm:$0xff]
  %v115 = vld [vmem:[%s1 + $0x140] sm:$0xff]
  %v116 = vld [vmem:[%s1 + $0x148] sm:$0xff]
  %v117 = vld [vmem:[%s1 + $0x150] sm:$0xff]
  %v118 = vld [vmem:[%s1 + $0x158] sm:$0xff]
  %v119 = vld [vmem:[%s1 + $0x160] sm:$0xff]
  %v120 = vld [vmem:[%s1 + $0x168] sm:$0xff]
  %v121 = vld [vmem:[%s1 + $0x170] sm:$0xff]
  %v122 = vld [vmem:[%s1 + $0x178] sm:$0xff]
  %v123 = vld [vmem:[%s1 + $0x180] sm:$0xff]
  %v124 = vld [vmem:[%s1 + $0x188] sm:$0xff]
  %v125 = vld [vmem:[%s1 + $0x190] sm:$0xff]
  %v126 = vld [vmem:[%s1 + $0x198] sm:$0xff]
  %v127 = vld [vmem:[%s1 + $0x1a0] sm:$0xff]
  %v128 = vld [vmem:[%s1 + $0x1a8] sm:$0xff]
  %v129 = vld [vmem:[%s1 + $0x1b0] sm:$0xff]
  %v130 = vld [vmem:[%s1 + $0x1b8] sm:$0xff]
  %v131 = vld [vmem:[%s1 + $0x1c0] sm:$0xff]
  %v132 = vld [vmem:[%s1 + $0x1c8] sm:$0xff]
  %v133 = vld [vmem:[%s1 + $0x1d0] sm:$0xff]
  %v134 = vld [vmem:[%s1 + $0x1d8] sm:$0xff]
  %v135 = vld [vmem:[%s1 + $0x1e0] sm:$0xff]
  %v136 = vld [vmem:[%s1 + $0x1e8] sm:$0xff]
  %v137 = vld [vmem:[%s1 + $0x1f0] sm:$0xff]
  %v138 = vld [vmem:[%s1 + $0x1f8] sm:$0xff]
  %v139 = vpack.c.bf16 %v45, %v43
  %v140 = vpack.c.bf16 %v46, %v44
  %v141 = vpack.c.bf16 %v49, %v47
  %v142 = vpack.c.bf16 %v50, %v48
  %v143 = vpack.c.bf16 %v53, %v51
  %v144 = vpack.c.bf16 %v54, %v52
  %v145 = vpack.c.bf16 %v57, %v55
  %v146 = vpack.c.bf16 %v58, %v56
  %v147 = vpack.c.bf16 %v61, %v59
  %v148 = vpack.c.bf16 %v62, %v60
  %v149 = vpack.c.bf16 %v65, %v63
  %v150 = vpack.c.bf16 %v66, %v64
  %v151 = vpack.c.bf16 %v69, %v67
  %v152 = vpack.c.bf16 %v70, %v68
  %v153 = vpack.c.bf16 %v73, %v71
  %v154 = vpack.c.bf16 %v74, %v72
  %v155 = vpack.c.bf16 %v77, %v75
  %v156 = vpack.c.bf16 %v78, %v76
  %v157 = vpack.c.bf16 %v81, %v79
  %v158 = vpack.c.bf16 %v82, %v80
  %v159 = vpack.c.bf16 %v85, %v83
  %v160 = vpack.c.bf16 %v86, %v84
  %v161 = vpack.c.bf16 %v89, %v87
  %v162 = vpack.c.bf16 %v90, %v88
  %v163 = vpack.c.bf16 %v93, %v91
  %v164 = vpack.c.bf16 %v94, %v92
  %v165 = vpack.c.bf16 %v97, %v95
  %v166 = vpack.c.bf16 %v98, %v96
  %v167 = vpack.c.bf16 %v101, %v99
  %v168 = vpack.c.bf16 %v102, %v100
  %v169 = vpack.c.bf16 %v105, %v103
  %v170 = vpack.c.bf16 %v106, %v104
  %v171 = vpack.c.bf16 %v109, %v107
  %v172 = vpack.c.bf16 %v110, %v108
  %v173 = vpack.c.bf16 %v113, %v111
  %v174 = vpack.c.bf16 %v114, %v112
  %v175 = vpack.c.bf16 %v117, %v115
  %v176 = vpack.c.bf16 %v118, %v116
  %v177 = vpack.c.bf16 %v121, %v119
  %v178 = vpack.c.bf16 %v122, %v120
  %v179 = vpack.c.bf16 %v125, %v123
  %v180 = vpack.c.bf16 %v126, %v124
  %v181 = vpack.c.bf16 %v129, %v127
  %v182 = vpack.c.bf16 %v130, %v128
  %v183 = vpack.c.bf16 %v133, %v131
  %v184 = vpack.c.bf16 %v134, %v132
  %v185 = vpack.c.bf16 %v137, %v135
  %v186 = vpack.c.bf16 %v138, %v136
  %v187 = vld [vmem:[%s3] sm:$0xff]
  %v188 = vld [vmem:[%s3 + $0x8] sm:$0xff]
  %v189 = vld [vmem:[%s3 + $0x10] sm:$0xff]
  %v190 = vld [vmem:[%s3 + $0x18] sm:$0xff]
  %v191 = vld [vmem:[%s3 + $0x20] sm:$0xff]
  %v192 = vld [vmem:[%s3 + $0x28] sm:$0xff]
  %v193 = vld [vmem:[%s3 + $0x30] sm:$0xff]
  %v194 = vld [vmem:[%s3 + $0x38] sm:$0xff]
  %v195 = vld [vmem:[%s3 + $0x40] sm:$0xff]
  %v196 = vld [vmem:[%s3 + $0x48] sm:$0xff]
  %v197 = vld [vmem:[%s3 + $0x50] sm:$0xff]
  %v198 = vld [vmem:[%s3 + $0x58] sm:$0xff]
  %v199 = vld [vmem:[%s3 + $0x60] sm:$0xff]
  %v200 = vld [vmem:[%s3 + $0x68] sm:$0xff]
  %v201 = vld [vmem:[%s3 + $0x70] sm:$0xff]
  %v202 = vld [vmem:[%s3 + $0x78] sm:$0xff]
  %v203 = vld [vmem:[%s3 + $0x80] sm:$0xff]
  %v204 = vld [vmem:[%s3 + $0x88] sm:$0xff]
  %v205 = vld [vmem:[%s3 + $0x90] sm:$0xff]
  %v206 = vld [vmem:[%s3 + $0x98] sm:$0xff]
  %v207 = vld [vmem:[%s3 + $0xa0] sm:$0xff]
  %v208 = vld [vmem:[%s3 + $0xa8] sm:$0xff]
  %v209 = vld [vmem:[%s3 + $0xb0] sm:$0xff]
  %v210 = vld [vmem:[%s3 + $0xb8] sm:$0xff]
  %v211 = vld [vmem:[%s3 + $0xc0] sm:$0xff]
  %v212 = vld [vmem:[%s3 + $0xc8] sm:$0xff]
  %v213 = vld [vmem:[%s3 + $0xd0] sm:$0xff]
  %v214 = vld [vmem:[%s3 + $0xd8] sm:$0xff]
  %v215 = vld [vmem:[%s3 + $0xe0] sm:$0xff]
  %v216 = vld [vmem:[%s3 + $0xe8] sm:$0xff]
  %v217 = vld [vmem:[%s3 + $0xf0] sm:$0xff]
  %v218 = vld [vmem:[%s3 + $0xf8] sm:$0xff]
  %v219 = vld [vmem:[%s6] sm:$0x3]
  %v221 = vlaneseq
  %v222 = vshrl.u32 %v221, 7
  %v223 = vsub.s32 0, %v222
  %v224 = vrot.slane %v219, %v223
  %v225 = vlaneseq
  %v226 = vshrl.u32 %v225, 7
  %v227 = vsub.s32 1, %v226
  %v228 = vrot.slane %v219, %v227
  %v263 = vunpack.c.l.b16 %v187
  %v264 = vunpack.c.h.b16 %v187
  %v265 = vunpack.c.l.b16 %v188
  %v266 = vunpack.c.h.b16 %v188
  %v267 = vunpack.c.l.b16 %v189
  %v268 = vunpack.c.h.b16 %v189
  %v269 = vunpack.c.l.b16 %v190
  %v270 = vunpack.c.h.b16 %v190
  %v271 = vunpack.c.l.b16 %v191
  %v272 = vunpack.c.h.b16 %v191
  %v273 = vunpack.c.l.b16 %v192
  %v274 = vunpack.c.h.b16 %v192
  %v275 = vunpack.c.l.b16 %v193
  %v276 = vunpack.c.h.b16 %v193
  %v277 = vunpack.c.l.b16 %v194
  %v278 = vunpack.c.h.b16 %v194
  %v279 = vunpack.c.l.b16 %v195
  %v280 = vunpack.c.h.b16 %v195
  %v281 = vunpack.c.l.b16 %v196
  %v282 = vunpack.c.h.b16 %v196
  %v283 = vunpack.c.l.b16 %v197
  %v284 = vunpack.c.h.b16 %v197
  %v285 = vunpack.c.l.b16 %v198
  %v286 = vunpack.c.h.b16 %v198
  %v287 = vunpack.c.l.b16 %v199
  %v288 = vunpack.c.h.b16 %v199
  %v289 = vunpack.c.l.b16 %v200
  %v290 = vunpack.c.h.b16 %v200
  %v291 = vunpack.c.l.b16 %v201
  %v292 = vunpack.c.h.b16 %v201
  %v293 = vunpack.c.l.b16 %v202
  %v294 = vunpack.c.h.b16 %v202
  %v295 = vunpack.c.l.b16 %v203
  %v296 = vunpack.c.h.b16 %v203
  %v297 = vunpack.c.l.b16 %v204
  %v298 = vunpack.c.h.b16 %v204
  %v299 = vunpack.c.l.b16 %v205
  %v300 = vunpack.c.h.b16 %v205
  %v301 = vunpack.c.l.b16 %v206
  %v302 = vunpack.c.h.b16 %v206
  %v303 = vunpack.c.l.b16 %v207
  %v304 = vunpack.c.h.b16 %v207
  %v305 = vunpack.c.l.b16 %v208
  %v306 = vunpack.c.h.b16 %v208
  %v307 = vunpack.c.l.b16 %v209
  %v308 = vunpack.c.h.b16 %v209
  %v309 = vunpack.c.l.b16 %v210
  %v310 = vunpack.c.h.b16 %v210
  %v311 = vunpack.c.l.b16 %v211
  %v312 = vunpack.c.h.b16 %v211
  %v313 = vunpack.c.l.b16 %v212
  %v314 = vunpack.c.h.b16 %v212
  %v315 = vunpack.c.l.b16 %v213
  %v316 = vunpack.c.h.b16 %v213
  %v317 = vunpack.c.l.b16 %v214
  %v318 = vunpack.c.h.b16 %v214
  %v319 = vunpack.c.l.b16 %v215
  %v320 = vunpack.c.h.b16 %v215
  %v321 = vunpack.c.l.b16 %v216
  %v322 = vunpack.c.h.b16 %v216
  %v323 = vunpack.c.l.b16 %v217
  %v324 = vunpack.c.h.b16 %v217
  %v325 = vunpack.c.l.b16 %v218
  %v326 = vunpack.c.h.b16 %v218
  %v327 = vpack.c.b16 %v265, %v263
  %v328 = vpack.c.b16 %v266, %v264
  %v329 = vpack.c.b16 %v269, %v267
  %v330 = vpack.c.b16 %v270, %v268
  %v331 = vpack.c.b16 %v273, %v271
  %v332 = vpack.c.b16 %v274, %v272
  %v333 = vpack.c.b16 %v277, %v275
  %v334 = vpack.c.b16 %v278, %v276
  %v335 = vpack.c.b16 %v281, %v279
  %v336 = vpack.c.b16 %v282, %v280
  %v337 = vpack.c.b16 %v285, %v283
  %v338 = vpack.c.b16 %v286, %v284
  %v339 = vpack.c.b16 %v289, %v287
  %v340 = vpack.c.b16 %v290, %v288
  %v341 = vpack.c.b16 %v293, %v291
  %v342 = vpack.c.b16 %v294, %v292
  %v343 = vpack.c.b16 %v297, %v295
  %v344 = vpack.c.b16 %v298, %v296
  %v345 = vpack.c.b16 %v301, %v299
  %v346 = vpack.c.b16 %v302, %v300
  %v347 = vpack.c.b16 %v305, %v303
  %v348 = vpack.c.b16 %v306, %v304
  %v349 = vpack.c.b16 %v309, %v307
  %v350 = vpack.c.b16 %v310, %v308
  %v351 = vpack.c.b16 %v313, %v311
  %v352 = vpack.c.b16 %v314, %v312
  %v353 = vpack.c.b16 %v317, %v315
  %v354 = vpack.c.b16 %v318, %v316
  %v355 = vpack.c.b16 %v321, %v319
  %v356 = vpack.c.b16 %v322, %v320
  %v357 = vpack.c.b16 %v325, %v323
  %v358 = vpack.c.b16 %v326, %v324
  %391 = vmatprep.subr.bf16.mxu0 %v328
  %392 = vmatpush1.bf16.msra.mxu0 %v327
  %393 = vmatprep.subr.bf16.mxu0 %v330
  %394 = vmatpush1.bf16.msra.mxu0 %v329
  %395 = vmatprep.subr.bf16.mxu0 %v332
  %396 = vmatpush1.bf16.msra.mxu0 %v331
  %397 = vmatprep.subr.bf16.mxu0 %v334
  %398 = vmatpush1.bf16.msra.mxu0 %v333
  %399 = vmatprep.subr.bf16.mxu0 %v336
  %400 = vmatpush1.bf16.msra.mxu0 %v335
  %401 = vmatprep.subr.bf16.mxu0 %v338
  %402 = vmatpush1.bf16.msra.mxu0 %v337
  %403 = vmatprep.subr.bf16.mxu0 %v340
  %404 = vmatpush1.bf16.msra.mxu0 %v339
  %405 = vmatprep.subr.bf16.mxu0 %v342
  %406 = vmatpush1.bf16.msra.mxu0 %v341
  %407 = vmatprep.subr.bf16.mxu0 %v344
  %408 = vmatpush1.bf16.msra.mxu0 %v343
  %409 = vmatprep.subr.bf16.mxu0 %v346
  %410 = vmatpush1.bf16.msra.mxu0 %v345
  %411 = vmatprep.subr.bf16.mxu0 %v348
  %412 = vmatpush1.bf16.msra.mxu0 %v347
  %413 = vmatprep.subr.bf16.mxu0 %v350
  %414 = vmatpush1.bf16.msra.mxu0 %v349
  %415 = vmatprep.subr.bf16.mxu0 %v352
  %416 = vmatpush1.bf16.msra.mxu0 %v351
  %417 = vmatprep.subr.bf16.mxu0 %v354
  %418 = vmatpush1.bf16.msra.mxu0 %v353
  %419 = vmatprep.subr.bf16.mxu0 %v356
  %420 = vmatpush1.bf16.msra.mxu0 %v355
  %421 = vmatprep.subr.bf16.mxu0 %v358
  %422 = vmatpush1.bf16.msra.mxu0 %v357
  %423 = vmatprep.mubr.bf16.mxu0 %v140
  %424 = vmatmul.mubr.bf16.gmra.mrb[0].mxu0 %v139
  %v425 = vpop.f32.mrb[0].mxu0
  %v426 = vadd.f32 %v224, %v425
  %v427 = vpop.f32.mrb[0].mxu0
  %v428 = vadd.f32 %v228, %v427
  %v429 = vpop.f32.mrb[0].mxu0
  %v430 = vadd.f32 %v224, %v429
  %v431 = vpop.f32.mrb[0].mxu0
  %v432 = vadd.f32 %v228, %v431
  %433 = vmatprep.mubr.bf16.mxu0 %v142
  %434 = vmatmul.mubr.bf16.gmra.mrb[0].mxu0 %v141
  %v435 = vpop.f32.mrb[0].mxu0
  %v436 = vadd.f32 %v224, %v435
  %v437 = vpop.f32.mrb[0].mxu0
  %v438 = vadd.f32 %v228, %v437
  %v439 = vpop.f32.mrb[0].mxu0
  %v440 = vadd.f32 %v224, %v439
  %v441 = vpop.f32.mrb[0].mxu0
  %v442 = vadd.f32 %v228, %v441
  %443 = vmatprep.mubr.bf16.mxu0 %v144
  %444 = vmatmul.mubr.bf16.gmra.mrb[0].mxu0 %v143
  %v445 = vpop.f32.mrb[0].mxu0
  %v446 = vadd.f32 %v224, %v445
  %v447 = vpop.f32.mrb[0].mxu0
  %v448 = vadd.f32 %v228, %v447
  %v449 = vpop.f32.mrb[0].mxu0
  %v450 = vadd.f32 %v224, %v449
  %v451 = vpop.f32.mrb[0].mxu0
  %v452 = vadd.f32 %v228, %v451
  %453 = vmatprep.mubr.bf16.mxu0 %v146
  %454 = vmatmul.mubr.bf16.gmra.mrb[0].mxu0 %v145
  %v455 = vpop.f32.mrb[0].mxu0
  %v456 = vadd.f32 %v224, %v455
  %v457 = vpop.f32.mrb[0].mxu0
  %v458 = vadd.f32 %v228, %v457
  %v459 = vpop.f32.mrb[0].mxu0
  %v460 = vadd.f32 %v224, %v459
  %v461 = vpop.f32.mrb[0].mxu0
  %v462 = vadd.f32 %v228, %v461
  %463 = vmatprep.mubr.bf16.mxu0 %v148
  %464 = vmatmul.mubr.bf16.gmra.mrb[0].mxu0 %v147
  %v465 = vpop.f32.mrb[0].mxu0
  %v466 = vadd.f32 %v224, %v465
  %v467 = vpop.f32.mrb[0].mxu0
  %v468 = vadd.f32 %v228, %v467
  %v469 = vpop.f32.mrb[0].mxu0
  %v470 = vadd.f32 %v224, %v469
  %v471 = vpop.f32.mrb[0].mxu0
  %v472 = vadd.f32 %v228, %v471
  %473 = vmatprep.mubr.bf16.mxu0 %v150
  %474 = vmatmul.mubr.bf16.gmra.mrb[0].mxu0 %v149
  %v475 = vpop.f32.mrb[0].mxu0
  %v476 = vadd.f32 %v224, %v475
  %v477 = vpop.f32.mrb[0].mxu0
  %v478 = vadd.f32 %v228, %v477
  %v479 = vpop.f32.mrb[0].mxu0
  %v480 = vadd.f32 %v224, %v479
  %v481 = vpop.f32.mrb[0].mxu0
  %v482 = vadd.f32 %v228, %v481
  %483 = vmatprep.mubr.bf16.mxu0 %v152
  %484 = vmatmul.mubr.bf16.gmra.mrb[0].mxu0 %v151
  %v485 = vpop.f32.mrb[0].mxu0
  %v486 = vadd.f32 %v224, %v485
  %v487 = vpop.f32.mrb[0].mxu0
  %v488 = vadd.f32 %v228, %v487
  %v489 = vpop.f32.mrb[0].mxu0
  %v490 = vadd.f32 %v224, %v489
  %v491 = vpop.f32.mrb[0].mxu0
  %v492 = vadd.f32 %v228, %v491
  %493 = vmatprep.mubr.bf16.mxu0 %v154
  %494 = vmatmul.mubr.bf16.gmra.mrb[0].mxu0 %v153
  %v495 = vpop.f32.mrb[0].mxu0
  %v496 = vadd.f32 %v224, %v495
  %v497 = vpop.f32.mrb[0].mxu0
  %v498 = vadd.f32 %v228, %v497
  %v499 = vpop.f32.mrb[0].mxu0
  %v500 = vadd.f32 %v224, %v499
  %v501 = vpop.f32.mrb[0].mxu0
  %v502 = vadd.f32 %v228, %v501
  %503 = vdwg.mxu0
  %v504 = vld [vmem:[%s4] sm:$0xff]
  %v505 = vld [vmem:[%s4 + $0x8] sm:$0xff]
  %v506 = vld [vmem:[%s4 + $0x10] sm:$0xff]
  %v507 = vld [vmem:[%s4 + $0x18] sm:$0xff]
  %v508 = vld [vmem:[%s4 + $0x20] sm:$0xff]
  %v509 = vld [vmem:[%s4 + $0x28] sm:$0xff]
  %v510 = vld [vmem:[%s4 + $0x30] sm:$0xff]
  %v511 = vld [vmem:[%s4 + $0x38] sm:$0xff]
  %v512 = vld [vmem:[%s4 + $0x40] sm:$0xff]
  %v513 = vld [vmem:[%s4 + $0x48] sm:$0xff]
  %v514 = vld [vmem:[%s4 + $0x50] sm:$0xff]
  %v515 = vld [vmem:[%s4 + $0x58] sm:$0xff]
  %v516 = vld [vmem:[%s4 + $0x60] sm:$0xff]
  %v517 = vld [vmem:[%s4 + $0x68] sm:$0xff]
  %v518 = vld [vmem:[%s4 + $0x70] sm:$0xff]
  %v519 = vld [vmem:[%s4 + $0x78] sm:$0xff]
  %v520 = vld [vmem:[%s4 + $0x80] sm:$0xff]
  %v521 = vld [vmem:[%s4 + $0x88] sm:$0xff]
  %v522 = vld [vmem:[%s4 + $0x90] sm:$0xff]
  %v523 = vld [vmem:[%s4 + $0x98] sm:$0xff]
  %v524 = vld [vmem:[%s4 + $0xa0] sm:$0xff]
  %v525 = vld [vmem:[%s4 + $0xa8] sm:$0xff]
  %v526 = vld [vmem:[%s4 + $0xb0] sm:$0xff]
  %v527 = vld [vmem:[%s4 + $0xb8] sm:$0xff]
  %v528 = vld [vmem:[%s4 + $0xc0] sm:$0xff]
  %v529 = vld [vmem:[%s4 + $0xc8] sm:$0xff]
  %v530 = vld [vmem:[%s4 + $0xd0] sm:$0xff]
  %v531 = vld [vmem:[%s4 + $0xd8] sm:$0xff]
  %v532 = vld [vmem:[%s4 + $0xe0] sm:$0xff]
  %v533 = vld [vmem:[%s4 + $0xe8] sm:$0xff]
  %v534 = vld [vmem:[%s4 + $0xf0] sm:$0xff]
  %v535 = vld [vmem:[%s4 + $0xf8] sm:$0xff]
  %v536 = vld [vmem:[%s4 + $0x100] sm:$0xff]
  %v537 = vld [vmem:[%s4 + $0x108] sm:$0xff]
  %v538 = vld [vmem:[%s4 + $0x110] sm:$0xff]
  %v539 = vld [vmem:[%s4 + $0x118] sm:$0xff]
  %v540 = vld [vmem:[%s4 + $0x120] sm:$0xff]
  %v541 = vld [vmem:[%s4 + $0x128] sm:$0xff]
  %v542 = vld [vmem:[%s4 + $0x130] sm:$0xff]
  %v543 = vld [vmem:[%s4 + $0x138] sm:$0xff]
  %v544 = vld [vmem:[%s4 + $0x140] sm:$0xff]
  %v545 = vld [vmem:[%s4 + $0x148] sm:$0xff]
  %v546 = vld [vmem:[%s4 + $0x150] sm:$0xff]
  %v547 = vld [vmem:[%s4 + $0x158] sm:$0xff]
  %v548 = vld [vmem:[%s4 + $0x160] sm:$0xff]
  %v549 = vld [vmem:[%s4 + $0x168] sm:$0xff]
  %v550 = vld [vmem:[%s4 + $0x170] sm:$0xff]
  %v551 = vld [vmem:[%s4 + $0x178] sm:$0xff]
  %v552 = vld [vmem:[%s4 + $0x180] sm:$0xff]
  %v553 = vld [vmem:[%s4 + $0x188] sm:$0xff]
  %v554 = vld [vmem:[%s4 + $0x190] sm:$0xff]
  %v555 = vld [vmem:[%s4 + $0x198] sm:$0xff]
  %v556 = vld [vmem:[%s4 + $0x1a0] sm:$0xff]
  %v557 = vld [vmem:[%s4 + $0x1a8] sm:$0xff]
  %v558 = vld [vmem:[%s4 + $0x1b0] sm:$0xff]
  %v559 = vld [vmem:[%s4 + $0x1b8] sm:$0xff]
  %v560 = vld [vmem:[%s4 + $0x1c0] sm:$0xff]
  %v561 = vld [vmem:[%s4 + $0x1c8] sm:$0xff]
  %v562 = vld [vmem:[%s4 + $0x1d0] sm:$0xff]
  %v563 = vld [vmem:[%s4 + $0x1d8] sm:$0xff]
  %v564 = vld [vmem:[%s4 + $0x1e0] sm:$0xff]
  %v565 = vld [vmem:[%s4 + $0x1e8] sm:$0xff]
  %v566 = vld [vmem:[%s4 + $0x1f0] sm:$0xff]
  %v567 = vld [vmem:[%s4 + $0x1f8] sm:$0xff]
  %v568 = vld [vmem:[%s7] sm:$0xf]
  %v570 = vlaneseq
  %v571 = vshrl.u32 %v570, 7
  %v572 = vsub.s32 0, %v571
  %v573 = vrot.slane %v568, %v572
  %v574 = vlaneseq
  %v575 = vshrl.u32 %v574, 7
  %v576 = vsub.s32 1, %v575
  %v577 = vrot.slane %v568, %v576
  %v578 = vlaneseq
  %v579 = vshrl.u32 %v578, 7
  %v580 = vsub.s32 2, %v579
  %v581 = vrot.slane %v568, %v580
  %v582 = vlaneseq
  %v583 = vshrl.u32 %v582, 7
  %v584 = vsub.s32 3, %v583
  %v585 = vrot.slane %v568, %v584
  %v654 = vunpack.c.l.b16 %v504
  %v655 = vunpack.c.h.b16 %v504
  %v656 = vunpack.c.l.b16 %v505
  %v657 = vunpack.c.h.b16 %v505
  %v658 = vunpack.c.l.b16 %v506
  %v659 = vunpack.c.h.b16 %v506
  %v660 = vunpack.c.l.b16 %v507
  %v661 = vunpack.c.h.b16 %v507
  %v662 = vunpack.c.l.b16 %v508
  %v663 = vunpack.c.h.b16 %v508
  %v664 = vunpack.c.l.b16 %v509
  %v665 = vunpack.c.h.b16 %v509
  %v666 = vunpack.c.l.b16 %v510
  %v667 = vunpack.c.h.b16 %v510
  %v668 = vunpack.c.l.b16 %v511
  %v669 = vunpack.c.h.b16 %v511
  %v670 = vunpack.c.l.b16 %v512
  %v671 = vunpack.c.h.b16 %v512
  %v672 = vunpack.c.l.b16 %v513
  %v673 = vunpack.c.h.b16 %v513
  %v674 = vunpack.c.l.b16 %v514
  %v675 = vunpack.c.h.b16 %v514
  %v676 = vunpack.c.l.b16 %v515
  %v677 = vunpack.c.h.b16 %v515
  %v678 = vunpack.c.l.b16 %v516
  %v679 = vunpack.c.h.b16 %v516
  %v680 = vunpack.c.l.b16 %v517
  %v681 = vunpack.c.h.b16 %v517
  %v682 = vunpack.c.l.b16 %v518
  %v683 = vunpack.c.h.b16 %v518
  %v684 = vunpack.c.l.b16 %v519
  %v685 = vunpack.c.h.b16 %v519
  %v686 = vunpack.c.l.b16 %v520
  %v687 = vunpack.c.h.b16 %v520
  %v688 = vunpack.c.l.b16 %v521
  %v689 = vunpack.c.h.b16 %v521
  %v690 = vunpack.c.l.b16 %v522
  %v691 = vunpack.c.h.b16 %v522
  %v692 = vunpack.c.l.b16 %v523
  %v693 = vunpack.c.h.b16 %v523
  %v694 = vunpack.c.l.b16 %v524
  %v695 = vunpack.c.h.b16 %v524
  %v696 = vunpack.c.l.b16 %v525
  %v697 = vunpack.c.h.b16 %v525
  %v698 = vunpack.c.l.b16 %v526
  %v699 = vunpack.c.h.b16 %v526
  %v700 = vunpack.c.l.b16 %v527
  %v701 = vunpack.c.h.b16 %v527
  %v702 = vunpack.c.l.b16 %v528
  %v703 = vunpack.c.h.b16 %v528
  %v704 = vunpack.c.l.b16 %v529
  %v705 = vunpack.c.h.b16 %v529
  %v706 = vunpack.c.l.b16 %v530
  %v707 = vunpack.c.h.b16 %v530
  %v708 = vunpack.c.l.b16 %v531
  %v709 = vunpack.c.h.b16 %v531
  %v710 = vunpack.c.l.b16 %v532
  %v711 = vunpack.c.h.b16 %v532
  %v712 = vunpack.c.l.b16 %v533
  %v713 = vunpack.c.h.b16 %v533
  %v714 = vunpack.c.l.b16 %v534
  %v715 = vunpack.c.h.b16 %v534
  %v716 = vunpack.c.l.b16 %v535
  %v717 = vunpack.c.h.b16 %v535
  %v718 = vunpack.c.l.b16 %v536
  %v719 = vunpack.c.h.b16 %v536
  %v720 = vunpack.c.l.b16 %v537
  %v721 = vunpack.c.h.b16 %v537
  %v722 = vunpack.c.l.b16 %v538
  %v723 = vunpack.c.h.b16 %v538
  %v724 = vunpack.c.l.b16 %v539
  %v725 = vunpack.c.h.b16 %v539
  %v726 = vunpack.c.l.b16 %v540
  %v727 = vunpack.c.h.b16 %v540
  %v728 = vunpack.c.l.b16 %v541
  %v729 = vunpack.c.h.b16 %v541
  %v730 = vunpack.c.l.b16 %v542
  %v731 = vunpack.c.h.b16 %v542
  %v732 = vunpack.c.l.b16 %v543
  %v733 = vunpack.c.h.b16 %v543
  %v734 = vunpack.c.l.b16 %v544
  %v735 = vunpack.c.h.b16 %v544
  %v736 = vunpack.c.l.b16 %v545
  %v737 = vunpack.c.h.b16 %v545
  %v738 = vunpack.c.l.b16 %v546
  %v739 = vunpack.c.h.b16 %v546
  %v740 = vunpack.c.l.b16 %v547
  %v741 = vunpack.c.h.b16 %v547
  %v742 = vunpack.c.l.b16 %v548
  %v743 = vunpack.c.h.b16 %v548
  %v744 = vunpack.c.l.b16 %v549
  %v745 = vunpack.c.h.b16 %v549
  %v746 = vunpack.c.l.b16 %v550
  %v747 = vunpack.c.h.b16 %v550
  %v748 = vunpack.c.l.b16 %v551
  %v749 = vunpack.c.h.b16 %v551
  %v750 = vunpack.c.l.b16 %v552
  %v751 = vunpack.c.h.b16 %v552
  %v752 = vunpack.c.l.b16 %v553
  %v753 = vunpack.c.h.b16 %v553
  %v754 = vunpack.c.l.b16 %v554
  %v755 = vunpack.c.h.b16 %v554
  %v756 = vunpack.c.l.b16 %v555
  %v757 = vunpack.c.h.b16 %v555
  %v758 = vunpack.c.l.b16 %v556
  %v759 = vunpack.c.h.b16 %v556
  %v760 = vunpack.c.l.b16 %v557
  %v761 = vunpack.c.h.b16 %v557
  %v762 = vunpack.c.l.b16 %v558
  %v763 = vunpack.c.h.b16 %v558
  %v764 = vunpack.c.l.b16 %v559
  %v765 = vunpack.c.h.b16 %v559
  %v766 = vunpack.c.l.b16 %v560
  %v767 = vunpack.c.h.b16 %v560
  %v768 = vunpack.c.l.b16 %v561
  %v769 = vunpack.c.h.b16 %v561
  %v770 = vunpack.c.l.b16 %v562
  %v771 = vunpack.c.h.b16 %v562
  %v772 = vunpack.c.l.b16 %v563
  %v773 = vunpack.c.h.b16 %v563
  %v774 = vunpack.c.l.b16 %v564
  %v775 = vunpack.c.h.b16 %v564
  %v776 = vunpack.c.l.b16 %v565
  %v777 = vunpack.c.h.b16 %v565
  %v778 = vunpack.c.l.b16 %v566
  %v779 = vunpack.c.h.b16 %v566
  %v780 = vunpack.c.l.b16 %v567
  %v781 = vunpack.c.h.b16 %v567
  %v782 = vpack.c.b16 %v658, %v654
  %v783 = vpack.c.b16 %v659, %v655
  %v784 = vpack.c.b16 %v660, %v656
  %v785 = vpack.c.b16 %v661, %v657
  %v786 = vpack.c.b16 %v666, %v662
  %v787 = vpack.c.b16 %v667, %v663
  %v788 = vpack.c.b16 %v668, %v664
  %v789 = vpack.c.b16 %v669, %v665
  %v790 = vpack.c.b16 %v674, %v670
  %v791 = vpack.c.b16 %v675, %v671
  %v792 = vpack.c.b16 %v676, %v672
  %v793 = vpack.c.b16 %v677, %v673
  %v794 = vpack.c.b16 %v682, %v678
  %v795 = vpack.c.b16 %v683, %v679
  %v796 = vpack.c.b16 %v684, %v680
  %v797 = vpack.c.b16 %v685, %v681
  %v798 = vpack.c.b16 %v690, %v686
  %v799 = vpack.c.b16 %v691, %v687
  %v800 = vpack.c.b16 %v692, %v688
  %v801 = vpack.c.b16 %v693, %v689
  %v802 = vpack.c.b16 %v698, %v694
  %v803 = vpack.c.b16 %v699, %v695
  %v804 = vpack.c.b16 %v700, %v696
  %v805 = vpack.c.b16 %v701, %v697
  %v806 = vpack.c.b16 %v706, %v702
  %v807 = vpack.c.b16 %v707, %v703
  %v808 = vpack.c.b16 %v708, %v704
  %v809 = vpack.c.b16 %v709, %v705
  %v810 = vpack.c.b16 %v714, %v710
  %v811 = vpack.c.b16 %v715, %v711
  %v812 = vpack.c.b16 %v716, %v712
  %v813 = vpack.c.b16 %v717, %v713
  %v814 = vpack.c.b16 %v722, %v718
  %v815 = vpack.c.b16 %v723, %v719
  %v816 = vpack.c.b16 %v724, %v720
  %v817 = vpack.c.b16 %v725, %v721
  %v818 = vpack.c.b16 %v730, %v726
  %v819 = vpack.c.b16 %v731, %v727
  %v820 = vpack.c.b16 %v732, %v728
  %v821 = vpack.c.b16 %v733, %v729
  %v822 = vpack.c.b16 %v738, %v734
  %v823 = vpack.c.b16 %v739, %v735
  %v824 = vpack.c.b16 %v740, %v736
  %v825 = vpack.c.b16 %v741, %v737
  %v826 = vpack.c.b16 %v746, %v742
  %v827 = vpack.c.b16 %v747, %v743
  %v828 = vpack.c.b16 %v748, %v744
  %v829 = vpack.c.b16 %v749, %v745
  %v830 = vpack.c.b16 %v754, %v750
  %v831 = vpack.c.b16 %v755, %v751
  %v832 = vpack.c.b16 %v756, %v752
  %v833 = vpack.c.b16 %v757, %v753
  %v834 = vpack.c.b16 %v762, %v758
  %v835 = vpack.c.b16 %v763, %v759
  %v836 = vpack.c.b16 %v764, %v760
  %v837 = vpack.c.b16 %v765, %v761
  %v838 = vpack.c.b16 %v770, %v766
  %v839 = vpack.c.b16 %v771, %v767
  %v840 = vpack.c.b16 %v772, %v768
  %v841 = vpack.c.b16 %v773, %v769
  %v842 = vpack.c.b16 %v778, %v774
  %v843 = vpack.c.b16 %v779, %v775
  %v844 = vpack.c.b16 %v780, %v776
  %v845 = vpack.c.b16 %v781, %v777
  %910 = vmatprep.subr.bf16.mxu0 %v783
  %911 = vmatpush1.bf16.msra.mxu0 %v782
  %912 = vmatprep.subr.bf16.mxu0 %v787
  %913 = vmatpush1.bf16.msra.mxu0 %v786
  %914 = vmatprep.subr.bf16.mxu0 %v791
  %915 = vmatpush1.bf16.msra.mxu0 %v790
  %916 = vmatprep.subr.bf16.mxu0 %v795
  %917 = vmatpush1.bf16.msra.mxu0 %v794
  %918 = vmatprep.subr.bf16.mxu0 %v799
  %919 = vmatpush1.bf16.msra.mxu0 %v798
  %920 = vmatprep.subr.bf16.mxu0 %v803
  %921 = vmatpush1.bf16.msra.mxu0 %v802
  %922 = vmatprep.subr.bf16.mxu0 %v807
  %923 = vmatpush1.bf16.msra.mxu0 %v806
  %924 = vmatprep.subr.bf16.mxu0 %v811
  %925 = vmatpush1.bf16.msra.mxu0 %v810
  %926 = vmatprep.subr.bf16.mxu0 %v815
  %927 = vmatpush1.bf16.msra.mxu0 %v814
  %928 = vmatprep.subr.bf16.mxu0 %v819
  %929 = vmatpush1.bf16.msra.mxu0 %v818
  %930 = vmatprep.subr.bf16.mxu0 %v823
  %931 = vmatpush1.bf16.msra.mxu0 %v822
  %932 = vmatprep.subr.bf16.mxu0 %v827
  %933 = vmatpush1.bf16.msra.mxu0 %v826
  %934 = vmatprep.subr.bf16.mxu0 %v831
  %935 = vmatpush1.bf16.msra.mxu0 %v830
  %936 = vmatprep.subr.bf16.mxu0 %v835
  %937 = vmatpush1.bf16.msra.mxu0 %v834
  %938 = vmatprep.subr.bf16.mxu0 %v839
  %939 = vmatpush1.bf16.msra.mxu0 %v838
  %940 = vmatprep.subr.bf16.mxu0 %v843
  %941 = vmatpush1.bf16.msra.mxu0 %v842
  %942 = vmatprep.mubr.bf16.mxu0 %v156
  %943 = vmatmul.mubr.bf16.gmra.mrb[0].mxu0 %v155
  %v944 = vpop.f32.mrb[0].mxu0
  %v945 = vadd.f32 %v573, %v944
  %v946 = vpop.f32.mrb[0].mxu0
  %v947 = vadd.f32 %v577, %v946
  %v948 = vpop.f32.mrb[0].mxu0
  %v949 = vadd.f32 %v573, %v948
  %v950 = vpop.f32.mrb[0].mxu0
  %v951 = vadd.f32 %v577, %v950
  %952 = vmatprep.mubr.bf16.mxu0 %v158
  %953 = vmatmul.mubr.bf16.gmra.mrb[0].mxu0 %v157
  %v954 = vpop.f32.mrb[0].mxu0
  %v955 = vadd.f32 %v573, %v954
  %v956 = vpop.f32.mrb[0].mxu0
  %v957 = vadd.f32 %v577, %v956
  %v958 = vpop.f32.mrb[0].mxu0
  %v959 = vadd.f32 %v573, %v958
  %v960 = vpop.f32.mrb[0].mxu0
  %v961 = vadd.f32 %v577, %v960
  %962 = vmatprep.mubr.bf16.mxu0 %v160
  %963 = vmatmul.mubr.bf16.gmra.mrb[0].mxu0 %v159
  %v964 = vpop.f32.mrb[0].mxu0
  %v965 = vadd.f32 %v573, %v964
  %v966 = vpop.f32.mrb[0].mxu0
  %v967 = vadd.f32 %v577, %v966
  %v968 = vpop.f32.mrb[0].mxu0
  %v969 = vadd.f32 %v573, %v968
  %v970 = vpop.f32.mrb[0].mxu0
  %v971 = vadd.f32 %v577, %v970
  %972 = vmatprep.mubr.bf16.mxu0 %v162
  %973 = vmatmul.mubr.bf16.gmra.mrb[0].mxu0 %v161
  %v974 = vpop.f32.mrb[0].mxu0
  %v975 = vadd.f32 %v573, %v974
  %v976 = vpop.f32.mrb[0].mxu0
  %v977 = vadd.f32 %v577, %v976
  %v978 = vpop.f32.mrb[0].mxu0
  %v979 = vadd.f32 %v573, %v978
  %v980 = vpop.f32.mrb[0].mxu0
  %v981 = vadd.f32 %v577, %v980
  %982 = vmatprep.mubr.bf16.mxu0 %v164
  %983 = vmatmul.mubr.bf16.gmra.mrb[0].mxu0 %v163
  %v984 = vpop.f32.mrb[0].mxu0
  %v985 = vadd.f32 %v573, %v984
  %v986 = vpop.f32.mrb[0].mxu0
  %v987 = vadd.f32 %v577, %v986
  %v988 = vpop.f32.mrb[0].mxu0
  %v989 = vadd.f32 %v573, %v988
  %v990 = vpop.f32.mrb[0].mxu0
  %v991 = vadd.f32 %v577, %v990
  %992 = vmatprep.mubr.bf16.mxu0 %v166
  %993 = vmatmul.mubr.bf16.gmra.mrb[0].mxu0 %v165
  %v994 = vpop.f32.mrb[0].mxu0
  %v995 = vadd.f32 %v573, %v994
  %v996 = vpop.f32.mrb[0].mxu0
  %v997 = vadd.f32 %v577, %v996
  %v998 = vpop.f32.mrb[0].mxu0
  %v999 = vadd.f32 %v573, %v998
  %v1000 = vpop.f32.mrb[0].mxu0
  %v1001 = vadd.f32 %v577, %v1000
  %1002 = vmatprep.mubr.bf16.mxu0 %v168
  %1003 = vmatmul.mubr.bf16.gmra.mrb[0].mxu0 %v167
  %v1004 = vpop.f32.mrb[0].mxu0
  %v1005 = vadd.f32 %v573, %v1004
  %v1006 = vpop.f32.mrb[0].mxu0
  %v1007 = vadd.f32 %v577, %v1006
  %v1008 = vpop.f32.mrb[0].mxu0
  %v1009 = vadd.f32 %v573, %v1008
  %v1010 = vpop.f32.mrb[0].mxu0
  %v1011 = vadd.f32 %v577, %v1010
  %1012 = vmatprep.mubr.bf16.mxu0 %v170
  %1013 = vmatmul.mubr.bf16.gmra.mrb[0].mxu0 %v169
  %v1014 = vpop.f32.mrb[0].mxu0
  %v1015 = vadd.f32 %v573, %v1014
  %v1016 = vpop.f32.mrb[0].mxu0
  %v1017 = vadd.f32 %v577, %v1016
  %v1018 = vpop.f32.mrb[0].mxu0
  %v1019 = vadd.f32 %v573, %v1018
  %v1020 = vpop.f32.mrb[0].mxu0
  %v1021 = vadd.f32 %v577, %v1020
  %1022 = vmatprep.mubr.bf16.mxu0 %v172
  %1023 = vmatmul.mubr.bf16.gmra.mrb[0].mxu0 %v171
  %v1024 = vpop.f32.mrb[0].mxu0
  %v1025 = vadd.f32 %v573, %v1024
  %v1026 = vpop.f32.mrb[0].mxu0
  %v1027 = vadd.f32 %v577, %v1026
  %v1028 = vpop.f32.mrb[0].mxu0
  %v1029 = vadd.f32 %v573, %v1028
  %v1030 = vpop.f32.mrb[0].mxu0
  %v1031 = vadd.f32 %v577, %v1030
  %1032 = vmatprep.mubr.bf16.mxu0 %v174
  %1033 = vmatmul.mubr.bf16.gmra.mrb[0].mxu0 %v173
  %v1034 = vpop.f32.mrb[0].mxu0
  %v1035 = vadd.f32 %v573, %v1034
  %v1036 = vpop.f32.mrb[0].mxu0
  %v1037 = vadd.f32 %v577, %v1036
  %v1038 = vpop.f32.mrb[0].mxu0
  %v1039 = vadd.f32 %v573, %v1038
  %v1040 = vpop.f32.mrb[0].mxu0
  %v1041 = vadd.f32 %v577, %v1040
  %1042 = vmatprep.mubr.bf16.mxu0 %v176
  %1043 = vmatmul.mubr.bf16.gmra.mrb[0].mxu0 %v175
  %v1044 = vpop.f32.mrb[0].mxu0
  %v1045 = vadd.f32 %v573, %v1044
  %v1046 = vpop.f32.mrb[0].mxu0
  %v1047 = vadd.f32 %v577, %v1046
  %v1048 = vpop.f32.mrb[0].mxu0
  %v1049 = vadd.f32 %v573, %v1048
  %v1050 = vpop.f32.mrb[0].mxu0
  %v1051 = vadd.f32 %v577, %v1050
  %1052 = vmatprep.mubr.bf16.mxu0 %v178
  %1053 = vmatmul.mubr.bf16.gmra.mrb[0].mxu0 %v177
  %v1054 = vpop.f32.mrb[0].mxu0
  %v1055 = vadd.f32 %v573, %v1054
  %v1056 = vpop.f32.mrb[0].mxu0
  %v1057 = vadd.f32 %v577, %v1056
  %v1058 = vpop.f32.mrb[0].mxu0
  %v1059 = vadd.f32 %v573, %v1058
  %v1060 = vpop.f32.mrb[0].mxu0
  %v1061 = vadd.f32 %v577, %v1060
  %1062 = vmatprep.mubr.bf16.mxu0 %v180
  %1063 = vmatmul.mubr.bf16.gmra.mrb[0].mxu0 %v179
  %v1064 = vpop.f32.mrb[0].mxu0
  %v1065 = vadd.f32 %v573, %v1064
  %v1066 = vpop.f32.mrb[0].mxu0
  %v1067 = vadd.f32 %v577, %v1066
  %v1068 = vpop.f32.mrb[0].mxu0
  %v1069 = vadd.f32 %v573, %v1068
  %v1070 = vpop.f32.mrb[0].mxu0
  %v1071 = vadd.f32 %v577, %v1070
  %1072 = vmatprep.mubr.bf16.mxu0 %v182
  %1073 = vmatmul.mubr.bf16.gmra.mrb[0].mxu0 %v181
  %v1074 = vpop.f32.mrb[0].mxu0
  %v1075 = vadd.f32 %v573, %v1074
  %v1076 = vpop.f32.mrb[0].mxu0
  %v1077 = vadd.f32 %v577, %v1076
  %v1078 = vpop.f32.mrb[0].mxu0
  %v1079 = vadd.f32 %v573, %v1078
  %v1080 = vpop.f32.mrb[0].mxu0
  %v1081 = vadd.f32 %v577, %v1080
  %1082 = vmatprep.mubr.bf16.mxu0 %v184
  %1083 = vmatmul.mubr.bf16.gmra.mrb[0].mxu0 %v183
  %v1084 = vpop.f32.mrb[0].mxu0
  %v1085 = vadd.f32 %v573, %v1084
  %v1086 = vpop.f32.mrb[0].mxu0
  %v1087 = vadd.f32 %v577, %v1086
  %v1088 = vpop.f32.mrb[0].mxu0
  %v1089 = vadd.f32 %v573, %v1088
  %v1090 = vpop.f32.mrb[0].mxu0
  %v1091 = vadd.f32 %v577, %v1090
  %1092 = vmatprep.mubr.bf16.mxu0 %v186
  %1093 = vmatmul.mubr.bf16.gmra.mrb[0].mxu0 %v185
  %v1094 = vpop.f32.mrb[0].mxu0
  %v1095 = vadd.f32 %v573, %v1094
  %v1096 = vpop.f32.mrb[0].mxu0
  %v1097 = vadd.f32 %v577, %v1096
  %v1098 = vpop.f32.mrb[0].mxu0
  %v1099 = vadd.f32 %v573, %v1098
  %v1100 = vpop.f32.mrb[0].mxu0
  %v1101 = vadd.f32 %v577, %v1100
  %1102 = vdwg.mxu0
  %1103 = vmatprep.subr.bf16.mxu0 %v785
  %1104 = vmatpush1.bf16.msra.mxu0 %v784
  %1105 = vmatprep.subr.bf16.mxu0 %v789
  %1106 = vmatpush1.bf16.msra.mxu0 %v788
  %1107 = vmatprep.subr.bf16.mxu0 %v793
  %1108 = vmatpush1.bf16.msra.mxu0 %v792
  %1109 = vmatprep.subr.bf16.mxu0 %v797
  %1110 = vmatpush1.bf16.msra.mxu0 %v796
  %1111 = vmatprep.subr.bf16.mxu0 %v801
  %1112 = vmatpush1.bf16.msra.mxu0 %v800
  %1113 = vmatprep.subr.bf16.mxu0 %v805
  %1114 = vmatpush1.bf16.msra.mxu0 %v804
  %1115 = vmatprep.subr.bf16.mxu0 %v809
  %1116 = vmatpush1.bf16.msra.mxu0 %v808
  %1117 = vmatprep.subr.bf16.mxu0 %v813
  %1118 = vmatpush1.bf16.msra.mxu0 %v812
  %1119 = vmatprep.subr.bf16.mxu0 %v817
  %1120 = vmatpush1.bf16.msra.mxu0 %v816
  %1121 = vmatprep.subr.bf16.mxu0 %v821
  %1122 = vmatpush1.bf16.msra.mxu0 %v820
  %1123 = vmatprep.subr.bf16.mxu0 %v825
  %1124 = vmatpush1.bf16.msra.mxu0 %v824
  %1125 = vmatprep.subr.bf16.mxu0 %v829
  %1126 = vmatpush1.bf16.msra.mxu0 %v828
  %1127 = vmatprep.subr.bf16.mxu0 %v833
  %1128 = vmatpush1.bf16.msra.mxu0 %v832
  %1129 = vmatprep.subr.bf16.mxu0 %v837
  %1130 = vmatpush1.bf16.msra.mxu0 %v836
  %1131 = vmatprep.subr.bf16.mxu0 %v841
  %1132 = vmatpush1.bf16.msra.mxu0 %v840
  %1133 = vmatprep.subr.bf16.mxu0 %v845
  %1134 = vmatpush1.bf16.msra.mxu0 %v844
  %1135 = vmatprep.mubr.bf16.mxu0 %v156
  %1136 = vmatmul.mubr.bf16.gmra.mrb[0].mxu0 %v155
  %v1137 = vpop.f32.mrb[0].mxu0
  %v1138 = vadd.f32 %v581, %v1137
  %v1139 = vpop.f32.mrb[0].mxu0
  %v1140 = vadd.f32 %v585, %v1139
  %v1141 = vpop.f32.mrb[0].mxu0
  %v1142 = vadd.f32 %v581, %v1141
  %v1143 = vpop.f32.mrb[0].mxu0
  %v1144 = vadd.f32 %v585, %v1143
  %1145 = vmatprep.mubr.bf16.mxu0 %v158
  %1146 = vmatmul.mubr.bf16.gmra.mrb[0].mxu0 %v157
  %v1147 = vpop.f32.mrb[0].mxu0
  %v1148 = vadd.f32 %v581, %v1147
  %v1149 = vpop.f32.mrb[0].mxu0
  %v1150 = vadd.f32 %v585, %v1149
  %v1151 = vpop.f32.mrb[0].mxu0
  %v1152 = vadd.f32 %v581, %v1151
  %v1153 = vpop.f32.mrb[0].mxu0
  %v1154 = vadd.f32 %v585, %v1153
  %1155 = vmatprep.mubr.bf16.mxu0 %v160
  %1156 = vmatmul.mubr.bf16.gmra.mrb[0].mxu0 %v159
  %v1157 = vpop.f32.mrb[0].mxu0
  %v1158 = vadd.f32 %v581, %v1157
  %v1159 = vpop.f32.mrb[0].mxu0
  %v1160 = vadd.f32 %v585, %v1159
  %v1161 = vpop.f32.mrb[0].mxu0
  %v1162 = vadd.f32 %v581, %v1161
  %v1163 = vpop.f32.mrb[0].mxu0
  %v1164 = vadd.f32 %v585, %v1163
  %1165 = vmatprep.mubr.bf16.mxu0 %v162
  %1166 = vmatmul.mubr.bf16.gmra.mrb[0].mxu0 %v161
  %v1167 = vpop.f32.mrb[0].mxu0
  %v1168 = vadd.f32 %v581, %v1167
  %v1169 = vpop.f32.mrb[0].mxu0
  %v1170 = vadd.f32 %v585, %v1169
  %v1171 = vpop.f32.mrb[0].mxu0
  %v1172 = vadd.f32 %v581, %v1171
  %v1173 = vpop.f32.mrb[0].mxu0
  %v1174 = vadd.f32 %v585, %v1173
  %1175 = vmatprep.mubr.bf16.mxu0 %v164
  %1176 = vmatmul.mubr.bf16.gmra.mrb[0].mxu0 %v163
  %v1177 = vpop.f32.mrb[0].mxu0
  %v1178 = vadd.f32 %v581, %v1177
  %v1179 = vpop.f32.mrb[0].mxu0
  %v1180 = vadd.f32 %v585, %v1179
  %v1181 = vpop.f32.mrb[0].mxu0
  %v1182 = vadd.f32 %v581, %v1181
  %v1183 = vpop.f32.mrb[0].mxu0
  %v1184 = vadd.f32 %v585, %v1183
  %1185 = vmatprep.mubr.bf16.mxu0 %v166
  %1186 = vmatmul.mubr.bf16.gmra.mrb[0].mxu0 %v165
  %v1187 = vpop.f32.mrb[0].mxu0
  %v1188 = vadd.f32 %v581, %v1187
  %v1189 = vpop.f32.mrb[0].mxu0
  %v1190 = vadd.f32 %v585, %v1189
  %v1191 = vpop.f32.mrb[0].mxu0
  %v1192 = vadd.f32 %v581, %v1191
  %v1193 = vpop.f32.mrb[0].mxu0
  %v1194 = vadd.f32 %v585, %v1193
  %1195 = vmatprep.mubr.bf16.mxu0 %v168
  %1196 = vmatmul.mubr.bf16.gmra.mrb[0].mxu0 %v167
  %v1197 = vpop.f32.mrb[0].mxu0
  %v1198 = vadd.f32 %v581, %v1197
  %v1199 = vpop.f32.mrb[0].mxu0
  %v1200 = vadd.f32 %v585, %v1199
  %v1201 = vpop.f32.mrb[0].mxu0
  %v1202 = vadd.f32 %v581, %v1201
  %v1203 = vpop.f32.mrb[0].mxu0
  %v1204 = vadd.f32 %v585, %v1203
  %1205 = vmatprep.mubr.bf16.mxu0 %v170
  %1206 = vmatmul.mubr.bf16.gmra.mrb[0].mxu0 %v169
  %v1207 = vpop.f32.mrb[0].mxu0
  %v1208 = vadd.f32 %v581, %v1207
  %v1209 = vpop.f32.mrb[0].mxu0
  %v1210 = vadd.f32 %v585, %v1209
  %v1211 = vpop.f32.mrb[0].mxu0
  %v1212 = vadd.f32 %v581, %v1211
  %v1213 = vpop.f32.mrb[0].mxu0
  %v1214 = vadd.f32 %v585, %v1213
  %1215 = vmatprep.mubr.bf16.mxu0 %v172
  %1216 = vmatmul.mubr.bf16.gmra.mrb[0].mxu0 %v171
  %v1217 = vpop.f32.mrb[0].mxu0
  %v1218 = vadd.f32 %v581, %v1217
  %v1219 = vpop.f32.mrb[0].mxu0
  %v1220 = vadd.f32 %v585, %v1219
  %v1221 = vpop.f32.mrb[0].mxu0
  %v1222 = vadd.f32 %v581, %v1221
  %v1223 = vpop.f32.mrb[0].mxu0
  %v1224 = vadd.f32 %v585, %v1223
  %1225 = vmatprep.mubr.bf16.mxu0 %v174
  %1226 = vmatmul.mubr.bf16.gmra.mrb[0].mxu0 %v173
  %v1227 = vpop.f32.mrb[0].mxu0
  %v1228 = vadd.f32 %v581, %v1227
  %v1229 = vpop.f32.mrb[0].mxu0
  %v1230 = vadd.f32 %v585, %v1229
  %v1231 = vpop.f32.mrb[0].mxu0
  %v1232 = vadd.f32 %v581, %v1231
  %v1233 = vpop.f32.mrb[0].mxu0
  %v1234 = vadd.f32 %v585, %v1233
  %1235 = vmatprep.mubr.bf16.mxu0 %v176
  %1236 = vmatmul.mubr.bf16.gmra.mrb[0].mxu0 %v175
  %v1237 = vpop.f32.mrb[0].mxu0
  %v1238 = vadd.f32 %v581, %v1237
  %v1239 = vpop.f32.mrb[0].mxu0
  %v1240 = vadd.f32 %v585, %v1239
  %v1241 = vpop.f32.mrb[0].mxu0
  %v1242 = vadd.f32 %v581, %v1241
  %v1243 = vpop.f32.mrb[0].mxu0
  %v1244 = vadd.f32 %v585, %v1243
  %1245 = vmatprep.mubr.bf16.mxu0 %v178
  %1246 = vmatmul.mubr.bf16.gmra.mrb[0].mxu0 %v177
  %v1247 = vpop.f32.mrb[0].mxu0
  %v1248 = vadd.f32 %v581, %v1247
  %v1249 = vpop.f32.mrb[0].mxu0
  %v1250 = vadd.f32 %v585, %v1249
  %v1251 = vpop.f32.mrb[0].mxu0
  %v1252 = vadd.f32 %v581, %v1251
  %v1253 = vpop.f32.mrb[0].mxu0
  %v1254 = vadd.f32 %v585, %v1253
  %1255 = vmatprep.mubr.bf16.mxu0 %v180
  %1256 = vmatmul.mubr.bf16.gmra.mrb[0].mxu0 %v179
  %v1257 = vpop.f32.mrb[0].mxu0
  %v1258 = vadd.f32 %v581, %v1257
  %v1259 = vpop.f32.mrb[0].mxu0
  %v1260 = vadd.f32 %v585, %v1259
  %v1261 = vpop.f32.mrb[0].mxu0
  %v1262 = vadd.f32 %v581, %v1261
  %v1263 = vpop.f32.mrb[0].mxu0
  %v1264 = vadd.f32 %v585, %v1263
  %1265 = vmatprep.mubr.bf16.mxu0 %v182
  %1266 = vmatmul.mubr.bf16.gmra.mrb[0].mxu0 %v181
  %v1267 = vpop.f32.mrb[0].mxu0
  %v1268 = vadd.f32 %v581, %v1267
  %v1269 = vpop.f32.mrb[0].mxu0
  %v1270 = vadd.f32 %v585, %v1269
  %v1271 = vpop.f32.mrb[0].mxu0
  %v1272 = vadd.f32 %v581, %v1271
  %v1273 = vpop.f32.mrb[0].mxu0
  %v1274 = vadd.f32 %v585, %v1273
  %1275 = vmatprep.mubr.bf16.mxu0 %v184
  %1276 = vmatmul.mubr.bf16.gmra.mrb[0].mxu0 %v183
  %v1277 = vpop.f32.mrb[0].mxu0
  %v1278 = vadd.f32 %v581, %v1277
  %v1279 = vpop.f32.mrb[0].mxu0
  %v1280 = vadd.f32 %v585, %v1279
  %v1281 = vpop.f32.mrb[0].mxu0
  %v1282 = vadd.f32 %v581, %v1281
  %v1283 = vpop.f32.mrb[0].mxu0
  %v1284 = vadd.f32 %v585, %v1283
  %1285 = vmatprep.mubr.bf16.mxu0 %v186
  %1286 = vmatmul.mubr.bf16.gmra.mrb[0].mxu0 %v185
  %v1287 = vpop.f32.mrb[0].mxu0
  %v1288 = vadd.f32 %v581, %v1287
  %v1289 = vpop.f32.mrb[0].mxu0
  %v1290 = vadd.f32 %v585, %v1289
  %v1291 = vpop.f32.mrb[0].mxu0
  %v1292 = vadd.f32 %v581, %v1291
  %v1293 = vpop.f32.mrb[0].mxu0
  %v1294 = vadd.f32 %v585, %v1293
  %1295 = vdwg.mxu0
  %v1296 = vld [vmem:[%s2] sm:$0xff]
  %v1297 = vld [vmem:[%s2 + $0x8] sm:$0xff]
  %v1298 = vld [vmem:[%s2 + $0x10] sm:$0xff]
  %v1299 = vld [vmem:[%s2 + $0x18] sm:$0xff]
  %v1300 = vld [vmem:[%s2 + $0x20] sm:$0xff]
  %v1301 = vld [vmem:[%s2 + $0x28] sm:$0xff]
  %v1302 = vld [vmem:[%s2 + $0x30] sm:$0xff]
  %v1303 = vld [vmem:[%s2 + $0x38] sm:$0xff]
  %v1304 = vld [vmem:[%s2 + $0x40] sm:$0xff]
  %v1305 = vld [vmem:[%s2 + $0x48] sm:$0xff]
  %v1306 = vld [vmem:[%s2 + $0x50] sm:$0xff]
  %v1307 = vld [vmem:[%s2 + $0x58] sm:$0xff]
  %v1308 = vld [vmem:[%s2 + $0x60] sm:$0xff]
  %v1309 = vld [vmem:[%s2 + $0x68] sm:$0xff]
  %v1310 = vld [vmem:[%s2 + $0x70] sm:$0xff]
  %v1311 = vld [vmem:[%s2 + $0x78] sm:$0xff]
  %v1312 = vld [vmem:[%s2 + $0x80] sm:$0xff]
  %v1313 = vld [vmem:[%s2 + $0x88] sm:$0xff]
  %v1314 = vld [vmem:[%s2 + $0x90] sm:$0xff]
  %v1315 = vld [vmem:[%s2 + $0x98] sm:$0xff]
  %v1316 = vld [vmem:[%s2 + $0xa0] sm:$0xff]
  %v1317 = vld [vmem:[%s2 + $0xa8] sm:$0xff]
  %v1318 = vld [vmem:[%s2 + $0xb0] sm:$0xff]
  %v1319 = vld [vmem:[%s2 + $0xb8] sm:$0xff]
  %v1320 = vld [vmem:[%s2 + $0xc0] sm:$0xff]
  %v1321 = vld [vmem:[%s2 + $0xc8] sm:$0xff]
  %v1322 = vld [vmem:[%s2 + $0xd0] sm:$0xff]
  %v1323 = vld [vmem:[%s2 + $0xd8] sm:$0xff]
  %v1324 = vld [vmem:[%s2 + $0xe0] sm:$0xff]
  %v1325 = vld [vmem:[%s2 + $0xe8] sm:$0xff]
  %v1326 = vld [vmem:[%s2 + $0xf0] sm:$0xff]
  %v1327 = vld [vmem:[%s2 + $0xf8] sm:$0xff]
  %v1328 = vpack.c.bf16 %v430, %v426
  %v1329 = vpack.c.bf16 %v440, %v436
  %v1330 = vpack.c.bf16 %v450, %v446
  %v1331 = vpack.c.bf16 %v460, %v456
  %v1332 = vpack.c.bf16 %v470, %v466
  %v1333 = vpack.c.bf16 %v480, %v476
  %v1334 = vpack.c.bf16 %v490, %v486
  %v1335 = vpack.c.bf16 %v500, %v496
  %v1336 = vpack.c.bf16 %v949, %v945
  %v1337 = vpack.c.bf16 %v959, %v955
  %v1338 = vpack.c.bf16 %v969, %v965
  %v1339 = vpack.c.bf16 %v979, %v975
  %v1340 = vpack.c.bf16 %v989, %v985
  %v1341 = vpack.c.bf16 %v999, %v995
  %v1342 = vpack.c.bf16 %v1009, %v1005
  %v1343 = vpack.c.bf16 %v1019, %v1015
  %v1344 = vpack.c.bf16 %v1029, %v1025
  %v1345 = vpack.c.bf16 %v1039, %v1035
  %v1346 = vpack.c.bf16 %v1049, %v1045
  %v1347 = vpack.c.bf16 %v1059, %v1055
  %v1348 = vpack.c.bf16 %v1069, %v1065
  %v1349 = vpack.c.bf16 %v1079, %v1075
  %v1350 = vpack.c.bf16 %v1089, %v1085
  %v1351 = vpack.c.bf16 %v1099, %v1095
  %v1352 = vpack.c.bf16 %v1142, %v1138
  %v1353 = vpack.c.bf16 %v1152, %v1148
  %v1354 = vpack.c.bf16 %v1162, %v1158
  %v1355 = vpack.c.bf16 %v1172, %v1168
  %v1356 = vpack.c.bf16 %v1182, %v1178
  %v1357 = vpack.c.bf16 %v1192, %v1188
  %v1358 = vpack.c.bf16 %v1202, %v1198
  %v1359 = vpack.c.bf16 %v1212, %v1208
  %v1360 = vpack.c.bf16 %v1222, %v1218
  %v1361 = vpack.c.bf16 %v1232, %v1228
  %v1362 = vpack.c.bf16 %v1242, %v1238
  %v1363 = vpack.c.bf16 %v1252, %v1248
  %v1364 = vpack.c.bf16 %v1262, %v1258
  %v1365 = vpack.c.bf16 %v1272, %v1268
  %v1366 = vpack.c.bf16 %v1282, %v1278
  %v1367 = vpack.c.bf16 %v1292, %v1288
  %vm1368 = vcmask 523264
  %v1370 = vsel %vm1368, %v1328, 0
  %v1373 = vsel %vm1368, %v1329, 0
  %v1376 = vsel %vm1368, %v1330, 0
  %v1379 = vsel %vm1368, %v1331, 0
  %v1382 = vsel %vm1368, %v1332, 0
  %v1385 = vsel %vm1368, %v1333, 0
  %v1388 = vsel %vm1368, %v1334, 0
  %v1391 = vsel %vm1368, %v1335, 0
  %v1394 = vsel %vm1368, %v1336, 0
  %v1397 = vsel %vm1368, %v1337, 0
  %v1400 = vsel %vm1368, %v1338, 0
  %v1403 = vsel %vm1368, %v1339, 0
  %v1406 = vsel %vm1368, %v1340, 0
  %v1409 = vsel %vm1368, %v1341, 0
  %v1412 = vsel %vm1368, %v1342, 0
  %v1415 = vsel %vm1368, %v1343, 0
  %v1418 = vsel %vm1368, %v1344, 0
  %v1421 = vsel %vm1368, %v1345, 0
  %v1424 = vsel %vm1368, %v1346, 0
  %v1427 = vsel %vm1368, %v1347, 0
  %v1430 = vsel %vm1368, %v1348, 0
  %v1433 = vsel %vm1368, %v1349, 0
  %v1436 = vsel %vm1368, %v1350, 0
  %v1439 = vsel %vm1368, %v1351, 0
  %1441 = vmatprep.subr.bf16.mxu0 0
  %1442 = vmatpush1.bf16.xpose.msra.mxu0 %v1394
  %1443 = vmatprep.subr.bf16.mxu0 0
  %1444 = vmatpush1.bf16.xpose.msra.mxu0 %v1397
  %1445 = vmatprep.subr.bf16.mxu0 0
  %1446 = vmatpush1.bf16.xpose.msra.mxu0 %v1400
  %1447 = vmatprep.subr.bf16.mxu0 0
  %1448 = vmatpush1.bf16.xpose.msra.mxu0 %v1403
  %1449 = vmatprep.subr.bf16.mxu0 0
  %1450 = vmatpush1.bf16.xpose.msra.mxu0 %v1406
  %1451 = vmatprep.subr.bf16.mxu0 0
  %1452 = vmatpush1.bf16.xpose.msra.mxu0 %v1409
  %1453 = vmatprep.subr.bf16.mxu0 0
  %1454 = vmatpush1.bf16.xpose.msra.mxu0 %v1412
  %1455 = vmatprep.subr.bf16.mxu0 0
  %1456 = vmatpush1.bf16.xpose.msra.mxu0 %v1415
  %1457 = vmatprep.subr.bf16.mxu0 0
  %1458 = vmatpush1.bf16.xpose.msra.mxu0 %v1418
  %1459 = vmatprep.subr.bf16.mxu0 0
  %1460 = vmatpush1.bf16.xpose.msra.mxu0 %v1421
  %1461 = vmatprep.subr.bf16.mxu0 0
  %1462 = vmatpush1.bf16.xpose.msra.mxu0 %v1424
  %1463 = vmatprep.subr.bf16.mxu0 0
  %1464 = vmatpush1.bf16.xpose.msra.mxu0 %v1427
  %1465 = vmatprep.subr.bf16.mxu0 0
  %1466 = vmatpush1.bf16.xpose.msra.mxu0 %v1430
  %1467 = vmatprep.subr.bf16.mxu0 0
  %1468 = vmatpush1.bf16.xpose.msra.mxu0 %v1433
  %1469 = vmatprep.subr.bf16.mxu0 0
  %1470 = vmatpush1.bf16.xpose.msra.mxu0 %v1436
  %1471 = vmatprep.subr.bf16.mxu0 0
  %1472 = vmatpush1.bf16.xpose.msra.mxu0 %v1439
  %1473 = vmatprep.mubr.bf16.mxu0 0
  %1474 = vmatmul.mubr.bf16.gmra.mrb[0].mxu0 %v1370
  %v1475 = vpop.f32.mrb[0].mxu0
  %v1476 = vadd.f32 %v1296, %v1475
  %v1477 = vpop.f32.mrb[0].mxu0
  %v1478 = vadd.f32 %v1297, %v1477
  %v1479 = vpop.f32.mrb[0].mxu0
  %v1480 = vadd.f32 %v1298, %v1479
  %v1481 = vpop.f32.mrb[0].mxu0
  %v1482 = vadd.f32 %v1299, %v1481
  %1483 = vmatprep.mubr.bf16.mxu0 0
  %1484 = vmatmul.mubr.bf16.gmra.mrb[0].mxu0 %v1373
  %v1485 = vpop.f32.mrb[0].mxu0
  %v1486 = vadd.f32 %v1300, %v1485
  %v1487 = vpop.f32.mrb[0].mxu0
  %v1488 = vadd.f32 %v1301, %v1487
  %v1489 = vpop.f32.mrb[0].mxu0
  %v1490 = vadd.f32 %v1302, %v1489
  %v1491 = vpop.f32.mrb[0].mxu0
  %v1492 = vadd.f32 %v1303, %v1491
  %1493 = vmatprep.mubr.bf16.mxu0 0
  %1494 = vmatmul.mubr.bf16.gmra.mrb[0].mxu0 %v1376
  %v1495 = vpop.f32.mrb[0].mxu0
  %v1496 = vadd.f32 %v1304, %v1495
  %v1497 = vpop.f32.mrb[0].mxu0
  %v1498 = vadd.f32 %v1305, %v1497
  %v1499 = vpop.f32.mrb[0].mxu0
  %v1500 = vadd.f32 %v1306, %v1499
  %v1501 = vpop.f32.mrb[0].mxu0
  %v1502 = vadd.f32 %v1307, %v1501
  %1503 = vmatprep.mubr.bf16.mxu0 0
  %1504 = vmatmul.mubr.bf16.gmra.mrb[0].mxu0 %v1379
  %v1505 = vpop.f32.mrb[0].mxu0
  %v1506 = vadd.f32 %v1308, %v1505
  %v1507 = vpop.f32.mrb[0].mxu0
  %v1508 = vadd.f32 %v1309, %v1507
  %v1509 = vpop.f32.mrb[0].mxu0
  %v1510 = vadd.f32 %v1310, %v1509
  %v1511 = vpop.f32.mrb[0].mxu0
  %v1512 = vadd.f32 %v1311, %v1511
  %1513 = vmatprep.mubr.bf16.mxu0 0
  %1514 = vmatmul.mubr.bf16.gmra.mrb[0].mxu0 %v1382
  %v1515 = vpop.f32.mrb[0].mxu0
  %v1516 = vadd.f32 %v1312, %v1515
  %v1517 = vpop.f32.mrb[0].mxu0
  %v1518 = vadd.f32 %v1313, %v1517
  %v1519 = vpop.f32.mrb[0].mxu0
  %v1520 = vadd.f32 %v1314, %v1519
  %v1521 = vpop.f32.mrb[0].mxu0
  %v1522 = vadd.f32 %v1315, %v1521
  %1523 = vmatprep.mubr.bf16.mxu0 0
  %1524 = vmatmul.mubr.bf16.gmra.mrb[0].mxu0 %v1385
  %v1525 = vpop.f32.mrb[0].mxu0
  %v1526 = vadd.f32 %v1316, %v1525
  %v1527 = vpop.f32.mrb[0].mxu0
  %v1528 = vadd.f32 %v1317, %v1527
  %v1529 = vpop.f32.mrb[0].mxu0
  %v1530 = vadd.f32 %v1318, %v1529
  %v1531 = vpop.f32.mrb[0].mxu0
  %v1532 = vadd.f32 %v1319, %v1531
  %1533 = vmatprep.mubr.bf16.mxu0 0
  %1534 = vmatmul.mubr.bf16.gmra.mrb[0].mxu0 %v1388
  %v1535 = vpop.f32.mrb[0].mxu0
  %v1536 = vadd.f32 %v1320, %v1535
  %v1537 = vpop.f32.mrb[0].mxu0
  %v1538 = vadd.f32 %v1321, %v1537
  %v1539 = vpop.f32.mrb[0].mxu0
  %v1540 = vadd.f32 %v1322, %v1539
  %v1541 = vpop.f32.mrb[0].mxu0
  %v1542 = vadd.f32 %v1323, %v1541
  %1543 = vmatprep.mubr.bf16.mxu0 0
  %1544 = vmatmul.mubr.bf16.gmra.mrb[0].mxu0 %v1391
  %v1545 = vpop.f32.mrb[0].mxu0
  %v1546 = vadd.f32 %v1324, %v1545
  %v1547 = vpop.f32.mrb[0].mxu0
  %v1548 = vadd.f32 %v1325, %v1547
  %v1549 = vpop.f32.mrb[0].mxu0
  %v1550 = vadd.f32 %v1326, %v1549
  %v1551 = vpop.f32.mrb[0].mxu0
  %v1552 = vadd.f32 %v1327, %v1551
  %1553 = vdwg.mxu0
  %v1554 = vmax.f32 %v1476, %v1478
  %1555 = vmax.xlane.f32.xlu0 %v1554
  %v1556 = vpop.xlane.xlu0 %1555
  %v1557 = vmax.f32 %v1480, %v1482
  %1558 = vmax.xlane.f32.xlu0 %v1557
  %v1559 = vpop.xlane.xlu0 %1558
  %v1560 = vmax.f32 %v1486, %v1488
  %1561 = vmax.xlane.f32.xlu0 %v1560
  %v1562 = vpop.xlane.xlu0 %1561
  %v1563 = vmax.f32 %v1490, %v1492
  %1564 = vmax.xlane.f32.xlu0 %v1563
  %v1565 = vpop.xlane.xlu0 %1564
  %v1566 = vmax.f32 %v1496, %v1498
  %1567 = vmax.xlane.f32.xlu0 %v1566
  %v1568 = vpop.xlane.xlu0 %1567
  %v1569 = vmax.f32 %v1500, %v1502
  %1570 = vmax.xlane.f32.xlu0 %v1569
  %v1571 = vpop.xlane.xlu0 %1570
  %v1572 = vmax.f32 %v1506, %v1508
  %1573 = vmax.xlane.f32.xlu0 %v1572
  %v1574 = vpop.xlane.xlu0 %1573
  %v1575 = vmax.f32 %v1510, %v1512
  %1576 = vmax.xlane.f32.xlu0 %v1575
  %v1577 = vpop.xlane.xlu0 %1576
  %v1578 = vmax.f32 %v1516, %v1518
  %1579 = vmax.xlane.f32.xlu0 %v1578
  %v1580 = vpop.xlane.xlu0 %1579
  %v1581 = vmax.f32 %v1520, %v1522
  %1582 = vmax.xlane.f32.xlu0 %v1581
  %v1583 = vpop.xlane.xlu0 %1582
  %v1584 = vmax.f32 %v1526, %v1528
  %1585 = vmax.xlane.f32.xlu0 %v1584
  %v1586 = vpop.xlane.xlu0 %1585
  %v1587 = vmax.f32 %v1530, %v1532
  %1588 = vmax.xlane.f32.xlu0 %v1587
  %v1589 = vpop.xlane.xlu0 %1588
  %v1590 = vmax.f32 %v1536, %v1538
  %1591 = vmax.xlane.f32.xlu0 %v1590
  %v1592 = vpop.xlane.xlu0 %1591
  %v1593 = vmax.f32 %v1540, %v1542
  %1594 = vmax.xlane.f32.xlu0 %v1593
  %v1595 = vpop.xlane.xlu0 %1594
  %v1596 = vmax.f32 %v1546, %v1548
  %1597 = vmax.xlane.f32.xlu0 %v1596
  %v1598 = vpop.xlane.xlu0 %1597
  %v1599 = vmax.f32 %v1550, %v1552
  %1600 = vmax.xlane.f32.xlu0 %v1599
  %v1601 = vpop.xlane.xlu0 %1600
  %v1602 = vsub.f32 %v1476, %v1556
  %v1603 = vsub.f32 %v1478, %v1556
  %v1604 = vsub.f32 %v1480, %v1559
  %v1605 = vsub.f32 %v1482, %v1559
  %v1606 = vsub.f32 %v1486, %v1562
  %v1607 = vsub.f32 %v1488, %v1562
  %v1608 = vsub.f32 %v1490, %v1565
  %v1609 = vsub.f32 %v1492, %v1565
  %v1610 = vsub.f32 %v1496, %v1568
  %v1611 = vsub.f32 %v1498, %v1568
  %v1612 = vsub.f32 %v1500, %v1571
  %v1613 = vsub.f32 %v1502, %v1571
  %v1614 = vsub.f32 %v1506, %v1574
  %v1615 = vsub.f32 %v1508, %v1574
  %v1616 = vsub.f32 %v1510, %v1577
  %v1617 = vsub.f32 %v1512, %v1577
  %v1618 = vsub.f32 %v1516, %v1580
  %v1619 = vsub.f32 %v1518, %v1580
  %v1620 = vsub.f32 %v1520, %v1583
  %v1621 = vsub.f32 %v1522, %v1583
  %v1622 = vsub.f32 %v1526, %v1586
  %v1623 = vsub.f32 %v1528, %v1586
  %v1624 = vsub.f32 %v1530, %v1589
  %v1625 = vsub.f32 %v1532, %v1589
  %v1626 = vsub.f32 %v1536, %v1592
  %v1627 = vsub.f32 %v1538, %v1592
  %v1628 = vsub.f32 %v1540, %v1595
  %v1629 = vsub.f32 %v1542, %v1595
  %v1630 = vsub.f32 %v1546, %v1598
  %v1631 = vsub.f32 %v1548, %v1598
  %v1632 = vsub.f32 %v1550, %v1601
  %v1633 = vsub.f32 %v1552, %v1601
  %v1634 = vmul.f32 %v1602, 1.442695
  %v1635 = vpow.pop %v1634
  %v1636 = vmul.f32 %v1603, 1.442695
  %v1637 = vpow.pop %v1636
  %v1638 = vmul.f32 %v1604, 1.442695
  %v1639 = vpow.pop %v1638
  %v1640 = vmul.f32 %v1605, 1.442695
  %v1641 = vpow.pop %v1640
  %v1642 = vmul.f32 %v1606, 1.442695
  %v1643 = vpow.pop %v1642
  %v1644 = vmul.f32 %v1607, 1.442695
  %v1645 = vpow.pop %v1644
  %v1646 = vmul.f32 %v1608, 1.442695
  %v1647 = vpow.pop %v1646
  %v1648 = vmul.f32 %v1609, 1.442695
  %v1649 = vpow.pop %v1648
  %v1650 = vmul.f32 %v1610, 1.442695
  %v1651 = vpow.pop %v1650
  %v1652 = vmul.f32 %v1611, 1.442695
  %v1653 = vpow.pop %v1652
  %v1654 = vmul.f32 %v1612, 1.442695
  %v1655 = vpow.pop %v1654
  %v1656 = vmul.f32 %v1613, 1.442695
  %v1657 = vpow.pop %v1656
  %v1658 = vmul.f32 %v1614, 1.442695
  %v1659 = vpow.pop %v1658
  %v1660 = vmul.f32 %v1615, 1.442695
  %v1661 = vpow.pop %v1660
  %v1662 = vmul.f32 %v1616, 1.442695
  %v1663 = vpow.pop %v1662
  %v1664 = vmul.f32 %v1617, 1.442695
  %v1665 = vpow.pop %v1664
  %v1666 = vmul.f32 %v1618, 1.442695
  %v1667 = vpow.pop %v1666
  %v1668 = vmul.f32 %v1619, 1.442695
  %v1669 = vpow.pop %v1668
  %v1670 = vmul.f32 %v1620, 1.442695
  %v1671 = vpow.pop %v1670
  %v1672 = vmul.f32 %v1621, 1.442695
  %v1673 = vpow.pop %v1672
  %v1674 = vmul.f32 %v1622, 1.442695
  %v1675 = vpow.pop %v1674
  %v1676 = vmul.f32 %v1623, 1.442695
  %v1677 = vpow.pop %v1676
  %v1678 = vmul.f32 %v1624, 1.442695
  %v1679 = vpow.pop %v1678
  %v1680 = vmul.f32 %v1625, 1.442695
  %v1681 = vpow.pop %v1680
  %v1682 = vmul.f32 %v1626, 1.442695
  %v1683 = vpow.pop %v1682
  %v1684 = vmul.f32 %v1627, 1.442695
  %v1685 = vpow.pop %v1684
  %v1686 = vmul.f32 %v1628, 1.442695
  %v1687 = vpow.pop %v1686
  %v1688 = vmul.f32 %v1629, 1.442695
  %v1689 = vpow.pop %v1688
  %v1690 = vmul.f32 %v1630, 1.442695
  %v1691 = vpow.pop %v1690
  %v1692 = vmul.f32 %v1631, 1.442695
  %v1693 = vpow.pop %v1692
  %v1694 = vmul.f32 %v1632, 1.442695
  %v1695 = vpow.pop %v1694
  %v1696 = vmul.f32 %v1633, 1.442695
  %v1697 = vpow.pop %v1696
  %v1698 = vadd.f32 %v1635, %v1637
  %1699 = vadd.xlane.f32.xlu0 %v1698
  %v1700 = vpop.xlane.xlu0 %1699
  %v1701 = vadd.f32 %v1639, %v1641
  %1702 = vadd.xlane.f32.xlu0 %v1701
  %v1703 = vpop.xlane.xlu0 %1702
  %v1704 = vadd.f32 %v1643, %v1645
  %1705 = vadd.xlane.f32.xlu0 %v1704
  %v1706 = vpop.xlane.xlu0 %1705
  %v1707 = vadd.f32 %v1647, %v1649
  %1708 = vadd.xlane.f32.xlu0 %v1707
  %v1709 = vpop.xlane.xlu0 %1708
  %v1710 = vadd.f32 %v1651, %v1653
  %1711 = vadd.xlane.f32.xlu0 %v1710
  %v1712 = vpop.xlane.xlu0 %1711
  %v1713 = vadd.f32 %v1655, %v1657
  %1714 = vadd.xlane.f32.xlu0 %v1713
  %v1715 = vpop.xlane.xlu0 %1714
  %v1716 = vadd.f32 %v1659, %v1661
  %1717 = vadd.xlane.f32.xlu0 %v1716
  %v1718 = vpop.xlane.xlu0 %1717
  %v1719 = vadd.f32 %v1663, %v1665
  %1720 = vadd.xlane.f32.xlu0 %v1719
  %v1721 = vpop.xlane.xlu0 %1720
  %v1722 = vadd.f32 %v1667, %v1669
  %1723 = vadd.xlane.f32.xlu0 %v1722
  %v1724 = vpop.xlane.xlu0 %1723
  %v1725 = vadd.f32 %v1671, %v1673
  %1726 = vadd.xlane.f32.xlu0 %v1725
  %v1727 = vpop.xlane.xlu0 %1726
  %v1728 = vadd.f32 %v1675, %v1677
  %1729 = vadd.xlane.f32.xlu0 %v1728
  %v1730 = vpop.xlane.xlu0 %1729
  %v1731 = vadd.f32 %v1679, %v1681
  %1732 = vadd.xlane.f32.xlu0 %v1731
  %v1733 = vpop.xlane.xlu0 %1732
  %v1734 = vadd.f32 %v1683, %v1685
  %1735 = vadd.xlane.f32.xlu0 %v1734
  %v1736 = vpop.xlane.xlu0 %1735
  %v1737 = vadd.f32 %v1687, %v1689
  %1738 = vadd.xlane.f32.xlu0 %v1737
  %v1739 = vpop.xlane.xlu0 %1738
  %v1740 = vadd.f32 %v1691, %v1693
  %1741 = vadd.xlane.f32.xlu0 %v1740
  %v1742 = vpop.xlane.xlu0 %1741
  %v1743 = vadd.f32 %v1695, %v1697
  %1744 = vadd.xlane.f32.xlu0 %v1743
  %v1745 = vpop.xlane.xlu0 %1744
  %v1746 = vpack.c.bf16 %v1639, %v1635
  %v1747 = vpack.c.bf16 %v1641, %v1637
  %v1748 = vpack.c.bf16 %v1647, %v1643
  %v1749 = vpack.c.bf16 %v1649, %v1645
  %v1750 = vpack.c.bf16 %v1655, %v1651
  %v1751 = vpack.c.bf16 %v1657, %v1653
  %v1752 = vpack.c.bf16 %v1663, %v1659
  %v1753 = vpack.c.bf16 %v1665, %v1661
  %v1754 = vpack.c.bf16 %v1671, %v1667
  %v1755 = vpack.c.bf16 %v1673, %v1669
  %v1756 = vpack.c.bf16 %v1679, %v1675
  %v1757 = vpack.c.bf16 %v1681, %v1677
  %v1758 = vpack.c.bf16 %v1687, %v1683
  %v1759 = vpack.c.bf16 %v1689, %v1685
  %v1760 = vpack.c.bf16 %v1695, %v1691
  %v1761 = vpack.c.bf16 %v1697, %v1693
  %1762 = vmatprep.subr.bf16.mxu0 0
  %1763 = vmatpush1.bf16.msra.mxu0 %v1352
  %1764 = vmatprep.subr.bf16.mxu0 0
  %1765 = vmatpush1.bf16.msra.mxu0 %v1353
  %1766 = vmatprep.subr.bf16.mxu0 0
  %1767 = vmatpush1.bf16.msra.mxu0 %v1354
  %1768 = vmatprep.subr.bf16.mxu0 0
  %1769 = vmatpush1.bf16.msra.mxu0 %v1355
  %1770 = vmatprep.subr.bf16.mxu0 0
  %1771 = vmatpush1.bf16.msra.mxu0 %v1356
  %1772 = vmatprep.subr.bf16.mxu0 0
  %1773 = vmatpush1.bf16.msra.mxu0 %v1357
  %1774 = vmatprep.subr.bf16.mxu0 0
  %1775 = vmatpush1.bf16.msra.mxu0 %v1358
  %1776 = vmatprep.subr.bf16.mxu0 0
  %1777 = vmatpush1.bf16.msra.mxu0 %v1359
  %1778 = vmatprep.subr.bf16.mxu0 0
  %1779 = vmatpush1.bf16.msra.mxu0 %v1360
  %1780 = vmatprep.subr.bf16.mxu0 0
  %1781 = vmatpush1.bf16.msra.mxu0 %v1361
  %1782 = vmatprep.subr.bf16.mxu0 0
  %1783 = vmatpush1.bf16.msra.mxu0 %v1362
  %1784 = vmatprep.subr.bf16.mxu0 0
  %1785 = vmatpush1.bf16.msra.mxu0 %v1363
  %1786 = vmatprep.subr.bf16.mxu0 0
  %1787 = vmatpush1.bf16.msra.mxu0 %v1364
  %1788 = vmatprep.subr.bf16.mxu0 0
  %1789 = vmatpush1.bf16.msra.mxu0 %v1365
  %1790 = vmatprep.subr.bf16.mxu0 0
  %1791 = vmatpush1.bf16.msra.mxu0 %v1366
  %1792 = vmatprep.subr.bf16.mxu0 0
  %1793 = vmatpush1.bf16.msra.mxu0 %v1367
  %1794 = vmatprep.mubr.bf16.mxu0 %v1747
  %1795 = vmatmul.mubr.bf16.gmra.mrb[0].mxu0 %v1746
  %v1796 = vpop.f32.mrb[0].mxu0
  %v1797 = vadd.f32 0.0, %v1796
  %v1798 = vpop.f32.mrb[0].mxu0
  %v1799 = vpop.f32.mrb[0].mxu0
  %v1800 = vadd.f32 0.0, %v1799
  %v1801 = vpop.f32.mrb[0].mxu0
  %1802 = vmatprep.mubr.bf16.mxu0 %v1749
  %1803 = vmatmul.mubr.bf16.gmra.mrb[0].mxu0 %v1748
  %v1804 = vpop.f32.mrb[0].mxu0
  %v1805 = vadd.f32 0.0, %v1804
  %v1806 = vpop.f32.mrb[0].mxu0
  %v1807 = vpop.f32.mrb[0].mxu0
  %v1808 = vadd.f32 0.0, %v1807
  %v1809 = vpop.f32.mrb[0].mxu0
  %1810 = vmatprep.mubr.bf16.mxu0 %v1751
  %1811 = vmatmul.mubr.bf16.gmra.mrb[0].mxu0 %v1750
  %v1812 = vpop.f32.mrb[0].mxu0
  %v1813 = vadd.f32 0.0, %v1812
  %v1814 = vpop.f32.mrb[0].mxu0
  %v1815 = vpop.f32.mrb[0].mxu0
  %v1816 = vadd.f32 0.0, %v1815
  %v1817 = vpop.f32.mrb[0].mxu0
  %1818 = vmatprep.mubr.bf16.mxu0 %v1753
  %1819 = vmatmul.mubr.bf16.gmra.mrb[0].mxu0 %v1752
  %v1820 = vpop.f32.mrb[0].mxu0
  %v1821 = vadd.f32 0.0, %v1820
  %v1822 = vpop.f32.mrb[0].mxu0
  %v1823 = vpop.f32.mrb[0].mxu0
  %v1824 = vadd.f32 0.0, %v1823
  %v1825 = vpop.f32.mrb[0].mxu0
  %1826 = vmatprep.mubr.bf16.mxu0 %v1755
  %1827 = vmatmul.mubr.bf16.gmra.mrb[0].mxu0 %v1754
  %v1828 = vpop.f32.mrb[0].mxu0
  %v1829 = vadd.f32 0.0, %v1828
  %v1830 = vpop.f32.mrb[0].mxu0
  %v1831 = vpop.f32.mrb[0].mxu0
  %v1832 = vadd.f32 0.0, %v1831
  %v1833 = vpop.f32.mrb[0].mxu0
  %1834 = vmatprep.mubr.bf16.mxu0 %v1757
  %1835 = vmatmul.mubr.bf16.gmra.mrb[0].mxu0 %v1756
  %v1836 = vpop.f32.mrb[0].mxu0
  %v1837 = vadd.f32 0.0, %v1836
  %v1838 = vpop.f32.mrb[0].mxu0
  %v1839 = vpop.f32.mrb[0].mxu0
  %v1840 = vadd.f32 0.0, %v1839
  %v1841 = vpop.f32.mrb[0].mxu0
  %1842 = vmatprep.mubr.bf16.mxu0 %v1759
  %1843 = vmatmul.mubr.bf16.gmra.mrb[0].mxu0 %v1758
  %v1844 = vpop.f32.mrb[0].mxu0
  %v1845 = vadd.f32 0.0, %v1844
  %v1846 = vpop.f32.mrb[0].mxu0
  %v1847 = vpop.f32.mrb[0].mxu0
  %v1848 = vadd.f32 0.0, %v1847
  %v1849 = vpop.f32.mrb[0].mxu0
  %1850 = vmatprep.mubr.bf16.mxu0 %v1761
  %1851 = vmatmul.mubr.bf16.gmra.mrb[0].mxu0 %v1760
  %v1852 = vpop.f32.mrb[0].mxu0
  %v1853 = vadd.f32 0.0, %v1852
  %v1854 = vpop.f32.mrb[0].mxu0
  %v1855 = vpop.f32.mrb[0].mxu0
  %v1856 = vadd.f32 0.0, %v1855
  %v1857 = vpop.f32.mrb[0].mxu0
  %1858 = vdwg.mxu0
  %v1859 = vrcp.pop %v1700
  %v1860 = vrcp.pop %v1703
  %v1861 = vrcp.pop %v1706
  %v1862 = vrcp.pop %v1709
  %v1863 = vrcp.pop %v1712
  %v1864 = vrcp.pop %v1715
  %v1865 = vrcp.pop %v1718
  %v1866 = vrcp.pop %v1721
  %v1867 = vrcp.pop %v1724
  %v1868 = vrcp.pop %v1727
  %v1869 = vrcp.pop %v1730
  %v1870 = vrcp.pop %v1733
  %v1871 = vrcp.pop %v1736
  %v1872 = vrcp.pop %v1739
  %v1873 = vrcp.pop %v1742
  %v1874 = vrcp.pop %v1745
  %v1875 = vmul.f32 %v1797, %v1859
  %v1876 = vmul.f32 %v1800, %v1860
  %v1877 = vmul.f32 %v1805, %v1861
  %v1878 = vmul.f32 %v1808, %v1862
  %v1879 = vmul.f32 %v1813, %v1863
  %v1880 = vmul.f32 %v1816, %v1864
  %v1881 = vmul.f32 %v1821, %v1865
  %v1882 = vmul.f32 %v1824, %v1866
  %v1883 = vmul.f32 %v1829, %v1867
  %v1884 = vmul.f32 %v1832, %v1868
  %v1885 = vmul.f32 %v1837, %v1869
  %v1886 = vmul.f32 %v1840, %v1870
  %v1887 = vmul.f32 %v1845, %v1871
  %v1888 = vmul.f32 %v1848, %v1872
  %v1889 = vmul.f32 %v1853, %v1873
  %v1890 = vmul.f32 %v1856, %v1874
  %1899 = vrot.lane.b32.xlu0 %v1328, 64
  %v1900 = vpop.permute.xlu0 %1899
  %1901 = vrot.lane.b32.xlu0 %v1329, 64
  %v1902 = vpop.permute.xlu0 %1901
  %1903 = vrot.lane.b32.xlu0 %v1330, 64
  %v1904 = vpop.permute.xlu0 %1903
  %1905 = vrot.lane.b32.xlu0 %v1331, 64
  %v1906 = vpop.permute.xlu0 %1905
  %1907 = vrot.lane.b32.xlu0 %v1332, 64
  %v1908 = vpop.permute.xlu0 %1907
  %1909 = vrot.lane.b32.xlu0 %v1333, 64
  %v1910 = vpop.permute.xlu0 %1909
  %1911 = vrot.lane.b32.xlu0 %v1334, 64
  %v1912 = vpop.permute.xlu0 %1911
  %1913 = vrot.lane.b32.xlu0 %v1335, 64
  %v1914 = vpop.permute.xlu0 %1913
  %1931 = vrot.lane.b32.xlu0 %v1336, 64
  %v1932 = vpop.permute.xlu0 %1931
  %1933 = vrot.lane.b32.xlu0 %v1337, 64
  %v1934 = vpop.permute.xlu0 %1933
  %1935 = vrot.lane.b32.xlu0 %v1338, 64
  %v1936 = vpop.permute.xlu0 %1935
  %1937 = vrot.lane.b32.xlu0 %v1339, 64
  %v1938 = vpop.permute.xlu0 %1937
  %1939 = vrot.lane.b32.xlu0 %v1340, 64
  %v1940 = vpop.permute.xlu0 %1939
  %1941 = vrot.lane.b32.xlu0 %v1341, 64
  %v1942 = vpop.permute.xlu0 %1941
  %1943 = vrot.lane.b32.xlu0 %v1342, 64
  %v1944 = vpop.permute.xlu0 %1943
  %1945 = vrot.lane.b32.xlu0 %v1343, 64
  %v1946 = vpop.permute.xlu0 %1945
  %1947 = vrot.lane.b32.xlu0 %v1344, 64
  %v1948 = vpop.permute.xlu0 %1947
  %1949 = vrot.lane.b32.xlu0 %v1345, 64
  %v1950 = vpop.permute.xlu0 %1949
  %1951 = vrot.lane.b32.xlu0 %v1346, 64
  %v1952 = vpop.permute.xlu0 %1951
  %1953 = vrot.lane.b32.xlu0 %v1347, 64
  %v1954 = vpop.permute.xlu0 %1953
  %1955 = vrot.lane.b32.xlu0 %v1348, 64
  %v1956 = vpop.permute.xlu0 %1955
  %1957 = vrot.lane.b32.xlu0 %v1349, 64
  %v1958 = vpop.permute.xlu0 %1957
  %1959 = vrot.lane.b32.xlu0 %v1350, 64
  %v1960 = vpop.permute.xlu0 %1959
  %1961 = vrot.lane.b32.xlu0 %v1351, 64
  %v1962 = vpop.permute.xlu0 %1961
  %v1964 = vsel %vm1368, %v1900, 0
  %v1967 = vsel %vm1368, %v1902, 0
  %v1970 = vsel %vm1368, %v1904, 0
  %v1973 = vsel %vm1368, %v1906, 0
  %v1976 = vsel %vm1368, %v1908, 0
  %v1979 = vsel %vm1368, %v1910, 0
  %v1982 = vsel %vm1368, %v1912, 0
  %v1985 = vsel %vm1368, %v1914, 0
  %v1988 = vsel %vm1368, %v1932, 0
  %v1991 = vsel %vm1368, %v1934, 0
  %v1994 = vsel %vm1368, %v1936, 0
  %v1997 = vsel %vm1368, %v1938, 0
  %v2000 = vsel %vm1368, %v1940, 0
  %v2003 = vsel %vm1368, %v1942, 0
  %v2006 = vsel %vm1368, %v1944, 0
  %v2009 = vsel %vm1368, %v1946, 0
  %v2012 = vsel %vm1368, %v1948, 0
  %v2015 = vsel %vm1368, %v1950, 0
  %v2018 = vsel %vm1368, %v1952, 0
  %v2021 = vsel %vm1368, %v1954, 0
  %v2024 = vsel %vm1368, %v1956, 0
  %v2027 = vsel %vm1368, %v1958, 0
  %v2030 = vsel %vm1368, %v1960, 0
  %v2033 = vsel %vm1368, %v1962, 0
  %2035 = vmatprep.subr.bf16.mxu0 0
  %2036 = vmatpush1.bf16.xpose.msra.mxu0 %v1988
  %2037 = vmatprep.subr.bf16.mxu0 0
  %2038 = vmatpush1.bf16.xpose.msra.mxu0 %v1991
  %2039 = vmatprep.subr.bf16.mxu0 0
  %2040 = vmatpush1.bf16.xpose.msra.mxu0 %v1994
  %2041 = vmatprep.subr.bf16.mxu0 0
  %2042 = vmatpush1.bf16.xpose.msra.mxu0 %v1997
  %2043 = vmatprep.subr.bf16.mxu0 0
  %2044 = vmatpush1.bf16.xpose.msra.mxu0 %v2000
  %2045 = vmatprep.subr.bf16.mxu0 0
  %2046 = vmatpush1.bf16.xpose.msra.mxu0 %v2003
  %2047 = vmatprep.subr.bf16.mxu0 0
  %2048 = vmatpush1.bf16.xpose.msra.mxu0 %v2006
  %2049 = vmatprep.subr.bf16.mxu0 0
  %2050 = vmatpush1.bf16.xpose.msra.mxu0 %v2009
  %2051 = vmatprep.subr.bf16.mxu0 0
  %2052 = vmatpush1.bf16.xpose.msra.mxu0 %v2012
  %2053 = vmatprep.subr.bf16.mxu0 0
  %2054 = vmatpush1.bf16.xpose.msra.mxu0 %v2015
  %2055 = vmatprep.subr.bf16.mxu0 0
  %2056 = vmatpush1.bf16.xpose.msra.mxu0 %v2018
  %2057 = vmatprep.subr.bf16.mxu0 0
  %2058 = vmatpush1.bf16.xpose.msra.mxu0 %v2021
  %2059 = vmatprep.subr.bf16.mxu0 0
  %2060 = vmatpush1.bf16.xpose.msra.mxu0 %v2024
  %2061 = vmatprep.subr.bf16.mxu0 0
  %2062 = vmatpush1.bf16.xpose.msra.mxu0 %v2027
  %2063 = vmatprep.subr.bf16.mxu0 0
  %2064 = vmatpush1.bf16.xpose.msra.mxu0 %v2030
  %2065 = vmatprep.subr.bf16.mxu0 0
  %2066 = vmatpush1.bf16.xpose.msra.mxu0 %v2033
  %2067 = vmatprep.mubr.bf16.mxu0 0
  %2068 = vmatmul.mubr.bf16.gmra.mrb[0].mxu0 %v1964
  %v2069 = vpop.f32.mrb[0].mxu0
  %v2070 = vadd.f32 %v1296, %v2069
  %v2071 = vpop.f32.mrb[0].mxu0
  %v2072 = vadd.f32 %v1297, %v2071
  %v2073 = vpop.f32.mrb[0].mxu0
  %v2074 = vadd.f32 %v1298, %v2073
  %v2075 = vpop.f32.mrb[0].mxu0
  %v2076 = vadd.f32 %v1299, %v2075
  %2077 = vmatprep.mubr.bf16.mxu0 0
  %2078 = vmatmul.mubr.bf16.gmra.mrb[0].mxu0 %v1967
  %v2079 = vpop.f32.mrb[0].mxu0
  %v2080 = vadd.f32 %v1300, %v2079
  %v2081 = vpop.f32.mrb[0].mxu0
  %v2082 = vadd.f32 %v1301, %v2081
  %v2083 = vpop.f32.mrb[0].mxu0
  %v2084 = vadd.f32 %v1302, %v2083
  %v2085 = vpop.f32.mrb[0].mxu0
  %v2086 = vadd.f32 %v1303, %v2085
  %2087 = vmatprep.mubr.bf16.mxu0 0
  %2088 = vmatmul.mubr.bf16.gmra.mrb[0].mxu0 %v1970
  %v2089 = vpop.f32.mrb[0].mxu0
  %v2090 = vadd.f32 %v1304, %v2089
  %v2091 = vpop.f32.mrb[0].mxu0
  %v2092 = vadd.f32 %v1305, %v2091
  %v2093 = vpop.f32.mrb[0].mxu0
  %v2094 = vadd.f32 %v1306, %v2093
  %v2095 = vpop.f32.mrb[0].mxu0
  %v2096 = vadd.f32 %v1307, %v2095
  %2097 = vmatprep.mubr.bf16.mxu0 0
  %2098 = vmatmul.mubr.bf16.gmra.mrb[0].mxu0 %v1973
  %v2099 = vpop.f32.mrb[0].mxu0
  %v2100 = vadd.f32 %v1308, %v2099
  %v2101 = vpop.f32.mrb[0].mxu0
  %v2102 = vadd.f32 %v1309, %v2101
  %v2103 = vpop.f32.mrb[0].mxu0
  %v2104 = vadd.f32 %v1310, %v2103
  %v2105 = vpop.f32.mrb[0].mxu0
  %v2106 = vadd.f32 %v1311, %v2105
  %2107 = vmatprep.mubr.bf16.mxu0 0
  %2108 = vmatmul.mubr.bf16.gmra.mrb[0].mxu0 %v1976
  %v2109 = vpop.f32.mrb[0].mxu0
  %v2110 = vadd.f32 %v1312, %v2109
  %v2111 = vpop.f32.mrb[0].mxu0
  %v2112 = vadd.f32 %v1313, %v2111
  %v2113 = vpop.f32.mrb[0].mxu0
  %v2114 = vadd.f32 %v1314, %v2113
  %v2115 = vpop.f32.mrb[0].mxu0
  %v2116 = vadd.f32 %v1315, %v2115
  %2117 = vmatprep.mubr.bf16.mxu0 0
  %2118 = vmatmul.mubr.bf16.gmra.mrb[0].mxu0 %v1979
  %v2119 = vpop.f32.mrb[0].mxu0
  %v2120 = vadd.f32 %v1316, %v2119
  %v2121 = vpop.f32.mrb[0].mxu0
  %v2122 = vadd.f32 %v1317, %v2121
  %v2123 = vpop.f32.mrb[0].mxu0
  %v2124 = vadd.f32 %v1318, %v2123
  %v2125 = vpop.f32.mrb[0].mxu0
  %v2126 = vadd.f32 %v1319, %v2125
  %2127 = vmatprep.mubr.bf16.mxu0 0
  %2128 = vmatmul.mubr.bf16.gmra.mrb[0].mxu0 %v1982
  %v2129 = vpop.f32.mrb[0].mxu0
  %v2130 = vadd.f32 %v1320, %v2129
  %v2131 = vpop.f32.mrb[0].mxu0
  %v2132 = vadd.f32 %v1321, %v2131
  %v2133 = vpop.f32.mrb[0].mxu0
  %v2134 = vadd.f32 %v1322, %v2133
  %v2135 = vpop.f32.mrb[0].mxu0
  %v2136 = vadd.f32 %v1323, %v2135
  %2137 = vmatprep.mubr.bf16.mxu0 0
  %2138 = vmatmul.mubr.bf16.gmra.mrb[0].mxu0 %v1985
  %v2139 = vpop.f32.mrb[0].mxu0
  %v2140 = vadd.f32 %v1324, %v2139
  %v2141 = vpop.f32.mrb[0].mxu0
  %v2142 = vadd.f32 %v1325, %v2141
  %v2143 = vpop.f32.mrb[0].mxu0
  %v2144 = vadd.f32 %v1326, %v2143
  %v2145 = vpop.f32.mrb[0].mxu0
  %v2146 = vadd.f32 %v1327, %v2145
  %2147 = vdwg.mxu0
  %v2148 = vmax.f32 %v2070, %v2072
  %2149 = vmax.xlane.f32.xlu0 %v2148
  %v2150 = vpop.xlane.xlu0 %2149
  %v2151 = vmax.f32 %v2074, %v2076
  %2152 = vmax.xlane.f32.xlu0 %v2151
  %v2153 = vpop.xlane.xlu0 %2152
  %v2154 = vmax.f32 %v2080, %v2082
  %2155 = vmax.xlane.f32.xlu0 %v2154
  %v2156 = vpop.xlane.xlu0 %2155
  %v2157 = vmax.f32 %v2084, %v2086
  %2158 = vmax.xlane.f32.xlu0 %v2157
  %v2159 = vpop.xlane.xlu0 %2158
  %v2160 = vmax.f32 %v2090, %v2092
  %2161 = vmax.xlane.f32.xlu0 %v2160
  %v2162 = vpop.xlane.xlu0 %2161
  %v2163 = vmax.f32 %v2094, %v2096
  %2164 = vmax.xlane.f32.xlu0 %v2163
  %v2165 = vpop.xlane.xlu0 %2164
  %v2166 = vmax.f32 %v2100, %v2102
  %2167 = vmax.xlane.f32.xlu0 %v2166
  %v2168 = vpop.xlane.xlu0 %2167
  %v2169 = vmax.f32 %v2104, %v2106
  %2170 = vmax.xlane.f32.xlu0 %v2169
  %v2171 = vpop.xlane.xlu0 %2170
  %v2172 = vmax.f32 %v2110, %v2112
  %2173 = vmax.xlane.f32.xlu0 %v2172
  %v2174 = vpop.xlane.xlu0 %2173
  %v2175 = vmax.f32 %v2114, %v2116
  %2176 = vmax.xlane.f32.xlu0 %v2175
  %v2177 = vpop.xlane.xlu0 %2176
  %v2178 = vmax.f32 %v2120, %v2122
  %2179 = vmax.xlane.f32.xlu0 %v2178
  %v2180 = vpop.xlane.xlu0 %2179
  %v2181 = vmax.f32 %v2124, %v2126
  %2182 = vmax.xlane.f32.xlu0 %v2181
  %v2183 = vpop.xlane.xlu0 %2182
  %v2184 = vmax.f32 %v2130, %v2132
  %2185 = vmax.xlane.f32.xlu0 %v2184
  %v2186 = vpop.xlane.xlu0 %2185
  %v2187 = vmax.f32 %v2134, %v2136
  %2188 = vmax.xlane.f32.xlu0 %v2187
  %v2189 = vpop.xlane.xlu0 %2188
  %v2190 = vmax.f32 %v2140, %v2142
  %2191 = vmax.xlane.f32.xlu0 %v2190
  %v2192 = vpop.xlane.xlu0 %2191
  %v2193 = vmax.f32 %v2144, %v2146
  %2194 = vmax.xlane.f32.xlu0 %v2193
  %v2195 = vpop.xlane.xlu0 %2194
  %v2196 = vsub.f32 %v2070, %v2150
  %v2197 = vsub.f32 %v2072, %v2150
  %v2198 = vsub.f32 %v2074, %v2153
  %v2199 = vsub.f32 %v2076, %v2153
  %v2200 = vsub.f32 %v2080, %v2156
  %v2201 = vsub.f32 %v2082, %v2156
  %v2202 = vsub.f32 %v2084, %v2159
  %v2203 = vsub.f32 %v2086, %v2159
  %v2204 = vsub.f32 %v2090, %v2162
  %v2205 = vsub.f32 %v2092, %v2162
  %v2206 = vsub.f32 %v2094, %v2165
  %v2207 = vsub.f32 %v2096, %v2165
  %v2208 = vsub.f32 %v2100, %v2168
  %v2209 = vsub.f32 %v2102, %v2168
  %v2210 = vsub.f32 %v2104, %v2171
  %v2211 = vsub.f32 %v2106, %v2171
  %v2212 = vsub.f32 %v2110, %v2174
  %v2213 = vsub.f32 %v2112, %v2174
  %v2214 = vsub.f32 %v2114, %v2177
  %v2215 = vsub.f32 %v2116, %v2177
  %v2216 = vsub.f32 %v2120, %v2180
  %v2217 = vsub.f32 %v2122, %v2180
  %v2218 = vsub.f32 %v2124, %v2183
  %v2219 = vsub.f32 %v2126, %v2183
  %v2220 = vsub.f32 %v2130, %v2186
  %v2221 = vsub.f32 %v2132, %v2186
  %v2222 = vsub.f32 %v2134, %v2189
  %v2223 = vsub.f32 %v2136, %v2189
  %v2224 = vsub.f32 %v2140, %v2192
  %v2225 = vsub.f32 %v2142, %v2192
  %v2226 = vsub.f32 %v2144, %v2195
  %v2227 = vsub.f32 %v2146, %v2195
  %v2228 = vmul.f32 %v2196, 1.442695
  %v2229 = vpow.pop %v2228
  %v2230 = vmul.f32 %v2197, 1.442695
  %v2231 = vpow.pop %v2230
  %v2232 = vmul.f32 %v2198, 1.442695
  %v2233 = vpow.pop %v2232
  %v2234 = vmul.f32 %v2199, 1.442695
  %v2235 = vpow.pop %v2234
  %v2236 = vmul.f32 %v2200, 1.442695
  %v2237 = vpow.pop %v2236
  %v2238 = vmul.f32 %v2201, 1.442695
  %v2239 = vpow.pop %v2238
  %v2240 = vmul.f32 %v2202, 1.442695
  %v2241 = vpow.pop %v2240
  %v2242 = vmul.f32 %v2203, 1.442695
  %v2243 = vpow.pop %v2242
  %v2244 = vmul.f32 %v2204, 1.442695
  %v2245 = vpow.pop %v2244
  %v2246 = vmul.f32 %v2205, 1.442695
  %v2247 = vpow.pop %v2246
  %v2248 = vmul.f32 %v2206, 1.442695
  %v2249 = vpow.pop %v2248
  %v2250 = vmul.f32 %v2207, 1.442695
  %v2251 = vpow.pop %v2250
  %v2252 = vmul.f32 %v2208, 1.442695
  %v2253 = vpow.pop %v2252
  %v2254 = vmul.f32 %v2209, 1.442695
  %v2255 = vpow.pop %v2254
  %v2256 = vmul.f32 %v2210, 1.442695
  %v2257 = vpow.pop %v2256
  %v2258 = vmul.f32 %v2211, 1.442695
  %v2259 = vpow.pop %v2258
  %v2260 = vmul.f32 %v2212, 1.442695
  %v2261 = vpow.pop %v2260
  %v2262 = vmul.f32 %v2213, 1.442695
  %v2263 = vpow.pop %v2262
  %v2264 = vmul.f32 %v2214, 1.442695
  %v2265 = vpow.pop %v2264
  %v2266 = vmul.f32 %v2215, 1.442695
  %v2267 = vpow.pop %v2266
  %v2268 = vmul.f32 %v2216, 1.442695
  %v2269 = vpow.pop %v2268
  %v2270 = vmul.f32 %v2217, 1.442695
  %v2271 = vpow.pop %v2270
  %v2272 = vmul.f32 %v2218, 1.442695
  %v2273 = vpow.pop %v2272
  %v2274 = vmul.f32 %v2219, 1.442695
  %v2275 = vpow.pop %v2274
  %v2276 = vmul.f32 %v2220, 1.442695
  %v2277 = vpow.pop %v2276
  %v2278 = vmul.f32 %v2221, 1.442695
  %v2279 = vpow.pop %v2278
  %v2280 = vmul.f32 %v2222, 1.442695
  %v2281 = vpow.pop %v2280
  %v2282 = vmul.f32 %v2223, 1.442695
  %v2283 = vpow.pop %v2282
  %v2284 = vmul.f32 %v2224, 1.442695
  %v2285 = vpow.pop %v2284
  %v2286 = vmul.f32 %v2225, 1.442695
  %v2287 = vpow.pop %v2286
  %v2288 = vmul.f32 %v2226, 1.442695
  %v2289 = vpow.pop %v2288
  %v2290 = vmul.f32 %v2227, 1.442695
  %v2291 = vpow.pop %v2290
  %v2292 = vadd.f32 %v2229, %v2231
  %2293 = vadd.xlane.f32.xlu0 %v2292
  %v2294 = vpop.xlane.xlu0 %2293
  %v2295 = vadd.f32 %v2233, %v2235
  %2296 = vadd.xlane.f32.xlu0 %v2295
  %v2297 = vpop.xlane.xlu0 %2296
  %v2298 = vadd.f32 %v2237, %v2239
  %2299 = vadd.xlane.f32.xlu0 %v2298
  %v2300 = vpop.xlane.xlu0 %2299
  %v2301 = vadd.f32 %v2241, %v2243
  %2302 = vadd.xlane.f32.xlu0 %v2301
  %v2303 = vpop.xlane.xlu0 %2302
  %v2304 = vadd.f32 %v2245, %v2247
  %2305 = vadd.xlane.f32.xlu0 %v2304
  %v2306 = vpop.xlane.xlu0 %2305
  %v2307 = vadd.f32 %v2249, %v2251
  %2308 = vadd.xlane.f32.xlu0 %v2307
  %v2309 = vpop.xlane.xlu0 %2308
  %v2310 = vadd.f32 %v2253, %v2255
  %2311 = vadd.xlane.f32.xlu0 %v2310
  %v2312 = vpop.xlane.xlu0 %2311
  %v2313 = vadd.f32 %v2257, %v2259
  %2314 = vadd.xlane.f32.xlu0 %v2313
  %v2315 = vpop.xlane.xlu0 %2314
  %v2316 = vadd.f32 %v2261, %v2263
  %2317 = vadd.xlane.f32.xlu0 %v2316
  %v2318 = vpop.xlane.xlu0 %2317
  %v2319 = vadd.f32 %v2265, %v2267
  %2320 = vadd.xlane.f32.xlu0 %v2319
  %v2321 = vpop.xlane.xlu0 %2320
  %v2322 = vadd.f32 %v2269, %v2271
  %2323 = vadd.xlane.f32.xlu0 %v2322
  %v2324 = vpop.xlane.xlu0 %2323
  %v2325 = vadd.f32 %v2273, %v2275
  %2326 = vadd.xlane.f32.xlu0 %v2325
  %v2327 = vpop.xlane.xlu0 %2326
  %v2328 = vadd.f32 %v2277, %v2279
  %2329 = vadd.xlane.f32.xlu0 %v2328
  %v2330 = vpop.xlane.xlu0 %2329
  %v2331 = vadd.f32 %v2281, %v2283
  %2332 = vadd.xlane.f32.xlu0 %v2331
  %v2333 = vpop.xlane.xlu0 %2332
  %v2334 = vadd.f32 %v2285, %v2287
  %2335 = vadd.xlane.f32.xlu0 %v2334
  %v2336 = vpop.xlane.xlu0 %2335
  %v2337 = vadd.f32 %v2289, %v2291
  %2338 = vadd.xlane.f32.xlu0 %v2337
  %v2339 = vpop.xlane.xlu0 %2338
  %v2340 = vpack.c.bf16 %v2233, %v2229
  %v2341 = vpack.c.bf16 %v2235, %v2231
  %v2342 = vpack.c.bf16 %v2241, %v2237
  %v2343 = vpack.c.bf16 %v2243, %v2239
  %v2344 = vpack.c.bf16 %v2249, %v2245
  %v2345 = vpack.c.bf16 %v2251, %v2247
  %v2346 = vpack.c.bf16 %v2257, %v2253
  %v2347 = vpack.c.bf16 %v2259, %v2255
  %v2348 = vpack.c.bf16 %v2265, %v2261
  %v2349 = vpack.c.bf16 %v2267, %v2263
  %v2350 = vpack.c.bf16 %v2273, %v2269
  %v2351 = vpack.c.bf16 %v2275, %v2271
  %v2352 = vpack.c.bf16 %v2281, %v2277
  %v2353 = vpack.c.bf16 %v2283, %v2279
  %v2354 = vpack.c.bf16 %v2289, %v2285
  %v2355 = vpack.c.bf16 %v2291, %v2287
  %2372 = vrot.lane.b32.xlu0 %v1352, 64
  %v2373 = vpop.permute.xlu0 %2372
  %2374 = vrot.lane.b32.xlu0 %v1353, 64
  %v2375 = vpop.permute.xlu0 %2374
  %2376 = vrot.lane.b32.xlu0 %v1354, 64
  %v2377 = vpop.permute.xlu0 %2376
  %2378 = vrot.lane.b32.xlu0 %v1355, 64
  %v2379 = vpop.permute.xlu0 %2378
  %2380 = vrot.lane.b32.xlu0 %v1356, 64
  %v2381 = vpop.permute.xlu0 %2380
  %2382 = vrot.lane.b32.xlu0 %v1357, 64
  %v2383 = vpop.permute.xlu0 %2382
  %2384 = vrot.lane.b32.xlu0 %v1358, 64
  %v2385 = vpop.permute.xlu0 %2384
  %2386 = vrot.lane.b32.xlu0 %v1359, 64
  %v2387 = vpop.permute.xlu0 %2386
  %2388 = vrot.lane.b32.xlu0 %v1360, 64
  %v2389 = vpop.permute.xlu0 %2388
  %2390 = vrot.lane.b32.xlu0 %v1361, 64
  %v2391 = vpop.permute.xlu0 %2390
  %2392 = vrot.lane.b32.xlu0 %v1362, 64
  %v2393 = vpop.permute.xlu0 %2392
  %2394 = vrot.lane.b32.xlu0 %v1363, 64
  %v2395 = vpop.permute.xlu0 %2394
  %2396 = vrot.lane.b32.xlu0 %v1364, 64
  %v2397 = vpop.permute.xlu0 %2396
  %2398 = vrot.lane.b32.xlu0 %v1365, 64
  %v2399 = vpop.permute.xlu0 %2398
  %2400 = vrot.lane.b32.xlu0 %v1366, 64
  %v2401 = vpop.permute.xlu0 %2400
  %2402 = vrot.lane.b32.xlu0 %v1367, 64
  %v2403 = vpop.permute.xlu0 %2402
  %2420 = vmatprep.subr.bf16.mxu0 0
  %2421 = vmatpush1.bf16.msra.mxu0 %v2373
  %2422 = vmatprep.subr.bf16.mxu0 0
  %2423 = vmatpush1.bf16.msra.mxu0 %v2375
  %2424 = vmatprep.subr.bf16.mxu0 0
  %2425 = vmatpush1.bf16.msra.mxu0 %v2377
  %2426 = vmatprep.subr.bf16.mxu0 0
  %2427 = vmatpush1.bf16.msra.mxu0 %v2379
  %2428 = vmatprep.subr.bf16.mxu0 0
  %2429 = vmatpush1.bf16.msra.mxu0 %v2381
  %2430 = vmatprep.subr.bf16.mxu0 0
  %2431 = vmatpush1.bf16.msra.mxu0 %v2383
  %2432 = vmatprep.subr.bf16.mxu0 0
  %2433 = vmatpush1.bf16.msra.mxu0 %v2385
  %2434 = vmatprep.subr.bf16.mxu0 0
  %2435 = vmatpush1.bf16.msra.mxu0 %v2387
  %2436 = vmatprep.subr.bf16.mxu0 0
  %2437 = vmatpush1.bf16.msra.mxu0 %v2389
  %2438 = vmatprep.subr.bf16.mxu0 0
  %2439 = vmatpush1.bf16.msra.mxu0 %v2391
  %2440 = vmatprep.subr.bf16.mxu0 0
  %2441 = vmatpush1.bf16.msra.mxu0 %v2393
  %2442 = vmatprep.subr.bf16.mxu0 0
  %2443 = vmatpush1.bf16.msra.mxu0 %v2395
  %2444 = vmatprep.subr.bf16.mxu0 0
  %2445 = vmatpush1.bf16.msra.mxu0 %v2397
  %2446 = vmatprep.subr.bf16.mxu0 0
  %2447 = vmatpush1.bf16.msra.mxu0 %v2399
  %2448 = vmatprep.subr.bf16.mxu0 0
  %2449 = vmatpush1.bf16.msra.mxu0 %v2401
  %2450 = vmatprep.subr.bf16.mxu0 0
  %2451 = vmatpush1.bf16.msra.mxu0 %v2403
  %2452 = vmatprep.mubr.bf16.mxu0 %v2341
  %2453 = vmatmul.mubr.bf16.gmra.mrb[0].mxu0 %v2340
  %v2454 = vpop.f32.mrb[0].mxu0
  %v2455 = vadd.f32 0.0, %v2454
  %v2456 = vpop.f32.mrb[0].mxu0
  %v2457 = vpop.f32.mrb[0].mxu0
  %v2458 = vadd.f32 0.0, %v2457
  %v2459 = vpop.f32.mrb[0].mxu0
  %2460 = vmatprep.mubr.bf16.mxu0 %v2343
  %2461 = vmatmul.mubr.bf16.gmra.mrb[0].mxu0 %v2342
  %v2462 = vpop.f32.mrb[0].mxu0
  %v2463 = vadd.f32 0.0, %v2462
  %v2464 = vpop.f32.mrb[0].mxu0
  %v2465 = vpop.f32.mrb[0].mxu0
  %v2466 = vadd.f32 0.0, %v2465
  %v2467 = vpop.f32.mrb[0].mxu0
  %2468 = vmatprep.mubr.bf16.mxu0 %v2345
  %2469 = vmatmul.mubr.bf16.gmra.mrb[0].mxu0 %v2344
  %v2470 = vpop.f32.mrb[0].mxu0
  %v2471 = vadd.f32 0.0, %v2470
  %v2472 = vpop.f32.mrb[0].mxu0
  %v2473 = vpop.f32.mrb[0].mxu0
  %v2474 = vadd.f32 0.0, %v2473
  %v2475 = vpop.f32.mrb[0].mxu0
  %2476 = vmatprep.mubr.bf16.mxu0 %v2347
  %2477 = vmatmul.mubr.bf16.gmra.mrb[0].mxu0 %v2346
  %v2478 = vpop.f32.mrb[0].mxu0
  %v2479 = vadd.f32 0.0, %v2478
  %v2480 = vpop.f32.mrb[0].mxu0
  %v2481 = vpop.f32.mrb[0].mxu0
  %v2482 = vadd.f32 0.0, %v2481
  %v2483 = vpop.f32.mrb[0].mxu0
  %2484 = vmatprep.mubr.bf16.mxu0 %v2349
  %2485 = vmatmul.mubr.bf16.gmra.mrb[0].mxu0 %v2348
  %v2486 = vpop.f32.mrb[0].mxu0
  %v2487 = vadd.f32 0.0, %v2486
  %v2488 = vpop.f32.mrb[0].mxu0
  %v2489 = vpop.f32.mrb[0].mxu0
  %v2490 = vadd.f32 0.0, %v2489
  %v2491 = vpop.f32.mrb[0].mxu0
  %2492 = vmatprep.mubr.bf16.mxu0 %v2351
  %2493 = vmatmul.mubr.bf16.gmra.mrb[0].mxu0 %v2350
  %v2494 = vpop.f32.mrb[0].mxu0
  %v2495 = vadd.f32 0.0, %v2494
  %v2496 = vpop.f32.mrb[0].mxu0
  %v2497 = vpop.f32.mrb[0].mxu0
  %v2498 = vadd.f32 0.0, %v2497
  %v2499 = vpop.f32.mrb[0].mxu0
  %2500 = vmatprep.mubr.bf16.mxu0 %v2353
  %2501 = vmatmul.mubr.bf16.gmra.mrb[0].mxu0 %v2352
  %v2502 = vpop.f32.mrb[0].mxu0
  %v2503 = vadd.f32 0.0, %v2502
  %v2504 = vpop.f32.mrb[0].mxu0
  %v2505 = vpop.f32.mrb[0].mxu0
  %v2506 = vadd.f32 0.0, %v2505
  %v2507 = vpop.f32.mrb[0].mxu0
  %2508 = vmatprep.mubr.bf16.mxu0 %v2355
  %2509 = vmatmul.mubr.bf16.gmra.mrb[0].mxu0 %v2354
  %v2510 = vpop.f32.mrb[0].mxu0
  %v2511 = vadd.f32 0.0, %v2510
  %v2512 = vpop.f32.mrb[0].mxu0
  %v2513 = vpop.f32.mrb[0].mxu0
  %v2514 = vadd.f32 0.0, %v2513
  %v2515 = vpop.f32.mrb[0].mxu0
  %2516 = vdwg.mxu0
  %v2517 = vrcp.pop %v2294
  %v2518 = vrcp.pop %v2297
  %v2519 = vrcp.pop %v2300
  %v2520 = vrcp.pop %v2303
  %v2521 = vrcp.pop %v2306
  %v2522 = vrcp.pop %v2309
  %v2523 = vrcp.pop %v2312
  %v2524 = vrcp.pop %v2315
  %v2525 = vrcp.pop %v2318
  %v2526 = vrcp.pop %v2321
  %v2527 = vrcp.pop %v2324
  %v2528 = vrcp.pop %v2327
  %v2529 = vrcp.pop %v2330
  %v2530 = vrcp.pop %v2333
  %v2531 = vrcp.pop %v2336
  %v2532 = vrcp.pop %v2339
  %v2533 = vmul.f32 %v2455, %v2517
  %v2534 = vmul.f32 %v2458, %v2518
  %v2535 = vmul.f32 %v2463, %v2519
  %v2536 = vmul.f32 %v2466, %v2520
  %v2537 = vmul.f32 %v2471, %v2521
  %v2538 = vmul.f32 %v2474, %v2522
  %v2539 = vmul.f32 %v2479, %v2523
  %v2540 = vmul.f32 %v2482, %v2524
  %v2541 = vmul.f32 %v2487, %v2525
  %v2542 = vmul.f32 %v2490, %v2526
  %v2543 = vmul.f32 %v2495, %v2527
  %v2544 = vmul.f32 %v2498, %v2528
  %v2545 = vmul.f32 %v2503, %v2529
  %v2546 = vmul.f32 %v2506, %v2530
  %v2547 = vmul.f32 %v2511, %v2531
  %v2548 = vmul.f32 %v2514, %v2532
  %v2549 = vpack.c.bf16 %v432, %v428
  %v2550 = vpack.c.bf16 %v442, %v438
  %v2551 = vpack.c.bf16 %v452, %v448
  %v2552 = vpack.c.bf16 %v462, %v458
  %v2553 = vpack.c.bf16 %v472, %v468
  %v2554 = vpack.c.bf16 %v482, %v478
  %v2555 = vpack.c.bf16 %v492, %v488
  %v2556 = vpack.c.bf16 %v502, %v498
  %v2557 = vpack.c.bf16 %v951, %v947
  %v2558 = vpack.c.bf16 %v961, %v957
  %v2559 = vpack.c.bf16 %v971, %v967
  %v2560 = vpack.c.bf16 %v981, %v977
  %v2561 = vpack.c.bf16 %v991, %v987
  %v2562 = vpack.c.bf16 %v1001, %v997
  %v2563 = vpack.c.bf16 %v1011, %v1007
  %v2564 = vpack.c.bf16 %v1021, %v1017
  %v2565 = vpack.c.bf16 %v1031, %v1027
  %v2566 = vpack.c.bf16 %v1041, %v1037
  %v2567 = vpack.c.bf16 %v1051, %v1047
  %v2568 = vpack.c.bf16 %v1061, %v1057
  %v2569 = vpack.c.bf16 %v1071, %v1067
  %v2570 = vpack.c.bf16 %v1081, %v1077
  %v2571 = vpack.c.bf16 %v1091, %v1087
  %v2572 = vpack.c.bf16 %v1101, %v1097
  %v2573 = vpack.c.bf16 %v1144, %v1140
  %v2574 = vpack.c.bf16 %v1154, %v1150
  %v2575 = vpack.c.bf16 %v1164, %v1160
  %v2576 = vpack.c.bf16 %v1174, %v1170
  %v2577 = vpack.c.bf16 %v1184, %v1180
  %v2578 = vpack.c.bf16 %v1194, %v1190
  %v2579 = vpack.c.bf16 %v1204, %v1200
  %v2580 = vpack.c.bf16 %v1214, %v1210
  %v2581 = vpack.c.bf16 %v1224, %v1220
  %v2582 = vpack.c.bf16 %v1234, %v1230
  %v2583 = vpack.c.bf16 %v1244, %v1240
  %v2584 = vpack.c.bf16 %v1254, %v1250
  %v2585 = vpack.c.bf16 %v1264, %v1260
  %v2586 = vpack.c.bf16 %v1274, %v1270
  %v2587 = vpack.c.bf16 %v1284, %v1280
  %v2588 = vpack.c.bf16 %v1294, %v1290
  %v2590 = vsel %vm1368, %v2549, 0
  %v2593 = vsel %vm1368, %v2550, 0
  %v2596 = vsel %vm1368, %v2551, 0
  %v2599 = vsel %vm1368, %v2552, 0
  %v2602 = vsel %vm1368, %v2553, 0
  %v2605 = vsel %vm1368, %v2554, 0
  %v2608 = vsel %vm1368, %v2555, 0
  %v2611 = vsel %vm1368, %v2556, 0
  %v2614 = vsel %vm1368, %v2557, 0
  %v2617 = vsel %vm1368, %v2558, 0
  %v2620 = vsel %vm1368, %v2559, 0
  %v2623 = vsel %vm1368, %v2560, 0
  %v2626 = vsel %vm1368, %v2561, 0
  %v2629 = vsel %vm1368, %v2562, 0
  %v2632 = vsel %vm1368, %v2563, 0
  %v2635 = vsel %vm1368, %v2564, 0
  %v2638 = vsel %vm1368, %v2565, 0
  %v2641 = vsel %vm1368, %v2566, 0
  %v2644 = vsel %vm1368, %v2567, 0
  %v2647 = vsel %vm1368, %v2568, 0
  %v2650 = vsel %vm1368, %v2569, 0
  %v2653 = vsel %vm1368, %v2570, 0
  %v2656 = vsel %vm1368, %v2571, 0
  %v2659 = vsel %vm1368, %v2572, 0
  %2661 = vmatprep.subr.bf16.mxu0 0
  %2662 = vmatpush1.bf16.xpose.msra.mxu0 %v2614
  %2663 = vmatprep.subr.bf16.mxu0 0
  %2664 = vmatpush1.bf16.xpose.msra.mxu0 %v2617
  %2665 = vmatprep.subr.bf16.mxu0 0
  %2666 = vmatpush1.bf16.xpose.msra.mxu0 %v2620
  %2667 = vmatprep.subr.bf16.mxu0 0
  %2668 = vmatpush1.bf16.xpose.msra.mxu0 %v2623
  %2669 = vmatprep.subr.bf16.mxu0 0
  %2670 = vmatpush1.bf16.xpose.msra.mxu0 %v2626
  %2671 = vmatprep.subr.bf16.mxu0 0
  %2672 = vmatpush1.bf16.xpose.msra.mxu0 %v2629
  %2673 = vmatprep.subr.bf16.mxu0 0
  %2674 = vmatpush1.bf16.xpose.msra.mxu0 %v2632
  %2675 = vmatprep.subr.bf16.mxu0 0
  %2676 = vmatpush1.bf16.xpose.msra.mxu0 %v2635
  %2677 = vmatprep.subr.bf16.mxu0 0
  %2678 = vmatpush1.bf16.xpose.msra.mxu0 %v2638
  %2679 = vmatprep.subr.bf16.mxu0 0
  %2680 = vmatpush1.bf16.xpose.msra.mxu0 %v2641
  %2681 = vmatprep.subr.bf16.mxu0 0
  %2682 = vmatpush1.bf16.xpose.msra.mxu0 %v2644
  %2683 = vmatprep.subr.bf16.mxu0 0
  %2684 = vmatpush1.bf16.xpose.msra.mxu0 %v2647
  %2685 = vmatprep.subr.bf16.mxu0 0
  %2686 = vmatpush1.bf16.xpose.msra.mxu0 %v2650
  %2687 = vmatprep.subr.bf16.mxu0 0
  %2688 = vmatpush1.bf16.xpose.msra.mxu0 %v2653
  %2689 = vmatprep.subr.bf16.mxu0 0
  %2690 = vmatpush1.bf16.xpose.msra.mxu0 %v2656
  %2691 = vmatprep.subr.bf16.mxu0 0
  %2692 = vmatpush1.bf16.xpose.msra.mxu0 %v2659
  %2693 = vmatprep.mubr.bf16.mxu0 0
  %2694 = vmatmul.mubr.bf16.gmra.mrb[0].mxu0 %v2590
  %v2695 = vpop.f32.mrb[0].mxu0
  %v2696 = vadd.f32 %v1296, %v2695
  %v2697 = vpop.f32.mrb[0].mxu0
  %v2698 = vadd.f32 %v1297, %v2697
  %v2699 = vpop.f32.mrb[0].mxu0
  %v2700 = vadd.f32 %v1298, %v2699
  %v2701 = vpop.f32.mrb[0].mxu0
  %v2702 = vadd.f32 %v1299, %v2701
  %2703 = vmatprep.mubr.bf16.mxu0 0
  %2704 = vmatmul.mubr.bf16.gmra.mrb[0].mxu0 %v2593
  %v2705 = vpop.f32.mrb[0].mxu0
  %v2706 = vadd.f32 %v1300, %v2705
  %v2707 = vpop.f32.mrb[0].mxu0
  %v2708 = vadd.f32 %v1301, %v2707
  %v2709 = vpop.f32.mrb[0].mxu0
  %v2710 = vadd.f32 %v1302, %v2709
  %v2711 = vpop.f32.mrb[0].mxu0
  %v2712 = vadd.f32 %v1303, %v2711
  %2713 = vmatprep.mubr.bf16.mxu0 0
  %2714 = vmatmul.mubr.bf16.gmra.mrb[0].mxu0 %v2596
  %v2715 = vpop.f32.mrb[0].mxu0
  %v2716 = vadd.f32 %v1304, %v2715
  %v2717 = vpop.f32.mrb[0].mxu0
  %v2718 = vadd.f32 %v1305, %v2717
  %v2719 = vpop.f32.mrb[0].mxu0
  %v2720 = vadd.f32 %v1306, %v2719
  %v2721 = vpop.f32.mrb[0].mxu0
  %v2722 = vadd.f32 %v1307, %v2721
  %2723 = vmatprep.mubr.bf16.mxu0 0
  %2724 = vmatmul.mubr.bf16.gmra.mrb[0].mxu0 %v2599
  %v2725 = vpop.f32.mrb[0].mxu0
  %v2726 = vadd.f32 %v1308, %v2725
  %v2727 = vpop.f32.mrb[0].mxu0
  %v2728 = vadd.f32 %v1309, %v2727
  %v2729 = vpop.f32.mrb[0].mxu0
  %v2730 = vadd.f32 %v1310, %v2729
  %v2731 = vpop.f32.mrb[0].mxu0
  %v2732 = vadd.f32 %v1311, %v2731
  %2733 = vmatprep.mubr.bf16.mxu0 0
  %2734 = vmatmul.mubr.bf16.gmra.mrb[0].mxu0 %v2602
  %v2735 = vpop.f32.mrb[0].mxu0
  %v2736 = vadd.f32 %v1312, %v2735
  %v2737 = vpop.f32.mrb[0].mxu0
  %v2738 = vadd.f32 %v1313, %v2737
  %v2739 = vpop.f32.mrb[0].mxu0
  %v2740 = vadd.f32 %v1314, %v2739
  %v2741 = vpop.f32.mrb[0].mxu0
  %v2742 = vadd.f32 %v1315, %v2741
  %2743 = vmatprep.mubr.bf16.mxu0 0
  %2744 = vmatmul.mubr.bf16.gmra.mrb[0].mxu0 %v2605
  %v2745 = vpop.f32.mrb[0].mxu0
  %v2746 = vadd.f32 %v1316, %v2745
  %v2747 = vpop.f32.mrb[0].mxu0
  %v2748 = vadd.f32 %v1317, %v2747
  %v2749 = vpop.f32.mrb[0].mxu0
  %v2750 = vadd.f32 %v1318, %v2749
  %v2751 = vpop.f32.mrb[0].mxu0
  %v2752 = vadd.f32 %v1319, %v2751
  %2753 = vmatprep.mubr.bf16.mxu0 0
  %2754 = vmatmul.mubr.bf16.gmra.mrb[0].mxu0 %v2608
  %v2755 = vpop.f32.mrb[0].mxu0
  %v2756 = vadd.f32 %v1320, %v2755
  %v2757 = vpop.f32.mrb[0].mxu0
  %v2758 = vadd.f32 %v1321, %v2757
  %v2759 = vpop.f32.mrb[0].mxu0
  %v2760 = vadd.f32 %v1322, %v2759
  %v2761 = vpop.f32.mrb[0].mxu0
  %v2762 = vadd.f32 %v1323, %v2761
  %2763 = vmatprep.mubr.bf16.mxu0 0
  %2764 = vmatmul.mubr.bf16.gmra.mrb[0].mxu0 %v2611
  %v2765 = vpop.f32.mrb[0].mxu0
  %v2766 = vadd.f32 %v1324, %v2765
  %v2767 = vpop.f32.mrb[0].mxu0
  %v2768 = vadd.f32 %v1325, %v2767
  %v2769 = vpop.f32.mrb[0].mxu0
  %v2770 = vadd.f32 %v1326, %v2769
  %v2771 = vpop.f32.mrb[0].mxu0
  %v2772 = vadd.f32 %v1327, %v2771
  %2773 = vdwg.mxu0
  %v2774 = vmax.f32 %v2696, %v2698
  %2775 = vmax.xlane.f32.xlu0 %v2774
  %v2776 = vpop.xlane.xlu0 %2775
  %v2777 = vmax.f32 %v2700, %v2702
  %2778 = vmax.xlane.f32.xlu0 %v2777
  %v2779 = vpop.xlane.xlu0 %2778
  %v2780 = vmax.f32 %v2706, %v2708
  %2781 = vmax.xlane.f32.xlu0 %v2780
  %v2782 = vpop.xlane.xlu0 %2781
  %v2783 = vmax.f32 %v2710, %v2712
  %2784 = vmax.xlane.f32.xlu0 %v2783
  %v2785 = vpop.xlane.xlu0 %2784
  %v2786 = vmax.f32 %v2716, %v2718
  %2787 = vmax.xlane.f32.xlu0 %v2786
  %v2788 = vpop.xlane.xlu0 %2787
  %v2789 = vmax.f32 %v2720, %v2722
  %2790 = vmax.xlane.f32.xlu0 %v2789
  %v2791 = vpop.xlane.xlu0 %2790
  %v2792 = vmax.f32 %v2726, %v2728
  %2793 = vmax.xlane.f32.xlu0 %v2792
  %v2794 = vpop.xlane.xlu0 %2793
  %v2795 = vmax.f32 %v2730, %v2732
  %2796 = vmax.xlane.f32.xlu0 %v2795
  %v2797 = vpop.xlane.xlu0 %2796
  %v2798 = vmax.f32 %v2736, %v2738
  %2799 = vmax.xlane.f32.xlu0 %v2798
  %v2800 = vpop.xlane.xlu0 %2799
  %v2801 = vmax.f32 %v2740, %v2742
  %2802 = vmax.xlane.f32.xlu0 %v2801
  %v2803 = vpop.xlane.xlu0 %2802
  %v2804 = vmax.f32 %v2746, %v2748
  %2805 = vmax.xlane.f32.xlu0 %v2804
  %v2806 = vpop.xlane.xlu0 %2805
  %v2807 = vmax.f32 %v2750, %v2752
  %2808 = vmax.xlane.f32.xlu0 %v2807
  %v2809 = vpop.xlane.xlu0 %2808
  %v2810 = vmax.f32 %v2756, %v2758
  %2811 = vmax.xlane.f32.xlu0 %v2810
  %v2812 = vpop.xlane.xlu0 %2811
  %v2813 = vmax.f32 %v2760, %v2762
  %2814 = vmax.xlane.f32.xlu0 %v2813
  %v2815 = vpop.xlane.xlu0 %2814
  %v2816 = vmax.f32 %v2766, %v2768
  %2817 = vmax.xlane.f32.xlu0 %v2816
  %v2818 = vpop.xlane.xlu0 %2817
  %v2819 = vmax.f32 %v2770, %v2772
  %2820 = vmax.xlane.f32.xlu0 %v2819
  %v2821 = vpop.xlane.xlu0 %2820
  %v2822 = vsub.f32 %v2696, %v2776
  %v2823 = vsub.f32 %v2698, %v2776
  %v2824 = vsub.f32 %v2700, %v2779
  %v2825 = vsub.f32 %v2702, %v2779
  %v2826 = vsub.f32 %v2706, %v2782
  %v2827 = vsub.f32 %v2708, %v2782
  %v2828 = vsub.f32 %v2710, %v2785
  %v2829 = vsub.f32 %v2712, %v2785
  %v2830 = vsub.f32 %v2716, %v2788
  %v2831 = vsub.f32 %v2718, %v2788
  %v2832 = vsub.f32 %v2720, %v2791
  %v2833 = vsub.f32 %v2722, %v2791
  %v2834 = vsub.f32 %v2726, %v2794
  %v2835 = vsub.f32 %v2728, %v2794
  %v2836 = vsub.f32 %v2730, %v2797
  %v2837 = vsub.f32 %v2732, %v2797
  %v2838 = vsub.f32 %v2736, %v2800
  %v2839 = vsub.f32 %v2738, %v2800
  %v2840 = vsub.f32 %v2740, %v2803
  %v2841 = vsub.f32 %v2742, %v2803
  %v2842 = vsub.f32 %v2746, %v2806
  %v2843 = vsub.f32 %v2748, %v2806
  %v2844 = vsub.f32 %v2750, %v2809
  %v2845 = vsub.f32 %v2752, %v2809
  %v2846 = vsub.f32 %v2756, %v2812
  %v2847 = vsub.f32 %v2758, %v2812
  %v2848 = vsub.f32 %v2760, %v2815
  %v2849 = vsub.f32 %v2762, %v2815
  %v2850 = vsub.f32 %v2766, %v2818
  %v2851 = vsub.f32 %v2768, %v2818
  %v2852 = vsub.f32 %v2770, %v2821
  %v2853 = vsub.f32 %v2772, %v2821
  %v2854 = vmul.f32 %v2822, 1.442695
  %v2855 = vpow.pop %v2854
  %v2856 = vmul.f32 %v2823, 1.442695
  %v2857 = vpow.pop %v2856
  %v2858 = vmul.f32 %v2824, 1.442695
  %v2859 = vpow.pop %v2858
  %v2860 = vmul.f32 %v2825, 1.442695
  %v2861 = vpow.pop %v2860
  %v2862 = vmul.f32 %v2826, 1.442695
  %v2863 = vpow.pop %v2862
  %v2864 = vmul.f32 %v2827, 1.442695
  %v2865 = vpow.pop %v2864
  %v2866 = vmul.f32 %v2828, 1.442695
  %v2867 = vpow.pop %v2866
  %v2868 = vmul.f32 %v2829, 1.442695
  %v2869 = vpow.pop %v2868
  %v2870 = vmul.f32 %v2830, 1.442695
  %v2871 = vpow.pop %v2870
  %v2872 = vmul.f32 %v2831, 1.442695
  %v2873 = vpow.pop %v2872
  %v2874 = vmul.f32 %v2832, 1.442695
  %v2875 = vpow.pop %v2874
  %v2876 = vmul.f32 %v2833, 1.442695
  %v2877 = vpow.pop %v2876
  %v2878 = vmul.f32 %v2834, 1.442695
  %v2879 = vpow.pop %v2878
  %v2880 = vmul.f32 %v2835, 1.442695
  %v2881 = vpow.pop %v2880
  %v2882 = vmul.f32 %v2836, 1.442695
  %v2883 = vpow.pop %v2882
  %v2884 = vmul.f32 %v2837, 1.442695
  %v2885 = vpow.pop %v2884
  %v2886 = vmul.f32 %v2838, 1.442695
  %v2887 = vpow.pop %v2886
  %v2888 = vmul.f32 %v2839, 1.442695
  %v2889 = vpow.pop %v2888
  %v2890 = vmul.f32 %v2840, 1.442695
  %v2891 = vpow.pop %v2890
  %v2892 = vmul.f32 %v2841, 1.442695
  %v2893 = vpow.pop %v2892
  %v2894 = vmul.f32 %v2842, 1.442695
  %v2895 = vpow.pop %v2894
  %v2896 = vmul.f32 %v2843, 1.442695
  %v2897 = vpow.pop %v2896
  %v2898 = vmul.f32 %v2844, 1.442695
  %v2899 = vpow.pop %v2898
  %v2900 = vmul.f32 %v2845, 1.442695
  %v2901 = vpow.pop %v2900
  %v2902 = vmul.f32 %v2846, 1.442695
  %v2903 = vpow.pop %v2902
  %v2904 = vmul.f32 %v2847, 1.442695
  %v2905 = vpow.pop %v2904
  %v2906 = vmul.f32 %v2848, 1.442695
  %v2907 = vpow.pop %v2906
  %v2908 = vmul.f32 %v2849, 1.442695
  %v2909 = vpow.pop %v2908
  %v2910 = vmul.f32 %v2850, 1.442695
  %v2911 = vpow.pop %v2910
  %v2912 = vmul.f32 %v2851, 1.442695
  %v2913 = vpow.pop %v2912
  %v2914 = vmul.f32 %v2852, 1.442695
  %v2915 = vpow.pop %v2914
  %v2916 = vmul.f32 %v2853, 1.442695
  %v2917 = vpow.pop %v2916
  %v2918 = vadd.f32 %v2855, %v2857
  %2919 = vadd.xlane.f32.xlu0 %v2918
  %v2920 = vpop.xlane.xlu0 %2919
  %v2921 = vadd.f32 %v2859, %v2861
  %2922 = vadd.xlane.f32.xlu0 %v2921
  %v2923 = vpop.xlane.xlu0 %2922
  %v2924 = vadd.f32 %v2863, %v2865
  %2925 = vadd.xlane.f32.xlu0 %v2924
  %v2926 = vpop.xlane.xlu0 %2925
  %v2927 = vadd.f32 %v2867, %v2869
  %2928 = vadd.xlane.f32.xlu0 %v2927
  %v2929 = vpop.xlane.xlu0 %2928
  %v2930 = vadd.f32 %v2871, %v2873
  %2931 = vadd.xlane.f32.xlu0 %v2930
  %v2932 = vpop.xlane.xlu0 %2931
  %v2933 = vadd.f32 %v2875, %v2877
  %2934 = vadd.xlane.f32.xlu0 %v2933
  %v2935 = vpop.xlane.xlu0 %2934
  %v2936 = vadd.f32 %v2879, %v2881
  %2937 = vadd.xlane.f32.xlu0 %v2936
  %v2938 = vpop.xlane.xlu0 %2937
  %v2939 = vadd.f32 %v2883, %v2885
  %2940 = vadd.xlane.f32.xlu0 %v2939
  %v2941 = vpop.xlane.xlu0 %2940
  %v2942 = vadd.f32 %v2887, %v2889
  %2943 = vadd.xlane.f32.xlu0 %v2942
  %v2944 = vpop.xlane.xlu0 %2943
  %v2945 = vadd.f32 %v2891, %v2893
  %2946 = vadd.xlane.f32.xlu0 %v2945
  %v2947 = vpop.xlane.xlu0 %2946
  %v2948 = vadd.f32 %v2895, %v2897
  %2949 = vadd.xlane.f32.xlu0 %v2948
  %v2950 = vpop.xlane.xlu0 %2949
  %v2951 = vadd.f32 %v2899, %v2901
  %2952 = vadd.xlane.f32.xlu0 %v2951
  %v2953 = vpop.xlane.xlu0 %2952
  %v2954 = vadd.f32 %v2903, %v2905
  %2955 = vadd.xlane.f32.xlu0 %v2954
  %v2956 = vpop.xlane.xlu0 %2955
  %v2957 = vadd.f32 %v2907, %v2909
  %2958 = vadd.xlane.f32.xlu0 %v2957
  %v2959 = vpop.xlane.xlu0 %2958
  %v2960 = vadd.f32 %v2911, %v2913
  %2961 = vadd.xlane.f32.xlu0 %v2960
  %v2962 = vpop.xlane.xlu0 %2961
  %v2963 = vadd.f32 %v2915, %v2917
  %2964 = vadd.xlane.f32.xlu0 %v2963
  %v2965 = vpop.xlane.xlu0 %2964
  %v2966 = vpack.c.bf16 %v2859, %v2855
  %v2967 = vpack.c.bf16 %v2861, %v2857
  %v2968 = vpack.c.bf16 %v2867, %v2863
  %v2969 = vpack.c.bf16 %v2869, %v2865
  %v2970 = vpack.c.bf16 %v2875, %v2871
  %v2971 = vpack.c.bf16 %v2877, %v2873
  %v2972 = vpack.c.bf16 %v2883, %v2879
  %v2973 = vpack.c.bf16 %v2885, %v2881
  %v2974 = vpack.c.bf16 %v2891, %v2887
  %v2975 = vpack.c.bf16 %v2893, %v2889
  %v2976 = vpack.c.bf16 %v2899, %v2895
  %v2977 = vpack.c.bf16 %v2901, %v2897
  %v2978 = vpack.c.bf16 %v2907, %v2903
  %v2979 = vpack.c.bf16 %v2909, %v2905
  %v2980 = vpack.c.bf16 %v2915, %v2911
  %v2981 = vpack.c.bf16 %v2917, %v2913
  %2982 = vmatprep.subr.bf16.mxu0 0
  %2983 = vmatpush1.bf16.msra.mxu0 %v2573
  %2984 = vmatprep.subr.bf16.mxu0 0
  %2985 = vmatpush1.bf16.msra.mxu0 %v2574
  %2986 = vmatprep.subr.bf16.mxu0 0
  %2987 = vmatpush1.bf16.msra.mxu0 %v2575
  %2988 = vmatprep.subr.bf16.mxu0 0
  %2989 = vmatpush1.bf16.msra.mxu0 %v2576
  %2990 = vmatprep.subr.bf16.mxu0 0
  %2991 = vmatpush1.bf16.msra.mxu0 %v2577
  %2992 = vmatprep.subr.bf16.mxu0 0
  %2993 = vmatpush1.bf16.msra.mxu0 %v2578
  %2994 = vmatprep.subr.bf16.mxu0 0
  %2995 = vmatpush1.bf16.msra.mxu0 %v2579
  %2996 = vmatprep.subr.bf16.mxu0 0
  %2997 = vmatpush1.bf16.msra.mxu0 %v2580
  %2998 = vmatprep.subr.bf16.mxu0 0
  %2999 = vmatpush1.bf16.msra.mxu0 %v2581
  %3000 = vmatprep.subr.bf16.mxu0 0
  %3001 = vmatpush1.bf16.msra.mxu0 %v2582
  %3002 = vmatprep.subr.bf16.mxu0 0
  %3003 = vmatpush1.bf16.msra.mxu0 %v2583
  %3004 = vmatprep.subr.bf16.mxu0 0
  %3005 = vmatpush1.bf16.msra.mxu0 %v2584
  %3006 = vmatprep.subr.bf16.mxu0 0
  %3007 = vmatpush1.bf16.msra.mxu0 %v2585
  %3008 = vmatprep.subr.bf16.mxu0 0
  %3009 = vmatpush1.bf16.msra.mxu0 %v2586
  %3010 = vmatprep.subr.bf16.mxu0 0
  %3011 = vmatpush1.bf16.msra.mxu0 %v2587
  %3012 = vmatprep.subr.bf16.mxu0 0
  %3013 = vmatpush1.bf16.msra.mxu0 %v2588
  %3014 = vmatprep.mubr.bf16.mxu0 %v2967
  %3015 = vmatmul.mubr.bf16.gmra.mrb[0].mxu0 %v2966
  %v3016 = vpop.f32.mrb[0].mxu0
  %v3017 = vadd.f32 0.0, %v3016
  %v3018 = vpop.f32.mrb[0].mxu0
  %v3019 = vpop.f32.mrb[0].mxu0
  %v3020 = vadd.f32 0.0, %v3019
  %v3021 = vpop.f32.mrb[0].mxu0
  %3022 = vmatprep.mubr.bf16.mxu0 %v2969
  %3023 = vmatmul.mubr.bf16.gmra.mrb[0].mxu0 %v2968
  %v3024 = vpop.f32.mrb[0].mxu0
  %v3025 = vadd.f32 0.0, %v3024
  %v3026 = vpop.f32.mrb[0].mxu0
  %v3027 = vpop.f32.mrb[0].mxu0
  %v3028 = vadd.f32 0.0, %v3027
  %v3029 = vpop.f32.mrb[0].mxu0
  %3030 = vmatprep.mubr.bf16.mxu0 %v2971
  %3031 = vmatmul.mubr.bf16.gmra.mrb[0].mxu0 %v2970
  %v3032 = vpop.f32.mrb[0].mxu0
  %v3033 = vadd.f32 0.0, %v3032
  %v3034 = vpop.f32.mrb[0].mxu0
  %v3035 = vpop.f32.mrb[0].mxu0
  %v3036 = vadd.f32 0.0, %v3035
  %v3037 = vpop.f32.mrb[0].mxu0
  %3038 = vmatprep.mubr.bf16.mxu0 %v2973
  %3039 = vmatmul.mubr.bf16.gmra.mrb[0].mxu0 %v2972
  %v3040 = vpop.f32.mrb[0].mxu0
  %v3041 = vadd.f32 0.0, %v3040
  %v3042 = vpop.f32.mrb[0].mxu0
  %v3043 = vpop.f32.mrb[0].mxu0
  %v3044 = vadd.f32 0.0, %v3043
  %v3045 = vpop.f32.mrb[0].mxu0
  %3046 = vmatprep.mubr.bf16.mxu0 %v2975
  %3047 = vmatmul.mubr.bf16.gmra.mrb[0].mxu0 %v2974
  %v3048 = vpop.f32.mrb[0].mxu0
  %v3049 = vadd.f32 0.0, %v3048
  %v3050 = vpop.f32.mrb[0].mxu0
  %v3051 = vpop.f32.mrb[0].mxu0
  %v3052 = vadd.f32 0.0, %v3051
  %v3053 = vpop.f32.mrb[0].mxu0
  %3054 = vmatprep.mubr.bf16.mxu0 %v2977
  %3055 = vmatmul.mubr.bf16.gmra.mrb[0].mxu0 %v2976
  %v3056 = vpop.f32.mrb[0].mxu0
  %v3057 = vadd.f32 0.0, %v3056
  %v3058 = vpop.f32.mrb[0].mxu0
  %v3059 = vpop.f32.mrb[0].mxu0
  %v3060 = vadd.f32 0.0, %v3059
  %v3061 = vpop.f32.mrb[0].mxu0
  %3062 = vmatprep.mubr.bf16.mxu0 %v2979
  %3063 = vmatmul.mubr.bf16.gmra.mrb[0].mxu0 %v2978
  %v3064 = vpop.f32.mrb[0].mxu0
  %v3065 = vadd.f32 0.0, %v3064
  %v3066 = vpop.f32.mrb[0].mxu0
  %v3067 = vpop.f32.mrb[0].mxu0
  %v3068 = vadd.f32 0.0, %v3067
  %v3069 = vpop.f32.mrb[0].mxu0
  %3070 = vmatprep.mubr.bf16.mxu0 %v2981
  %3071 = vmatmul.mubr.bf16.gmra.mrb[0].mxu0 %v2980
  %v3072 = vpop.f32.mrb[0].mxu0
  %v3073 = vadd.f32 0.0, %v3072
  %v3074 = vpop.f32.mrb[0].mxu0
  %v3075 = vpop.f32.mrb[0].mxu0
  %v3076 = vadd.f32 0.0, %v3075
  %v3077 = vpop.f32.mrb[0].mxu0
  %3078 = vdwg.mxu0
  %v3079 = vrcp.pop %v2920
  %v3080 = vrcp.pop %v2923
  %v3081 = vrcp.pop %v2926
  %v3082 = vrcp.pop %v2929
  %v3083 = vrcp.pop %v2932
  %v3084 = vrcp.pop %v2935
  %v3085 = vrcp.pop %v2938
  %v3086 = vrcp.pop %v2941
  %v3087 = vrcp.pop %v2944
  %v3088 = vrcp.pop %v2947
  %v3089 = vrcp.pop %v2950
  %v3090 = vrcp.pop %v2953
  %v3091 = vrcp.pop %v2956
  %v3092 = vrcp.pop %v2959
  %v3093 = vrcp.pop %v2962
  %v3094 = vrcp.pop %v2965
  %v3095 = vmul.f32 %v3017, %v3079
  %v3096 = vmul.f32 %v3020, %v3080
  %v3097 = vmul.f32 %v3025, %v3081
  %v3098 = vmul.f32 %v3028, %v3082
  %v3099 = vmul.f32 %v3033, %v3083
  %v3100 = vmul.f32 %v3036, %v3084
  %v3101 = vmul.f32 %v3041, %v3085
  %v3102 = vmul.f32 %v3044, %v3086
  %v3103 = vmul.f32 %v3049, %v3087
  %v3104 = vmul.f32 %v3052, %v3088
  %v3105 = vmul.f32 %v3057, %v3089
  %v3106 = vmul.f32 %v3060, %v3090
  %v3107 = vmul.f32 %v3065, %v3091
  %v3108 = vmul.f32 %v3068, %v3092
  %v3109 = vmul.f32 %v3073, %v3093
  %v3110 = vmul.f32 %v3076, %v3094
  %3119 = vrot.lane.b32.xlu0 %v2549, 64
  %v3120 = vpop.permute.xlu0 %3119
  %3121 = vrot.lane.b32.xlu0 %v2550, 64
  %v3122 = vpop.permute.xlu0 %3121
  %3123 = vrot.lane.b32.xlu0 %v2551, 64
  %v3124 = vpop.permute.xlu0 %3123
  %3125 = vrot.lane.b32.xlu0 %v2552, 64
  %v3126 = vpop.permute.xlu0 %3125
  %3127 = vrot.lane.b32.xlu0 %v2553, 64
  %v3128 = vpop.permute.xlu0 %3127
  %3129 = vrot.lane.b32.xlu0 %v2554, 64
  %v3130 = vpop.permute.xlu0 %3129
  %3131 = vrot.lane.b32.xlu0 %v2555, 64
  %v3132 = vpop.permute.xlu0 %3131
  %3133 = vrot.lane.b32.xlu0 %v2556, 64
  %v3134 = vpop.permute.xlu0 %3133
  %3151 = vrot.lane.b32.xlu0 %v2557, 64
  %v3152 = vpop.permute.xlu0 %3151
  %3153 = vrot.lane.b32.xlu0 %v2558, 64
  %v3154 = vpop.permute.xlu0 %3153
  %3155 = vrot.lane.b32.xlu0 %v2559, 64
  %v3156 = vpop.permute.xlu0 %3155
  %3157 = vrot.lane.b32.xlu0 %v2560, 64
  %v3158 = vpop.permute.xlu0 %3157
  %3159 = vrot.lane.b32.xlu0 %v2561, 64
  %v3160 = vpop.permute.xlu0 %3159
  %3161 = vrot.lane.b32.xlu0 %v2562, 64
  %v3162 = vpop.permute.xlu0 %3161
  %3163 = vrot.lane.b32.xlu0 %v2563, 64
  %v3164 = vpop.permute.xlu0 %3163
  %3165 = vrot.lane.b32.xlu0 %v2564, 64
  %v3166 = vpop.permute.xlu0 %3165
  %3167 = vrot.lane.b32.xlu0 %v2565, 64
  %v3168 = vpop.permute.xlu0 %3167
  %3169 = vrot.lane.b32.xlu0 %v2566, 64
  %v3170 = vpop.permute.xlu0 %3169
  %3171 = vrot.lane.b32.xlu0 %v2567, 64
  %v3172 = vpop.permute.xlu0 %3171
  %3173 = vrot.lane.b32.xlu0 %v2568, 64
  %v3174 = vpop.permute.xlu0 %3173
  %3175 = vrot.lane.b32.xlu0 %v2569, 64
  %v3176 = vpop.permute.xlu0 %3175
  %3177 = vrot.lane.b32.xlu0 %v2570, 64
  %v3178 = vpop.permute.xlu0 %3177
  %3179 = vrot.lane.b32.xlu0 %v2571, 64
  %v3180 = vpop.permute.xlu0 %3179
  %3181 = vrot.lane.b32.xlu0 %v2572, 64
  %v3182 = vpop.permute.xlu0 %3181
  %v3184 = vsel %vm1368, %v3120, 0
  %v3187 = vsel %vm1368, %v3122, 0
  %v3190 = vsel %vm1368, %v3124, 0
  %v3193 = vsel %vm1368, %v3126, 0
  %v3196 = vsel %vm1368, %v3128, 0
  %v3199 = vsel %vm1368, %v3130, 0
  %v3202 = vsel %vm1368, %v3132, 0
  %v3205 = vsel %vm1368, %v3134, 0
  %v3208 = vsel %vm1368, %v3152, 0
  %v3211 = vsel %vm1368, %v3154, 0
  %v3214 = vsel %vm1368, %v3156, 0
  %v3217 = vsel %vm1368, %v3158, 0
  %v3220 = vsel %vm1368, %v3160, 0
  %v3223 = vsel %vm1368, %v3162, 0
  %v3226 = vsel %vm1368, %v3164, 0
  %v3229 = vsel %vm1368, %v3166, 0
  %v3232 = vsel %vm1368, %v3168, 0
  %v3235 = vsel %vm1368, %v3170, 0
  %v3238 = vsel %vm1368, %v3172, 0
  %v3241 = vsel %vm1368, %v3174, 0
  %v3244 = vsel %vm1368, %v3176, 0
  %v3247 = vsel %vm1368, %v3178, 0
  %v3250 = vsel %vm1368, %v3180, 0
  %v3253 = vsel %vm1368, %v3182, 0
  %3255 = vmatprep.subr.bf16.mxu0 0
  %3256 = vmatpush1.bf16.xpose.msra.mxu0 %v3208
  %3257 = vmatprep.subr.bf16.mxu0 0
  %3258 = vmatpush1.bf16.xpose.msra.mxu0 %v3211
  %3259 = vmatprep.subr.bf16.mxu0 0
  %3260 = vmatpush1.bf16.xpose.msra.mxu0 %v3214
  %3261 = vmatprep.subr.bf16.mxu0 0
  %3262 = vmatpush1.bf16.xpose.msra.mxu0 %v3217
  %3263 = vmatprep.subr.bf16.mxu0 0
  %3264 = vmatpush1.bf16.xpose.msra.mxu0 %v3220
  %3265 = vmatprep.subr.bf16.mxu0 0
  %3266 = vmatpush1.bf16.xpose.msra.mxu0 %v3223
  %3267 = vmatprep.subr.bf16.mxu0 0
  %3268 = vmatpush1.bf16.xpose.msra.mxu0 %v3226
  %3269 = vmatprep.subr.bf16.mxu0 0
  %3270 = vmatpush1.bf16.xpose.msra.mxu0 %v3229
  %3271 = vmatprep.subr.bf16.mxu0 0
  %3272 = vmatpush1.bf16.xpose.msra.mxu0 %v3232
  %3273 = vmatprep.subr.bf16.mxu0 0
  %3274 = vmatpush1.bf16.xpose.msra.mxu0 %v3235
  %3275 = vmatprep.subr.bf16.mxu0 0
  %3276 = vmatpush1.bf16.xpose.msra.mxu0 %v3238
  %3277 = vmatprep.subr.bf16.mxu0 0
  %3278 = vmatpush1.bf16.xpose.msra.mxu0 %v3241
  %3279 = vmatprep.subr.bf16.mxu0 0
  %3280 = vmatpush1.bf16.xpose.msra.mxu0 %v3244
  %3281 = vmatprep.subr.bf16.mxu0 0
  %3282 = vmatpush1.bf16.xpose.msra.mxu0 %v3247
  %3283 = vmatprep.subr.bf16.mxu0 0
  %3284 = vmatpush1.bf16.xpose.msra.mxu0 %v3250
  %3285 = vmatprep.subr.bf16.mxu0 0
  %3286 = vmatpush1.bf16.xpose.msra.mxu0 %v3253
  %3287 = vmatprep.mubr.bf16.mxu0 0
  %3288 = vmatmul.mubr.bf16.gmra.mrb[0].mxu0 %v3184
  %v3289 = vpop.f32.mrb[0].mxu0
  %v3290 = vadd.f32 %v1296, %v3289
  %v3291 = vpop.f32.mrb[0].mxu0
  %v3292 = vadd.f32 %v1297, %v3291
  %v3293 = vpop.f32.mrb[0].mxu0
  %v3294 = vadd.f32 %v1298, %v3293
  %v3295 = vpop.f32.mrb[0].mxu0
  %v3296 = vadd.f32 %v1299, %v3295
  %3297 = vmatprep.mubr.bf16.mxu0 0
  %3298 = vmatmul.mubr.bf16.gmra.mrb[0].mxu0 %v3187
  %v3299 = vpop.f32.mrb[0].mxu0
  %v3300 = vadd.f32 %v1300, %v3299
  %v3301 = vpop.f32.mrb[0].mxu0
  %v3302 = vadd.f32 %v1301, %v3301
  %v3303 = vpop.f32.mrb[0].mxu0
  %v3304 = vadd.f32 %v1302, %v3303
  %v3305 = vpop.f32.mrb[0].mxu0
  %v3306 = vadd.f32 %v1303, %v3305
  %3307 = vmatprep.mubr.bf16.mxu0 0
  %3308 = vmatmul.mubr.bf16.gmra.mrb[0].mxu0 %v3190
  %v3309 = vpop.f32.mrb[0].mxu0
  %v3310 = vadd.f32 %v1304, %v3309
  %v3311 = vpop.f32.mrb[0].mxu0
  %v3312 = vadd.f32 %v1305, %v3311
  %v3313 = vpop.f32.mrb[0].mxu0
  %v3314 = vadd.f32 %v1306, %v3313
  %v3315 = vpop.f32.mrb[0].mxu0
  %v3316 = vadd.f32 %v1307, %v3315
  %3317 = vmatprep.mubr.bf16.mxu0 0
  %3318 = vmatmul.mubr.bf16.gmra.mrb[0].mxu0 %v3193
  %v3319 = vpop.f32.mrb[0].mxu0
  %v3320 = vadd.f32 %v1308, %v3319
  %v3321 = vpop.f32.mrb[0].mxu0
  %v3322 = vadd.f32 %v1309, %v3321
  %v3323 = vpop.f32.mrb[0].mxu0
  %v3324 = vadd.f32 %v1310, %v3323
  %v3325 = vpop.f32.mrb[0].mxu0
  %v3326 = vadd.f32 %v1311, %v3325
  %3327 = vmatprep.mubr.bf16.mxu0 0
  %3328 = vmatmul.mubr.bf16.gmra.mrb[0].mxu0 %v3196
  %v3329 = vpop.f32.mrb[0].mxu0
  %v3330 = vadd.f32 %v1312, %v3329
  %v3331 = vpop.f32.mrb[0].mxu0
  %v3332 = vadd.f32 %v1313, %v3331
  %v3333 = vpop.f32.mrb[0].mxu0
  %v3334 = vadd.f32 %v1314, %v3333
  %v3335 = vpop.f32.mrb[0].mxu0
  %v3336 = vadd.f32 %v1315, %v3335
  %3337 = vmatprep.mubr.bf16.mxu0 0
  %3338 = vmatmul.mubr.bf16.gmra.mrb[0].mxu0 %v3199
  %v3339 = vpop.f32.mrb[0].mxu0
  %v3340 = vadd.f32 %v1316, %v3339
  %v3341 = vpop.f32.mrb[0].mxu0
  %v3342 = vadd.f32 %v1317, %v3341
  %v3343 = vpop.f32.mrb[0].mxu0
  %v3344 = vadd.f32 %v1318, %v3343
  %v3345 = vpop.f32.mrb[0].mxu0
  %v3346 = vadd.f32 %v1319, %v3345
  %3347 = vmatprep.mubr.bf16.mxu0 0
  %3348 = vmatmul.mubr.bf16.gmra.mrb[0].mxu0 %v3202
  %v3349 = vpop.f32.mrb[0].mxu0
  %v3350 = vadd.f32 %v1320, %v3349
  %v3351 = vpop.f32.mrb[0].mxu0
  %v3352 = vadd.f32 %v1321, %v3351
  %v3353 = vpop.f32.mrb[0].mxu0
  %v3354 = vadd.f32 %v1322, %v3353
  %v3355 = vpop.f32.mrb[0].mxu0
  %v3356 = vadd.f32 %v1323, %v3355
  %3357 = vmatprep.mubr.bf16.mxu0 0
  %3358 = vmatmul.mubr.bf16.gmra.mrb[0].mxu0 %v3205
  %v3359 = vpop.f32.mrb[0].mxu0
  %v3360 = vadd.f32 %v1324, %v3359
  %v3361 = vpop.f32.mrb[0].mxu0
  %v3362 = vadd.f32 %v1325, %v3361
  %v3363 = vpop.f32.mrb[0].mxu0
  %v3364 = vadd.f32 %v1326, %v3363
  %v3365 = vpop.f32.mrb[0].mxu0
  %v3366 = vadd.f32 %v1327, %v3365
  %3367 = vdwg.mxu0
  %v3368 = vmax.f32 %v3290, %v3292
  %3369 = vmax.xlane.f32.xlu0 %v3368
  %v3370 = vpop.xlane.xlu0 %3369
  %v3371 = vmax.f32 %v3294, %v3296
  %3372 = vmax.xlane.f32.xlu0 %v3371
  %v3373 = vpop.xlane.xlu0 %3372
  %v3374 = vmax.f32 %v3300, %v3302
  %3375 = vmax.xlane.f32.xlu0 %v3374
  %v3376 = vpop.xlane.xlu0 %3375
  %v3377 = vmax.f32 %v3304, %v3306
  %3378 = vmax.xlane.f32.xlu0 %v3377
  %v3379 = vpop.xlane.xlu0 %3378
  %v3380 = vmax.f32 %v3310, %v3312
  %3381 = vmax.xlane.f32.xlu0 %v3380
  %v3382 = vpop.xlane.xlu0 %3381
  %v3383 = vmax.f32 %v3314, %v3316
  %3384 = vmax.xlane.f32.xlu0 %v3383
  %v3385 = vpop.xlane.xlu0 %3384
  %v3386 = vmax.f32 %v3320, %v3322
  %3387 = vmax.xlane.f32.xlu0 %v3386
  %v3388 = vpop.xlane.xlu0 %3387
  %v3389 = vmax.f32 %v3324, %v3326
  %3390 = vmax.xlane.f32.xlu0 %v3389
  %v3391 = vpop.xlane.xlu0 %3390
  %v3392 = vmax.f32 %v3330, %v3332
  %3393 = vmax.xlane.f32.xlu0 %v3392
  %v3394 = vpop.xlane.xlu0 %3393
  %v3395 = vmax.f32 %v3334, %v3336
  %3396 = vmax.xlane.f32.xlu0 %v3395
  %v3397 = vpop.xlane.xlu0 %3396
  %v3398 = vmax.f32 %v3340, %v3342
  %3399 = vmax.xlane.f32.xlu0 %v3398
  %v3400 = vpop.xlane.xlu0 %3399
  %v3401 = vmax.f32 %v3344, %v3346
  %3402 = vmax.xlane.f32.xlu0 %v3401
  %v3403 = vpop.xlane.xlu0 %3402
  %v3404 = vmax.f32 %v3350, %v3352
  %3405 = vmax.xlane.f32.xlu0 %v3404
  %v3406 = vpop.xlane.xlu0 %3405
  %v3407 = vmax.f32 %v3354, %v3356
  %3408 = vmax.xlane.f32.xlu0 %v3407
  %v3409 = vpop.xlane.xlu0 %3408
  %v3410 = vmax.f32 %v3360, %v3362
  %3411 = vmax.xlane.f32.xlu0 %v3410
  %v3412 = vpop.xlane.xlu0 %3411
  %v3413 = vmax.f32 %v3364, %v3366
  %3414 = vmax.xlane.f32.xlu0 %v3413
  %v3415 = vpop.xlane.xlu0 %3414
  %v3416 = vsub.f32 %v3290, %v3370
  %v3417 = vsub.f32 %v3292, %v3370
  %v3418 = vsub.f32 %v3294, %v3373
  %v3419 = vsub.f32 %v3296, %v3373
  %v3420 = vsub.f32 %v3300, %v3376
  %v3421 = vsub.f32 %v3302, %v3376
  %v3422 = vsub.f32 %v3304, %v3379
  %v3423 = vsub.f32 %v3306, %v3379
  %v3424 = vsub.f32 %v3310, %v3382
  %v3425 = vsub.f32 %v3312, %v3382
  %v3426 = vsub.f32 %v3314, %v3385
  %v3427 = vsub.f32 %v3316, %v3385
  %v3428 = vsub.f32 %v3320, %v3388
  %v3429 = vsub.f32 %v3322, %v3388
  %v3430 = vsub.f32 %v3324, %v3391
  %v3431 = vsub.f32 %v3326, %v3391
  %v3432 = vsub.f32 %v3330, %v3394
  %v3433 = vsub.f32 %v3332, %v3394
  %v3434 = vsub.f32 %v3334, %v3397
  %v3435 = vsub.f32 %v3336, %v3397
  %v3436 = vsub.f32 %v3340, %v3400
  %v3437 = vsub.f32 %v3342, %v3400
  %v3438 = vsub.f32 %v3344, %v3403
  %v3439 = vsub.f32 %v3346, %v3403
  %v3440 = vsub.f32 %v3350, %v3406
  %v3441 = vsub.f32 %v3352, %v3406
  %v3442 = vsub.f32 %v3354, %v3409
  %v3443 = vsub.f32 %v3356, %v3409
  %v3444 = vsub.f32 %v3360, %v3412
  %v3445 = vsub.f32 %v3362, %v3412
  %v3446 = vsub.f32 %v3364, %v3415
  %v3447 = vsub.f32 %v3366, %v3415
  %v3448 = vmul.f32 %v3416, 1.442695
  %v3449 = vpow.pop %v3448
  %v3450 = vmul.f32 %v3417, 1.442695
  %v3451 = vpow.pop %v3450
  %v3452 = vmul.f32 %v3418, 1.442695
  %v3453 = vpow.pop %v3452
  %v3454 = vmul.f32 %v3419, 1.442695
  %v3455 = vpow.pop %v3454
  %v3456 = vmul.f32 %v3420, 1.442695
  %v3457 = vpow.pop %v3456
  %v3458 = vmul.f32 %v3421, 1.442695
  %v3459 = vpow.pop %v3458
  %v3460 = vmul.f32 %v3422, 1.442695
  %v3461 = vpow.pop %v3460
  %v3462 = vmul.f32 %v3423, 1.442695
  %v3463 = vpow.pop %v3462
  %v3464 = vmul.f32 %v3424, 1.442695
  %v3465 = vpow.pop %v3464
  %v3466 = vmul.f32 %v3425, 1.442695
  %v3467 = vpow.pop %v3466
  %v3468 = vmul.f32 %v3426, 1.442695
  %v3469 = vpow.pop %v3468
  %v3470 = vmul.f32 %v3427, 1.442695
  %v3471 = vpow.pop %v3470
  %v3472 = vmul.f32 %v3428, 1.442695
  %v3473 = vpow.pop %v3472
  %v3474 = vmul.f32 %v3429, 1.442695
  %v3475 = vpow.pop %v3474
  %v3476 = vmul.f32 %v3430, 1.442695
  %v3477 = vpow.pop %v3476
  %v3478 = vmul.f32 %v3431, 1.442695
  %v3479 = vpow.pop %v3478
  %v3480 = vmul.f32 %v3432, 1.442695
  %v3481 = vpow.pop %v3480
  %v3482 = vmul.f32 %v3433, 1.442695
  %v3483 = vpow.pop %v3482
  %v3484 = vmul.f32 %v3434, 1.442695
  %v3485 = vpow.pop %v3484
  %v3486 = vmul.f32 %v3435, 1.442695
  %v3487 = vpow.pop %v3486
  %v3488 = vmul.f32 %v3436, 1.442695
  %v3489 = vpow.pop %v3488
  %v3490 = vmul.f32 %v3437, 1.442695
  %v3491 = vpow.pop %v3490
  %v3492 = vmul.f32 %v3438, 1.442695
  %v3493 = vpow.pop %v3492
  %v3494 = vmul.f32 %v3439, 1.442695
  %v3495 = vpow.pop %v3494
  %v3496 = vmul.f32 %v3440, 1.442695
  %v3497 = vpow.pop %v3496
  %v3498 = vmul.f32 %v3441, 1.442695
  %v3499 = vpow.pop %v3498
  %v3500 = vmul.f32 %v3442, 1.442695
  %v3501 = vpow.pop %v3500
  %v3502 = vmul.f32 %v3443, 1.442695
  %v3503 = vpow.pop %v3502
  %v3504 = vmul.f32 %v3444, 1.442695
  %v3505 = vpow.pop %v3504
  %v3506 = vmul.f32 %v3445, 1.442695
  %v3507 = vpow.pop %v3506
  %v3508 = vmul.f32 %v3446, 1.442695
  %v3509 = vpow.pop %v3508
  %v3510 = vmul.f32 %v3447, 1.442695
  %v3511 = vpow.pop %v3510
  %v3512 = vadd.f32 %v3449, %v3451
  %3513 = vadd.xlane.f32.xlu0 %v3512
  %v3514 = vpop.xlane.xlu0 %3513
  %v3515 = vadd.f32 %v3453, %v3455
  %3516 = vadd.xlane.f32.xlu0 %v3515
  %v3517 = vpop.xlane.xlu0 %3516
  %v3518 = vadd.f32 %v3457, %v3459
  %3519 = vadd.xlane.f32.xlu0 %v3518
  %v3520 = vpop.xlane.xlu0 %3519
  %v3521 = vadd.f32 %v3461, %v3463
  %3522 = vadd.xlane.f32.xlu0 %v3521
  %v3523 = vpop.xlane.xlu0 %3522
  %v3524 = vadd.f32 %v3465, %v3467
  %3525 = vadd.xlane.f32.xlu0 %v3524
  %v3526 = vpop.xlane.xlu0 %3525
  %v3527 = vadd.f32 %v3469, %v3471
  %3528 = vadd.xlane.f32.xlu0 %v3527
  %v3529 = vpop.xlane.xlu0 %3528
  %v3530 = vadd.f32 %v3473, %v3475
  %3531 = vadd.xlane.f32.xlu0 %v3530
  %v3532 = vpop.xlane.xlu0 %3531
  %v3533 = vadd.f32 %v3477, %v3479
  %3534 = vadd.xlane.f32.xlu0 %v3533
  %v3535 = vpop.xlane.xlu0 %3534
  %v3536 = vadd.f32 %v3481, %v3483
  %3537 = vadd.xlane.f32.xlu0 %v3536
  %v3538 = vpop.xlane.xlu0 %3537
  %v3539 = vadd.f32 %v3485, %v3487
  %3540 = vadd.xlane.f32.xlu0 %v3539
  %v3541 = vpop.xlane.xlu0 %3540
  %v3542 = vadd.f32 %v3489, %v3491
  %3543 = vadd.xlane.f32.xlu0 %v3542
  %v3544 = vpop.xlane.xlu0 %3543
  %v3545 = vadd.f32 %v3493, %v3495
  %3546 = vadd.xlane.f32.xlu0 %v3545
  %v3547 = vpop.xlane.xlu0 %3546
  %v3548 = vadd.f32 %v3497, %v3499
  %3549 = vadd.xlane.f32.xlu0 %v3548
  %v3550 = vpop.xlane.xlu0 %3549
  %v3551 = vadd.f32 %v3501, %v3503
  %3552 = vadd.xlane.f32.xlu0 %v3551
  %v3553 = vpop.xlane.xlu0 %3552
  %v3554 = vadd.f32 %v3505, %v3507
  %3555 = vadd.xlane.f32.xlu0 %v3554
  %v3556 = vpop.xlane.xlu0 %3555
  %v3557 = vadd.f32 %v3509, %v3511
  %3558 = vadd.xlane.f32.xlu0 %v3557
  %v3559 = vpop.xlane.xlu0 %3558
  %v3560 = vpack.c.bf16 %v3453, %v3449
  %v3561 = vpack.c.bf16 %v3455, %v3451
  %v3562 = vpack.c.bf16 %v3461, %v3457
  %v3563 = vpack.c.bf16 %v3463, %v3459
  %v3564 = vpack.c.bf16 %v3469, %v3465
  %v3565 = vpack.c.bf16 %v3471, %v3467
  %v3566 = vpack.c.bf16 %v3477, %v3473
  %v3567 = vpack.c.bf16 %v3479, %v3475
  %v3568 = vpack.c.bf16 %v3485, %v3481
  %v3569 = vpack.c.bf16 %v3487, %v3483
  %v3570 = vpack.c.bf16 %v3493, %v3489
  %v3571 = vpack.c.bf16 %v3495, %v3491
  %v3572 = vpack.c.bf16 %v3501, %v3497
  %v3573 = vpack.c.bf16 %v3503, %v3499
  %v3574 = vpack.c.bf16 %v3509, %v3505
  %v3575 = vpack.c.bf16 %v3511, %v3507
  %3592 = vrot.lane.b32.xlu0 %v2573, 64
  %v3593 = vpop.permute.xlu0 %3592
  %3594 = vrot.lane.b32.xlu0 %v2574, 64
  %v3595 = vpop.permute.xlu0 %3594
  %3596 = vrot.lane.b32.xlu0 %v2575, 64
  %v3597 = vpop.permute.xlu0 %3596
  %3598 = vrot.lane.b32.xlu0 %v2576, 64
  %v3599 = vpop.permute.xlu0 %3598
  %3600 = vrot.lane.b32.xlu0 %v2577, 64
  %v3601 = vpop.permute.xlu0 %3600
  %3602 = vrot.lane.b32.xlu0 %v2578, 64
  %v3603 = vpop.permute.xlu0 %3602
  %3604 = vrot.lane.b32.xlu0 %v2579, 64
  %v3605 = vpop.permute.xlu0 %3604
  %3606 = vrot.lane.b32.xlu0 %v2580, 64
  %v3607 = vpop.permute.xlu0 %3606
  %3608 = vrot.lane.b32.xlu0 %v2581, 64
  %v3609 = vpop.permute.xlu0 %3608
  %3610 = vrot.lane.b32.xlu0 %v2582, 64
  %v3611 = vpop.permute.xlu0 %3610
  %3612 = vrot.lane.b32.xlu0 %v2583, 64
  %v3613 = vpop.permute.xlu0 %3612
  %3614 = vrot.lane.b32.xlu0 %v2584, 64
  %v3615 = vpop.permute.xlu0 %3614
  %3616 = vrot.lane.b32.xlu0 %v2585, 64
  %v3617 = vpop.permute.xlu0 %3616
  %3618 = vrot.lane.b32.xlu0 %v2586, 64
  %v3619 = vpop.permute.xlu0 %3618
  %3620 = vrot.lane.b32.xlu0 %v2587, 64
  %v3621 = vpop.permute.xlu0 %3620
  %3622 = vrot.lane.b32.xlu0 %v2588, 64
  %v3623 = vpop.permute.xlu0 %3622
  %3640 = vmatprep.subr.bf16.mxu0 0
  %3641 = vmatpush1.bf16.msra.mxu0 %v3593
  %3642 = vmatprep.subr.bf16.mxu0 0
  %3643 = vmatpush1.bf16.msra.mxu0 %v3595
  %3644 = vmatprep.subr.bf16.mxu0 0
  %3645 = vmatpush1.bf16.msra.mxu0 %v3597
  %3646 = vmatprep.subr.bf16.mxu0 0
  %3647 = vmatpush1.bf16.msra.mxu0 %v3599
  %3648 = vmatprep.subr.bf16.mxu0 0
  %3649 = vmatpush1.bf16.msra.mxu0 %v3601
  %3650 = vmatprep.subr.bf16.mxu0 0
  %3651 = vmatpush1.bf16.msra.mxu0 %v3603
  %3652 = vmatprep.subr.bf16.mxu0 0
  %3653 = vmatpush1.bf16.msra.mxu0 %v3605
  %3654 = vmatprep.subr.bf16.mxu0 0
  %3655 = vmatpush1.bf16.msra.mxu0 %v3607
  %3656 = vmatprep.subr.bf16.mxu0 0
  %3657 = vmatpush1.bf16.msra.mxu0 %v3609
  %3658 = vmatprep.subr.bf16.mxu0 0
  %3659 = vmatpush1.bf16.msra.mxu0 %v3611
  %3660 = vmatprep.subr.bf16.mxu0 0
  %3661 = vmatpush1.bf16.msra.mxu0 %v3613
  %3662 = vmatprep.subr.bf16.mxu0 0
  %3663 = vmatpush1.bf16.msra.mxu0 %v3615
  %3664 = vmatprep.subr.bf16.mxu0 0
  %3665 = vmatpush1.bf16.msra.mxu0 %v3617
  %3666 = vmatprep.subr.bf16.mxu0 0
  %3667 = vmatpush1.bf16.msra.mxu0 %v3619
  %3668 = vmatprep.subr.bf16.mxu0 0
  %3669 = vmatpush1.bf16.msra.mxu0 %v3621
  %3670 = vmatprep.subr.bf16.mxu0 0
  %3671 = vmatpush1.bf16.msra.mxu0 %v3623
  %3672 = vmatprep.mubr.bf16.mxu0 %v3561
  %3673 = vmatmul.mubr.bf16.gmra.mrb[0].mxu0 %v3560
  %v3674 = vpop.f32.mrb[0].mxu0
  %v3675 = vadd.f32 0.0, %v3674
  %v3676 = vpop.f32.mrb[0].mxu0
  %v3677 = vpop.f32.mrb[0].mxu0
  %v3678 = vadd.f32 0.0, %v3677
  %v3679 = vpop.f32.mrb[0].mxu0
  %3680 = vmatprep.mubr.bf16.mxu0 %v3563
  %3681 = vmatmul.mubr.bf16.gmra.mrb[0].mxu0 %v3562
  %v3682 = vpop.f32.mrb[0].mxu0
  %v3683 = vadd.f32 0.0, %v3682
  %v3684 = vpop.f32.mrb[0].mxu0
  %v3685 = vpop.f32.mrb[0].mxu0
  %v3686 = vadd.f32 0.0, %v3685
  %v3687 = vpop.f32.mrb[0].mxu0
  %3688 = vmatprep.mubr.bf16.mxu0 %v3565
  %3689 = vmatmul.mubr.bf16.gmra.mrb[0].mxu0 %v3564
  %v3690 = vpop.f32.mrb[0].mxu0
  %v3691 = vadd.f32 0.0, %v3690
  %v3692 = vpop.f32.mrb[0].mxu0
  %v3693 = vpop.f32.mrb[0].mxu0
  %v3694 = vadd.f32 0.0, %v3693
  %v3695 = vpop.f32.mrb[0].mxu0
  %3696 = vmatprep.mubr.bf16.mxu0 %v3567
  %3697 = vmatmul.mubr.bf16.gmra.mrb[0].mxu0 %v3566
  %v3698 = vpop.f32.mrb[0].mxu0
  %v3699 = vadd.f32 0.0, %v3698
  %v3700 = vpop.f32.mrb[0].mxu0
  %v3701 = vpop.f32.mrb[0].mxu0
  %v3702 = vadd.f32 0.0, %v3701
  %v3703 = vpop.f32.mrb[0].mxu0
  %3704 = vmatprep.mubr.bf16.mxu0 %v3569
  %3705 = vmatmul.mubr.bf16.gmra.mrb[0].mxu0 %v3568
  %v3706 = vpop.f32.mrb[0].mxu0
  %v3707 = vadd.f32 0.0, %v3706
  %v3708 = vpop.f32.mrb[0].mxu0
  %v3709 = vpop.f32.mrb[0].mxu0
  %v3710 = vadd.f32 0.0, %v3709
  %v3711 = vpop.f32.mrb[0].mxu0
  %3712 = vmatprep.mubr.bf16.mxu0 %v3571
  %3713 = vmatmul.mubr.bf16.gmra.mrb[0].mxu0 %v3570
  %v3714 = vpop.f32.mrb[0].mxu0
  %v3715 = vadd.f32 0.0, %v3714
  %v3716 = vpop.f32.mrb[0].mxu0
  %v3717 = vpop.f32.mrb[0].mxu0
  %v3718 = vadd.f32 0.0, %v3717
  %v3719 = vpop.f32.mrb[0].mxu0
  %3720 = vmatprep.mubr.bf16.mxu0 %v3573
  %3721 = vmatmul.mubr.bf16.gmra.mrb[0].mxu0 %v3572
  %v3722 = vpop.f32.mrb[0].mxu0
  %v3723 = vadd.f32 0.0, %v3722
  %v3724 = vpop.f32.mrb[0].mxu0
  %v3725 = vpop.f32.mrb[0].mxu0
  %v3726 = vadd.f32 0.0, %v3725
  %v3727 = vpop.f32.mrb[0].mxu0
  %3728 = vmatprep.mubr.bf16.mxu0 %v3575
  %3729 = vmatmul.mubr.bf16.gmra.mrb[0].mxu0 %v3574
  %v3730 = vpop.f32.mrb[0].mxu0
  %v3731 = vadd.f32 0.0, %v3730
  %v3732 = vpop.f32.mrb[0].mxu0
  %v3733 = vpop.f32.mrb[0].mxu0
  %v3734 = vadd.f32 0.0, %v3733
  %v3735 = vpop.f32.mrb[0].mxu0
  %3736 = vdwg.mxu0
  %v3737 = vrcp.pop %v3514
  %v3738 = vrcp.pop %v3517
  %v3739 = vrcp.pop %v3520
  %v3740 = vrcp.pop %v3523
  %v3741 = vrcp.pop %v3526
  %v3742 = vrcp.pop %v3529
  %v3743 = vrcp.pop %v3532
  %v3744 = vrcp.pop %v3535
  %v3745 = vrcp.pop %v3538
  %v3746 = vrcp.pop %v3541
  %v3747 = vrcp.pop %v3544
  %v3748 = vrcp.pop %v3547
  %v3749 = vrcp.pop %v3550
  %v3750 = vrcp.pop %v3553
  %v3751 = vrcp.pop %v3556
  %v3752 = vrcp.pop %v3559
  %v3753 = vmul.f32 %v3675, %v3737
  %v3754 = vmul.f32 %v3678, %v3738
  %v3755 = vmul.f32 %v3683, %v3739
  %v3756 = vmul.f32 %v3686, %v3740
  %v3757 = vmul.f32 %v3691, %v3741
  %v3758 = vmul.f32 %v3694, %v3742
  %v3759 = vmul.f32 %v3699, %v3743
  %v3760 = vmul.f32 %v3702, %v3744
  %v3761 = vmul.f32 %v3707, %v3745
  %v3762 = vmul.f32 %v3710, %v3746
  %v3763 = vmul.f32 %v3715, %v3747
  %v3764 = vmul.f32 %v3718, %v3748
  %v3765 = vmul.f32 %v3723, %v3749
  %v3766 = vmul.f32 %v3726, %v3750
  %v3767 = vmul.f32 %v3731, %v3751
  %v3768 = vmul.f32 %v3734, %v3752
  %3785 = vrot.lane.b32.xlu0 %v2533, 64
  %v3786 = vpop.permute.xlu0 %3785
  %3787 = vrot.lane.b32.xlu0 %v2534, 64
  %v3788 = vpop.permute.xlu0 %3787
  %3789 = vrot.lane.b32.xlu0 %v2535, 64
  %v3790 = vpop.permute.xlu0 %3789
  %3791 = vrot.lane.b32.xlu0 %v2536, 64
  %v3792 = vpop.permute.xlu0 %3791
  %3793 = vrot.lane.b32.xlu0 %v2537, 64
  %v3794 = vpop.permute.xlu0 %3793
  %3795 = vrot.lane.b32.xlu0 %v2538, 64
  %v3796 = vpop.permute.xlu0 %3795
  %3797 = vrot.lane.b32.xlu0 %v2539, 64
  %v3798 = vpop.permute.xlu0 %3797
  %3799 = vrot.lane.b32.xlu0 %v2540, 64
  %v3800 = vpop.permute.xlu0 %3799
  %3801 = vrot.lane.b32.xlu0 %v2541, 64
  %v3802 = vpop.permute.xlu0 %3801
  %3803 = vrot.lane.b32.xlu0 %v2542, 64
  %v3804 = vpop.permute.xlu0 %3803
  %3805 = vrot.lane.b32.xlu0 %v2543, 64
  %v3806 = vpop.permute.xlu0 %3805
  %3807 = vrot.lane.b32.xlu0 %v2544, 64
  %v3808 = vpop.permute.xlu0 %3807
  %3809 = vrot.lane.b32.xlu0 %v2545, 64
  %v3810 = vpop.permute.xlu0 %3809
  %3811 = vrot.lane.b32.xlu0 %v2546, 64
  %v3812 = vpop.permute.xlu0 %3811
  %3813 = vrot.lane.b32.xlu0 %v2547, 64
  %v3814 = vpop.permute.xlu0 %3813
  %3815 = vrot.lane.b32.xlu0 %v2548, 64
  %v3816 = vpop.permute.xlu0 %3815
  %3849 = vrot.lane.b32.xlu0 %v3753, 64
  %v3850 = vpop.permute.xlu0 %3849
  %3851 = vrot.lane.b32.xlu0 %v3754, 64
  %v3852 = vpop.permute.xlu0 %3851
  %3853 = vrot.lane.b32.xlu0 %v3755, 64
  %v3854 = vpop.permute.xlu0 %3853
  %3855 = vrot.lane.b32.xlu0 %v3756, 64
  %v3856 = vpop.permute.xlu0 %3855
  %3857 = vrot.lane.b32.xlu0 %v3757, 64
  %v3858 = vpop.permute.xlu0 %3857
  %3859 = vrot.lane.b32.xlu0 %v3758, 64
  %v3860 = vpop.permute.xlu0 %3859
  %3861 = vrot.lane.b32.xlu0 %v3759, 64
  %v3862 = vpop.permute.xlu0 %3861
  %3863 = vrot.lane.b32.xlu0 %v3760, 64
  %v3864 = vpop.permute.xlu0 %3863
  %3865 = vrot.lane.b32.xlu0 %v3761, 64
  %v3866 = vpop.permute.xlu0 %3865
  %3867 = vrot.lane.b32.xlu0 %v3762, 64
  %v3868 = vpop.permute.xlu0 %3867
  %3869 = vrot.lane.b32.xlu0 %v3763, 64
  %v3870 = vpop.permute.xlu0 %3869
  %3871 = vrot.lane.b32.xlu0 %v3764, 64
  %v3872 = vpop.permute.xlu0 %3871
  %3873 = vrot.lane.b32.xlu0 %v3765, 64
  %v3874 = vpop.permute.xlu0 %3873
  %3875 = vrot.lane.b32.xlu0 %v3766, 64
  %v3876 = vpop.permute.xlu0 %3875
  %3877 = vrot.lane.b32.xlu0 %v3767, 64
  %v3878 = vpop.permute.xlu0 %3877
  %3879 = vrot.lane.b32.xlu0 %v3768, 64
  %v3880 = vpop.permute.xlu0 %3879
  %v3897 = vsel %vm1368, %v1875, %v3786
  %v3898 = vsel %vm1368, %v1876, %v3788
  %v3899 = vsel %vm1368, %v1877, %v3790
  %v3900 = vsel %vm1368, %v1878, %v3792
  %v3901 = vsel %vm1368, %v1879, %v3794
  %v3902 = vsel %vm1368, %v1880, %v3796
  %v3903 = vsel %vm1368, %v1881, %v3798
  %v3904 = vsel %vm1368, %v1882, %v3800
  %v3905 = vsel %vm1368, %v1883, %v3802
  %v3906 = vsel %vm1368, %v1884, %v3804
  %v3907 = vsel %vm1368, %v1885, %v3806
  %v3908 = vsel %vm1368, %v1886, %v3808
  %v3909 = vsel %vm1368, %v1887, %v3810
  %v3910 = vsel %vm1368, %v1888, %v3812
  %v3911 = vsel %vm1368, %v1889, %v3814
  %v3912 = vsel %vm1368, %v1890, %v3816
  %v3913 = vsel %vm1368, %v3095, %v3850
  %v3914 = vsel %vm1368, %v3096, %v3852
  %v3915 = vsel %vm1368, %v3097, %v3854
  %v3916 = vsel %vm1368, %v3098, %v3856
  %v3917 = vsel %vm1368, %v3099, %v3858
  %v3918 = vsel %vm1368, %v3100, %v3860
  %v3919 = vsel %vm1368, %v3101, %v3862
  %v3920 = vsel %vm1368, %v3102, %v3864
  %v3921 = vsel %vm1368, %v3103, %v3866
  %v3922 = vsel %vm1368, %v3104, %v3868
  %v3923 = vsel %vm1368, %v3105, %v3870
  %v3924 = vsel %vm1368, %v3106, %v3872
  %v3925 = vsel %vm1368, %v3107, %v3874
  %v3926 = vsel %vm1368, %v3108, %v3876
  %v3927 = vsel %vm1368, %v3109, %v3878
  %v3928 = vsel %vm1368, %v3110, %v3880
  %v3929 = vpack.c.bf16 %v3898, %v3897
  %v3930 = vpack.c.bf16 %v3914, %v3913
  %v3931 = vpack.c.bf16 %v3900, %v3899
  %v3932 = vpack.c.bf16 %v3916, %v3915
  %v3933 = vpack.c.bf16 %v3902, %v3901
  %v3934 = vpack.c.bf16 %v3918, %v3917
  %v3935 = vpack.c.bf16 %v3904, %v3903
  %v3936 = vpack.c.bf16 %v3920, %v3919
  %v3937 = vpack.c.bf16 %v3906, %v3905
  %v3938 = vpack.c.bf16 %v3922, %v3921
  %v3939 = vpack.c.bf16 %v3908, %v3907
  %v3940 = vpack.c.bf16 %v3924, %v3923
  %v3941 = vpack.c.bf16 %v3910, %v3909
  %v3942 = vpack.c.bf16 %v3926, %v3925
  %v3943 = vpack.c.bf16 %v3912, %v3911
  %v3944 = vpack.c.bf16 %v3928, %v3927
  %v3945 = vld [vmem:[%s5] sm:$0xff]
  %v3946 = vld [vmem:[%s5 + $0x8] sm:$0xff]
  %v3947 = vld [vmem:[%s5 + $0x10] sm:$0xff]
  %v3948 = vld [vmem:[%s5 + $0x18] sm:$0xff]
  %v3949 = vld [vmem:[%s5 + $0x20] sm:$0xff]
  %v3950 = vld [vmem:[%s5 + $0x28] sm:$0xff]
  %v3951 = vld [vmem:[%s5 + $0x30] sm:$0xff]
  %v3952 = vld [vmem:[%s5 + $0x38] sm:$0xff]
  %v3953 = vld [vmem:[%s5 + $0x40] sm:$0xff]
  %v3954 = vld [vmem:[%s5 + $0x48] sm:$0xff]
  %v3955 = vld [vmem:[%s5 + $0x50] sm:$0xff]
  %v3956 = vld [vmem:[%s5 + $0x58] sm:$0xff]
  %v3957 = vld [vmem:[%s5 + $0x60] sm:$0xff]
  %v3958 = vld [vmem:[%s5 + $0x68] sm:$0xff]
  %v3959 = vld [vmem:[%s5 + $0x70] sm:$0xff]
  %v3960 = vld [vmem:[%s5 + $0x78] sm:$0xff]
  %v3961 = vld [vmem:[%s5 + $0x80] sm:$0xff]
  %v3962 = vld [vmem:[%s5 + $0x88] sm:$0xff]
  %v3963 = vld [vmem:[%s5 + $0x90] sm:$0xff]
  %v3964 = vld [vmem:[%s5 + $0x98] sm:$0xff]
  %v3965 = vld [vmem:[%s5 + $0xa0] sm:$0xff]
  %v3966 = vld [vmem:[%s5 + $0xa8] sm:$0xff]
  %v3967 = vld [vmem:[%s5 + $0xb0] sm:$0xff]
  %v3968 = vld [vmem:[%s5 + $0xb8] sm:$0xff]
  %v3969 = vld [vmem:[%s5 + $0xc0] sm:$0xff]
  %v3970 = vld [vmem:[%s5 + $0xc8] sm:$0xff]
  %v3971 = vld [vmem:[%s5 + $0xd0] sm:$0xff]
  %v3972 = vld [vmem:[%s5 + $0xd8] sm:$0xff]
  %v3973 = vld [vmem:[%s5 + $0xe0] sm:$0xff]
  %v3974 = vld [vmem:[%s5 + $0xe8] sm:$0xff]
  %v3975 = vld [vmem:[%s5 + $0xf0] sm:$0xff]
  %v3976 = vld [vmem:[%s5 + $0xf8] sm:$0xff]
  %v3977 = vld [vmem:[%s8] sm:$0x3]
  %v3979 = vlaneseq
  %v3980 = vshrl.u32 %v3979, 7
  %v3981 = vsub.s32 0, %v3980
  %v3982 = vrot.slane %v3977, %v3981
  %v3983 = vlaneseq
  %v3984 = vshrl.u32 %v3983, 7
  %v3985 = vsub.s32 1, %v3984
  %v3986 = vrot.slane %v3977, %v3985
  %v4021 = vunpack.c.l.b16 %v3945
  %v4022 = vunpack.c.h.b16 %v3945
  %v4023 = vunpack.c.l.b16 %v3946
  %v4024 = vunpack.c.h.b16 %v3946
  %v4025 = vunpack.c.l.b16 %v3947
  %v4026 = vunpack.c.h.b16 %v3947
  %v4027 = vunpack.c.l.b16 %v3948
  %v4028 = vunpack.c.h.b16 %v3948
  %v4029 = vunpack.c.l.b16 %v3949
  %v4030 = vunpack.c.h.b16 %v3949
  %v4031 = vunpack.c.l.b16 %v3950
  %v4032 = vunpack.c.h.b16 %v3950
  %v4033 = vunpack.c.l.b16 %v3951
  %v4034 = vunpack.c.h.b16 %v3951
  %v4035 = vunpack.c.l.b16 %v3952
  %v4036 = vunpack.c.h.b16 %v3952
  %v4037 = vunpack.c.l.b16 %v3953
  %v4038 = vunpack.c.h.b16 %v3953
  %v4039 = vunpack.c.l.b16 %v3954
  %v4040 = vunpack.c.h.b16 %v3954
  %v4041 = vunpack.c.l.b16 %v3955
  %v4042 = vunpack.c.h.b16 %v3955
  %v4043 = vunpack.c.l.b16 %v3956
  %v4044 = vunpack.c.h.b16 %v3956
  %v4045 = vunpack.c.l.b16 %v3957
  %v4046 = vunpack.c.h.b16 %v3957
  %v4047 = vunpack.c.l.b16 %v3958
  %v4048 = vunpack.c.h.b16 %v3958
  %v4049 = vunpack.c.l.b16 %v3959
  %v4050 = vunpack.c.h.b16 %v3959
  %v4051 = vunpack.c.l.b16 %v3960
  %v4052 = vunpack.c.h.b16 %v3960
  %v4053 = vunpack.c.l.b16 %v3961
  %v4054 = vunpack.c.h.b16 %v3961
  %v4055 = vunpack.c.l.b16 %v3962
  %v4056 = vunpack.c.h.b16 %v3962
  %v4057 = vunpack.c.l.b16 %v3963
  %v4058 = vunpack.c.h.b16 %v3963
  %v4059 = vunpack.c.l.b16 %v3964
  %v4060 = vunpack.c.h.b16 %v3964
  %v4061 = vunpack.c.l.b16 %v3965
  %v4062 = vunpack.c.h.b16 %v3965
  %v4063 = vunpack.c.l.b16 %v3966
  %v4064 = vunpack.c.h.b16 %v3966
  %v4065 = vunpack.c.l.b16 %v3967
  %v4066 = vunpack.c.h.b16 %v3967
  %v4067 = vunpack.c.l.b16 %v3968
  %v4068 = vunpack.c.h.b16 %v3968
  %v4069 = vunpack.c.l.b16 %v3969
  %v4070 = vunpack.c.h.b16 %v3969
  %v4071 = vunpack.c.l.b16 %v3970
  %v4072 = vunpack.c.h.b16 %v3970
  %v4073 = vunpack.c.l.b16 %v3971
  %v4074 = vunpack.c.h.b16 %v3971
  %v4075 = vunpack.c.l.b16 %v3972
  %v4076 = vunpack.c.h.b16 %v3972
  %v4077 = vunpack.c.l.b16 %v3973
  %v4078 = vunpack.c.h.b16 %v3973
  %v4079 = vunpack.c.l.b16 %v3974
  %v4080 = vunpack.c.h.b16 %v3974
  %v4081 = vunpack.c.l.b16 %v3975
  %v4082 = vunpack.c.h.b16 %v3975
  %v4083 = vunpack.c.l.b16 %v3976
  %v4084 = vunpack.c.h.b16 %v3976
  %v4085 = vpack.c.b16 %v4023, %v4021
  %v4086 = vpack.c.b16 %v4024, %v4022
  %v4087 = vpack.c.b16 %v4027, %v4025
  %v4088 = vpack.c.b16 %v4028, %v4026
  %v4089 = vpack.c.b16 %v4031, %v4029
  %v4090 = vpack.c.b16 %v4032, %v4030
  %v4091 = vpack.c.b16 %v4035, %v4033
  %v4092 = vpack.c.b16 %v4036, %v4034
  %v4093 = vpack.c.b16 %v4039, %v4037
  %v4094 = vpack.c.b16 %v4040, %v4038
  %v4095 = vpack.c.b16 %v4043, %v4041
  %v4096 = vpack.c.b16 %v4044, %v4042
  %v4097 = vpack.c.b16 %v4047, %v4045
  %v4098 = vpack.c.b16 %v4048, %v4046
  %v4099 = vpack.c.b16 %v4051, %v4049
  %v4100 = vpack.c.b16 %v4052, %v4050
  %v4101 = vpack.c.b16 %v4055, %v4053
  %v4102 = vpack.c.b16 %v4056, %v4054
  %v4103 = vpack.c.b16 %v4059, %v4057
  %v4104 = vpack.c.b16 %v4060, %v4058
  %v4105 = vpack.c.b16 %v4063, %v4061
  %v4106 = vpack.c.b16 %v4064, %v4062
  %v4107 = vpack.c.b16 %v4067, %v4065
  %v4108 = vpack.c.b16 %v4068, %v4066
  %v4109 = vpack.c.b16 %v4071, %v4069
  %v4110 = vpack.c.b16 %v4072, %v4070
  %v4111 = vpack.c.b16 %v4075, %v4073
  %v4112 = vpack.c.b16 %v4076, %v4074
  %v4113 = vpack.c.b16 %v4079, %v4077
  %v4114 = vpack.c.b16 %v4080, %v4078
  %v4115 = vpack.c.b16 %v4083, %v4081
  %v4116 = vpack.c.b16 %v4084, %v4082
  %4149 = vmatprep.subr.bf16.mxu0 %v4086
  %4150 = vmatpush1.bf16.msra.mxu0 %v4085
  %4151 = vmatprep.subr.bf16.mxu0 %v4088
  %4152 = vmatpush1.bf16.msra.mxu0 %v4087
  %4153 = vmatprep.subr.bf16.mxu0 %v4090
  %4154 = vmatpush1.bf16.msra.mxu0 %v4089
  %4155 = vmatprep.subr.bf16.mxu0 %v4092
  %4156 = vmatpush1.bf16.msra.mxu0 %v4091
  %4157 = vmatprep.subr.bf16.mxu0 %v4094
  %4158 = vmatpush1.bf16.msra.mxu0 %v4093
  %4159 = vmatprep.subr.bf16.mxu0 %v4096
  %4160 = vmatpush1.bf16.msra.mxu0 %v4095
  %4161 = vmatprep.subr.bf16.mxu0 %v4098
  %4162 = vmatpush1.bf16.msra.mxu0 %v4097
  %4163 = vmatprep.subr.bf16.mxu0 %v4100
  %4164 = vmatpush1.bf16.msra.mxu0 %v4099
  %4165 = vmatprep.subr.bf16.mxu0 %v4102
  %4166 = vmatpush1.bf16.msra.mxu0 %v4101
  %4167 = vmatprep.subr.bf16.mxu0 %v4104
  %4168 = vmatpush1.bf16.msra.mxu0 %v4103
  %4169 = vmatprep.subr.bf16.mxu0 %v4106
  %4170 = vmatpush1.bf16.msra.mxu0 %v4105
  %4171 = vmatprep.subr.bf16.mxu0 %v4108
  %4172 = vmatpush1.bf16.msra.mxu0 %v4107
  %4173 = vmatprep.subr.bf16.mxu0 %v4110
  %4174 = vmatpush1.bf16.msra.mxu0 %v4109
  %4175 = vmatprep.subr.bf16.mxu0 %v4112
  %4176 = vmatpush1.bf16.msra.mxu0 %v4111
  %4177 = vmatprep.subr.bf16.mxu0 %v4114
  %4178 = vmatpush1.bf16.msra.mxu0 %v4113
  %4179 = vmatprep.subr.bf16.mxu0 %v4116
  %4180 = vmatpush1.bf16.msra.mxu0 %v4115
  %4181 = vmatprep.mubr.bf16.mxu0 %v3930
  %4182 = vmatmul.mubr.bf16.gmra.mrb[0].mxu0 %v3929
  %v4183 = vpop.f32.mrb[0].mxu0
  %v4184 = vadd.f32 %v3982, %v4183
  %v4185 = vpop.f32.mrb[0].mxu0
  %v4186 = vadd.f32 %v3986, %v4185
  %v4187 = vpop.f32.mrb[0].mxu0
  %v4188 = vadd.f32 %v3982, %v4187
  %v4189 = vpop.f32.mrb[0].mxu0
  %v4190 = vadd.f32 %v3986, %v4189
  %4191 = vmatprep.mubr.bf16.mxu0 %v3932
  %4192 = vmatmul.mubr.bf16.gmra.mrb[0].mxu0 %v3931
  %v4193 = vpop.f32.mrb[0].mxu0
  %v4194 = vadd.f32 %v3982, %v4193
  %v4195 = vpop.f32.mrb[0].mxu0
  %v4196 = vadd.f32 %v3986, %v4195
  %v4197 = vpop.f32.mrb[0].mxu0
  %v4198 = vadd.f32 %v3982, %v4197
  %v4199 = vpop.f32.mrb[0].mxu0
  %v4200 = vadd.f32 %v3986, %v4199
  %4201 = vmatprep.mubr.bf16.mxu0 %v3934
  %4202 = vmatmul.mubr.bf16.gmra.mrb[0].mxu0 %v3933
  %v4203 = vpop.f32.mrb[0].mxu0
  %v4204 = vadd.f32 %v3982, %v4203
  %v4205 = vpop.f32.mrb[0].mxu0
  %v4206 = vadd.f32 %v3986, %v4205
  %v4207 = vpop.f32.mrb[0].mxu0
  %v4208 = vadd.f32 %v3982, %v4207
  %v4209 = vpop.f32.mrb[0].mxu0
  %v4210 = vadd.f32 %v3986, %v4209
  %4211 = vmatprep.mubr.bf16.mxu0 %v3936
  %4212 = vmatmul.mubr.bf16.gmra.mrb[0].mxu0 %v3935
  %v4213 = vpop.f32.mrb[0].mxu0
  %v4214 = vadd.f32 %v3982, %v4213
  %v4215 = vpop.f32.mrb[0].mxu0
  %v4216 = vadd.f32 %v3986, %v4215
  %v4217 = vpop.f32.mrb[0].mxu0
  %v4218 = vadd.f32 %v3982, %v4217
  %v4219 = vpop.f32.mrb[0].mxu0
  %v4220 = vadd.f32 %v3986, %v4219
  %4221 = vmatprep.mubr.bf16.mxu0 %v3938
  %4222 = vmatmul.mubr.bf16.gmra.mrb[0].mxu0 %v3937
  %v4223 = vpop.f32.mrb[0].mxu0
  %v4224 = vadd.f32 %v3982, %v4223
  %v4225 = vpop.f32.mrb[0].mxu0
  %v4226 = vadd.f32 %v3986, %v4225
  %v4227 = vpop.f32.mrb[0].mxu0
  %v4228 = vadd.f32 %v3982, %v4227
  %v4229 = vpop.f32.mrb[0].mxu0
  %v4230 = vadd.f32 %v3986, %v4229
  %4231 = vmatprep.mubr.bf16.mxu0 %v3940
  %4232 = vmatmul.mubr.bf16.gmra.mrb[0].mxu0 %v3939
  %v4233 = vpop.f32.mrb[0].mxu0
  %v4234 = vadd.f32 %v3982, %v4233
  %v4235 = vpop.f32.mrb[0].mxu0
  %v4236 = vadd.f32 %v3986, %v4235
  %v4237 = vpop.f32.mrb[0].mxu0
  %v4238 = vadd.f32 %v3982, %v4237
  %v4239 = vpop.f32.mrb[0].mxu0
  %v4240 = vadd.f32 %v3986, %v4239
  %4241 = vmatprep.mubr.bf16.mxu0 %v3942
  %4242 = vmatmul.mubr.bf16.gmra.mrb[0].mxu0 %v3941
  %v4243 = vpop.f32.mrb[0].mxu0
  %v4244 = vadd.f32 %v3982, %v4243
  %v4245 = vpop.f32.mrb[0].mxu0
  %v4246 = vadd.f32 %v3986, %v4245
  %v4247 = vpop.f32.mrb[0].mxu0
  %v4248 = vadd.f32 %v3982, %v4247
  %v4249 = vpop.f32.mrb[0].mxu0
  %v4250 = vadd.f32 %v3986, %v4249
  %4251 = vmatprep.mubr.bf16.mxu0 %v3944
  %4252 = vmatmul.mubr.bf16.gmra.mrb[0].mxu0 %v3943
  %v4253 = vpop.f32.mrb[0].mxu0
  %v4254 = vadd.f32 %v3982, %v4253
  %v4255 = vpop.f32.mrb[0].mxu0
  %v4256 = vadd.f32 %v3986, %v4255
  %v4257 = vpop.f32.mrb[0].mxu0
  %v4258 = vadd.f32 %v3982, %v4257
  %v4259 = vpop.f32.mrb[0].mxu0
  %v4260 = vadd.f32 %v3986, %v4259
  %4261 = vdwg.mxu0
  %vm4262 = vcmp.ne.f32.partialorder %v4184, %v4184
  %vm4263 = vcmp.ne.f32.partialorder %v4186, %v4186
  %vm4264 = vcmp.ne.f32.partialorder %v4188, %v4188
  %vm4265 = vcmp.ne.f32.partialorder %v4190, %v4190
  %vm4266 = vcmp.ne.f32.partialorder %v4194, %v4194
  %vm4267 = vcmp.ne.f32.partialorder %v4196, %v4196
  %vm4268 = vcmp.ne.f32.partialorder %v4198, %v4198
  %vm4269 = vcmp.ne.f32.partialorder %v4200, %v4200
  %vm4270 = vcmp.ne.f32.partialorder %v4204, %v4204
  %vm4271 = vcmp.ne.f32.partialorder %v4206, %v4206
  %vm4272 = vcmp.ne.f32.partialorder %v4208, %v4208
  %vm4273 = vcmp.ne.f32.partialorder %v4210, %v4210
  %vm4274 = vcmp.ne.f32.partialorder %v4214, %v4214
  %vm4275 = vcmp.ne.f32.partialorder %v4216, %v4216
  %vm4276 = vcmp.ne.f32.partialorder %v4218, %v4218
  %vm4277 = vcmp.ne.f32.partialorder %v4220, %v4220
  %vm4278 = vcmp.ne.f32.partialorder %v4224, %v4224
  %vm4279 = vcmp.ne.f32.partialorder %v4226, %v4226
  %vm4280 = vcmp.ne.f32.partialorder %v4228, %v4228
  %vm4281 = vcmp.ne.f32.partialorder %v4230, %v4230
  %vm4282 = vcmp.ne.f32.partialorder %v4234, %v4234
  %vm4283 = vcmp.ne.f32.partialorder %v4236, %v4236
  %vm4284 = vcmp.ne.f32.partialorder %v4238, %v4238
  %vm4285 = vcmp.ne.f32.partialorder %v4240, %v4240
  %vm4286 = vcmp.ne.f32.partialorder %v4244, %v4244
  %vm4287 = vcmp.ne.f32.partialorder %v4246, %v4246
  %vm4288 = vcmp.ne.f32.partialorder %v4248, %v4248
  %vm4289 = vcmp.ne.f32.partialorder %v4250, %v4250
  %vm4290 = vcmp.ne.f32.partialorder %v4254, %v4254
  %vm4291 = vcmp.ne.f32.partialorder %v4256, %v4256
  %vm4292 = vcmp.ne.f32.partialorder %v4258, %v4258
  %vm4293 = vcmp.ne.f32.partialorder %v4260, %v4260
  %v4294 = vsel %vm4262, 0.0, %v4184
  %v4295 = vsel %vm4263, 0.0, %v4186
  %v4296 = vsel %vm4264, 0.0, %v4188
  %v4297 = vsel %vm4265, 0.0, %v4190
  %v4298 = vsel %vm4266, 0.0, %v4194
  %v4299 = vsel %vm4267, 0.0, %v4196
  %v4300 = vsel %vm4268, 0.0, %v4198
  %v4301 = vsel %vm4269, 0.0, %v4200
  %v4302 = vsel %vm4270, 0.0, %v4204
  %v4303 = vsel %vm4271, 0.0, %v4206
  %v4304 = vsel %vm4272, 0.0, %v4208
  %v4305 = vsel %vm4273, 0.0, %v4210
  %v4306 = vsel %vm4274, 0.0, %v4214
  %v4307 = vsel %vm4275, 0.0, %v4216
  %v4308 = vsel %vm4276, 0.0, %v4218
  %v4309 = vsel %vm4277, 0.0, %v4220
  %v4310 = vsel %vm4278, 0.0, %v4224
  %v4311 = vsel %vm4279, 0.0, %v4226
  %v4312 = vsel %vm4280, 0.0, %v4228
  %v4313 = vsel %vm4281, 0.0, %v4230
  %v4314 = vsel %vm4282, 0.0, %v4234
  %v4315 = vsel %vm4283, 0.0, %v4236
  %v4316 = vsel %vm4284, 0.0, %v4238
  %v4317 = vsel %vm4285, 0.0, %v4240
  %v4318 = vsel %vm4286, 0.0, %v4244
  %v4319 = vsel %vm4287, 0.0, %v4246
  %v4320 = vsel %vm4288, 0.0, %v4248
  %v4321 = vsel %vm4289, 0.0, %v4250
  %v4322 = vsel %vm4290, 0.0, %v4254
  %v4323 = vsel %vm4291, 0.0, %v4256
  %v4324 = vsel %vm4292, 0.0, %v4258
  %v4325 = vsel %vm4293, 0.0, %v4260
  %vm4326 = vcmp.eq.f32.partialorder %v4294, inf
  %vm4327 = vcmp.eq.f32.partialorder %v4295, inf
  %vm4328 = vcmp.eq.f32.partialorder %v4296, inf
  %vm4329 = vcmp.eq.f32.partialorder %v4297, inf
  %vm4330 = vcmp.eq.f32.partialorder %v4298, inf
  %vm4331 = vcmp.eq.f32.partialorder %v4299, inf
  %vm4332 = vcmp.eq.f32.partialorder %v4300, inf
  %vm4333 = vcmp.eq.f32.partialorder %v4301, inf
  %vm4334 = vcmp.eq.f32.partialorder %v4302, inf
  %vm4335 = vcmp.eq.f32.partialorder %v4303, inf
  %vm4336 = vcmp.eq.f32.partialorder %v4304, inf
  %vm4337 = vcmp.eq.f32.partialorder %v4305, inf
  %vm4338 = vcmp.eq.f32.partialorder %v4306, inf
  %vm4339 = vcmp.eq.f32.partialorder %v4307, inf
  %vm4340 = vcmp.eq.f32.partialorder %v4308, inf
  %vm4341 = vcmp.eq.f32.partialorder %v4309, inf
  %vm4342 = vcmp.eq.f32.partialorder %v4310, inf
  %vm4343 = vcmp.eq.f32.partialorder %v4311, inf
  %vm4344 = vcmp.eq.f32.partialorder %v4312, inf
  %vm4345 = vcmp.eq.f32.partialorder %v4313, inf
  %vm4346 = vcmp.eq.f32.partialorder %v4314, inf
  %vm4347 = vcmp.eq.f32.partialorder %v4315, inf
  %vm4348 = vcmp.eq.f32.partialorder %v4316, inf
  %vm4349 = vcmp.eq.f32.partialorder %v4317, inf
  %vm4350 = vcmp.eq.f32.partialorder %v4318, inf
  %vm4351 = vcmp.eq.f32.partialorder %v4319, inf
  %vm4352 = vcmp.eq.f32.partialorder %v4320, inf
  %vm4353 = vcmp.eq.f32.partialorder %v4321, inf
  %vm4354 = vcmp.eq.f32.partialorder %v4322, inf
  %vm4355 = vcmp.eq.f32.partialorder %v4323, inf
  %vm4356 = vcmp.eq.f32.partialorder %v4324, inf
  %vm4357 = vcmp.eq.f32.partialorder %v4325, inf
  %v4358 = vsel %vm4326, 1.0, %v4294
  %v4359 = vsel %vm4327, 1.0, %v4295
  %v4360 = vsel %vm4328, 1.0, %v4296
  %v4361 = vsel %vm4329, 1.0, %v4297
  %v4362 = vsel %vm4330, 1.0, %v4298
  %v4363 = vsel %vm4331, 1.0, %v4299
  %v4364 = vsel %vm4332, 1.0, %v4300
  %v4365 = vsel %vm4333, 1.0, %v4301
  %v4366 = vsel %vm4334, 1.0, %v4302
  %v4367 = vsel %vm4335, 1.0, %v4303
  %v4368 = vsel %vm4336, 1.0, %v4304
  %v4369 = vsel %vm4337, 1.0, %v4305
  %v4370 = vsel %vm4338, 1.0, %v4306
  %v4371 = vsel %vm4339, 1.0, %v4307
  %v4372 = vsel %vm4340, 1.0, %v4308
  %v4373 = vsel %vm4341, 1.0, %v4309
  %v4374 = vsel %vm4342, 1.0, %v4310
  %v4375 = vsel %vm4343, 1.0, %v4311
  %v4376 = vsel %vm4344, 1.0, %v4312
  %v4377 = vsel %vm4345, 1.0, %v4313
  %v4378 = vsel %vm4346, 1.0, %v4314
  %v4379 = vsel %vm4347, 1.0, %v4315
  %v4380 = vsel %vm4348, 1.0, %v4316
  %v4381 = vsel %vm4349, 1.0, %v4317
  %v4382 = vsel %vm4350, 1.0, %v4318
  %v4383 = vsel %vm4351, 1.0, %v4319
  %v4384 = vsel %vm4352, 1.0, %v4320
  %v4385 = vsel %vm4353, 1.0, %v4321
  %v4386 = vsel %vm4354, 1.0, %v4322
  %v4387 = vsel %vm4355, 1.0, %v4323
  %v4388 = vsel %vm4356, 1.0, %v4324
  %v4389 = vsel %vm4357, 1.0, %v4325
  %vm4390 = vcmp.eq.f32.partialorder %v4358, -inf
  %vm4391 = vcmp.eq.f32.partialorder %v4359, -inf
  %vm4392 = vcmp.eq.f32.partialorder %v4360, -inf
  %vm4393 = vcmp.eq.f32.partialorder %v4361, -inf
  %vm4394 = vcmp.eq.f32.partialorder %v4362, -inf
  %vm4395 = vcmp.eq.f32.partialorder %v4363, -inf
  %vm4396 = vcmp.eq.f32.partialorder %v4364, -inf
  %vm4397 = vcmp.eq.f32.partialorder %v4365, -inf
  %vm4398 = vcmp.eq.f32.partialorder %v4366, -inf
  %vm4399 = vcmp.eq.f32.partialorder %v4367, -inf
  %vm4400 = vcmp.eq.f32.partialorder %v4368, -inf
  %vm4401 = vcmp.eq.f32.partialorder %v4369, -inf
  %vm4402 = vcmp.eq.f32.partialorder %v4370, -inf
  %vm4403 = vcmp.eq.f32.partialorder %v4371, -inf
  %vm4404 = vcmp.eq.f32.partialorder %v4372, -inf
  %vm4405 = vcmp.eq.f32.partialorder %v4373, -inf
  %vm4406 = vcmp.eq.f32.partialorder %v4374, -inf
  %vm4407 = vcmp.eq.f32.partialorder %v4375, -inf
  %vm4408 = vcmp.eq.f32.partialorder %v4376, -inf
  %vm4409 = vcmp.eq.f32.partialorder %v4377, -inf
  %vm4410 = vcmp.eq.f32.partialorder %v4378, -inf
  %vm4411 = vcmp.eq.f32.partialorder %v4379, -inf
  %vm4412 = vcmp.eq.f32.partialorder %v4380, -inf
  %vm4413 = vcmp.eq.f32.partialorder %v4381, -inf
  %vm4414 = vcmp.eq.f32.partialorder %v4382, -inf
  %vm4415 = vcmp.eq.f32.partialorder %v4383, -inf
  %vm4416 = vcmp.eq.f32.partialorder %v4384, -inf
  %vm4417 = vcmp.eq.f32.partialorder %v4385, -inf
  %vm4418 = vcmp.eq.f32.partialorder %v4386, -inf
  %vm4419 = vcmp.eq.f32.partialorder %v4387, -inf
  %vm4420 = vcmp.eq.f32.partialorder %v4388, -inf
  %vm4421 = vcmp.eq.f32.partialorder %v4389, -inf
  %v4422 = vsel %vm4390, -1.0, %v4358
  %v4423 = vsel %vm4391, -1.0, %v4359
  %v4424 = vsel %vm4392, -1.0, %v4360
  %v4425 = vsel %vm4393, -1.0, %v4361
  %v4426 = vsel %vm4394, -1.0, %v4362
  %v4427 = vsel %vm4395, -1.0, %v4363
  %v4428 = vsel %vm4396, -1.0, %v4364
  %v4429 = vsel %vm4397, -1.0, %v4365
  %v4430 = vsel %vm4398, -1.0, %v4366
  %v4431 = vsel %vm4399, -1.0, %v4367
  %v4432 = vsel %vm4400, -1.0, %v4368
  %v4433 = vsel %vm4401, -1.0, %v4369
  %v4434 = vsel %vm4402, -1.0, %v4370
  %v4435 = vsel %vm4403, -1.0, %v4371
  %v4436 = vsel %vm4404, -1.0, %v4372
  %v4437 = vsel %vm4405, -1.0, %v4373
  %v4438 = vsel %vm4406, -1.0, %v4374
  %v4439 = vsel %vm4407, -1.0, %v4375
  %v4440 = vsel %vm4408, -1.0, %v4376
  %v4441 = vsel %vm4409, -1.0, %v4377
  %v4442 = vsel %vm4410, -1.0, %v4378
  %v4443 = vsel %vm4411, -1.0, %v4379
  %v4444 = vsel %vm4412, -1.0, %v4380
  %v4445 = vsel %vm4413, -1.0, %v4381
  %v4446 = vsel %vm4414, -1.0, %v4382
  %v4447 = vsel %vm4415, -1.0, %v4383
  %v4448 = vsel %vm4416, -1.0, %v4384
  %v4449 = vsel %vm4417, -1.0, %v4385
  %v4450 = vsel %vm4418, -1.0, %v4386
  %v4451 = vsel %vm4419, -1.0, %v4387
  %v4452 = vsel %vm4420, -1.0, %v4388
  %v4453 = vsel %vm4421, -1.0, %v4389
  %s4454 = sld [smem:[#allocation2]]
  %v4455 = vstv %s4454
  %v4456 = vmul.f32 %v4455, %v4422
  %v4457 = vmul.f32 %v4455, %v4423
  %v4458 = vmul.f32 %v4455, %v4424
  %v4459 = vmul.f32 %v4455, %v4425
  %v4460 = vmul.f32 %v4455, %v4426
  %v4461 = vmul.f32 %v4455, %v4427
  %v4462 = vmul.f32 %v4455, %v4428
  %v4463 = vmul.f32 %v4455, %v4429
  %v4464 = vmul.f32 %v4455, %v4430
  %v4465 = vmul.f32 %v4455, %v4431
  %v4466 = vmul.f32 %v4455, %v4432
  %v4467 = vmul.f32 %v4455, %v4433
  %v4468 = vmul.f32 %v4455, %v4434
  %v4469 = vmul.f32 %v4455, %v4435
  %v4470 = vmul.f32 %v4455, %v4436
  %v4471 = vmul.f32 %v4455, %v4437
  %v4472 = vmul.f32 %v4455, %v4438
  %v4473 = vmul.f32 %v4455, %v4439
  %v4474 = vmul.f32 %v4455, %v4440
  %v4475 = vmul.f32 %v4455, %v4441
  %v4476 = vmul.f32 %v4455, %v4442
  %v4477 = vmul.f32 %v4455, %v4443
  %v4478 = vmul.f32 %v4455, %v4444
  %v4479 = vmul.f32 %v4455, %v4445
  %v4480 = vmul.f32 %v4455, %v4446
  %v4481 = vmul.f32 %v4455, %v4447
  %v4482 = vmul.f32 %v4455, %v4448
  %v4483 = vmul.f32 %v4455, %v4449
  %v4484 = vmul.f32 %v4455, %v4450
  %v4485 = vmul.f32 %v4455, %v4451
  %v4486 = vmul.f32 %v4455, %v4452
  %v4487 = vmul.f32 %v4455, %v4453
  %v4488 = vadd.f32 %v43, %v4456
  %v4489 = vadd.f32 %v44, %v4457
  %v4490 = vadd.f32 %v45, %v4458
  %v4491 = vadd.f32 %v46, %v4459
  %v4492 = vadd.f32 %v47, %v4460
  %v4493 = vadd.f32 %v48, %v4461
  %v4494 = vadd.f32 %v49, %v4462
  %v4495 = vadd.f32 %v50, %v4463
  %v4496 = vadd.f32 %v51, %v4464
  %v4497 = vadd.f32 %v52, %v4465
  %v4498 = vadd.f32 %v53, %v4466
  %v4499 = vadd.f32 %v54, %v4467
  %v4500 = vadd.f32 %v55, %v4468
  %v4501 = vadd.f32 %v56, %v4469
  %v4502 = vadd.f32 %v57, %v4470
  %v4503 = vadd.f32 %v58, %v4471
  %v4504 = vadd.f32 %v59, %v4472
  %v4505 = vadd.f32 %v60, %v4473
  %v4506 = vadd.f32 %v61, %v4474
  %v4507 = vadd.f32 %v62, %v4475
  %v4508 = vadd.f32 %v63, %v4476
  %v4509 = vadd.f32 %v64, %v4477
  %v4510 = vadd.f32 %v65, %v4478
  %v4511 = vadd.f32 %v66, %v4479
  %v4512 = vadd.f32 %v67, %v4480
  %v4513 = vadd.f32 %v68, %v4481
  %v4514 = vadd.f32 %v69, %v4482
  %v4515 = vadd.f32 %v70, %v4483
  %v4516 = vadd.f32 %v71, %v4484
  %v4517 = vadd.f32 %v72, %v4485
  %v4518 = vadd.f32 %v73, %v4486
  %v4519 = vadd.f32 %v74, %v4487
  %v4520 = vadd.f32 %v4488, %v4489
  %4521 = vadd.xlane.f32.xlu0 %v4520
  %v4522 = vpop.xlane.xlu0 %4521
  %v4523 = vadd.f32 %v4490, %v4491
  %4524 = vadd.xlane.f32.xlu0 %v4523
  %v4525 = vpop.xlane.xlu0 %4524
  %v4526 = vadd.f32 %v4492, %v4493
  %4527 = vadd.xlane.f32.xlu0 %v4526
  %v4528 = vpop.xlane.xlu0 %4527
  %v4529 = vadd.f32 %v4494, %v4495
  %4530 = vadd.xlane.f32.xlu0 %v4529
  %v4531 = vpop.xlane.xlu0 %4530
  %v4532 = vadd.f32 %v4496, %v4497
  %4533 = vadd.xlane.f32.xlu0 %v4532
  %v4534 = vpop.xlane.xlu0 %4533
  %v4535 = vadd.f32 %v4498, %v4499
  %4536 = vadd.xlane.f32.xlu0 %v4535
  %v4537 = vpop.xlane.xlu0 %4536
  %v4538 = vadd.f32 %v4500, %v4501
  %4539 = vadd.xlane.f32.xlu0 %v4538
  %v4540 = vpop.xlane.xlu0 %4539
  %v4541 = vadd.f32 %v4502, %v4503
  %4542 = vadd.xlane.f32.xlu0 %v4541
  %v4543 = vpop.xlane.xlu0 %4542
  %v4544 = vadd.f32 %v4504, %v4505
  %4545 = vadd.xlane.f32.xlu0 %v4544
  %v4546 = vpop.xlane.xlu0 %4545
  %v4547 = vadd.f32 %v4506, %v4507
  %4548 = vadd.xlane.f32.xlu0 %v4547
  %v4549 = vpop.xlane.xlu0 %4548
  %v4550 = vadd.f32 %v4508, %v4509
  %4551 = vadd.xlane.f32.xlu0 %v4550
  %v4552 = vpop.xlane.xlu0 %4551
  %v4553 = vadd.f32 %v4510, %v4511
  %4554 = vadd.xlane.f32.xlu0 %v4553
  %v4555 = vpop.xlane.xlu0 %4554
  %v4556 = vadd.f32 %v4512, %v4513
  %4557 = vadd.xlane.f32.xlu0 %v4556
  %v4558 = vpop.xlane.xlu0 %4557
  %v4559 = vadd.f32 %v4514, %v4515
  %4560 = vadd.xlane.f32.xlu0 %v4559
  %v4561 = vpop.xlane.xlu0 %4560
  %v4562 = vadd.f32 %v4516, %v4517
  %4563 = vadd.xlane.f32.xlu0 %v4562
  %v4564 = vpop.xlane.xlu0 %4563
  %v4565 = vadd.f32 %v4518, %v4519
  %4566 = vadd.xlane.f32.xlu0 %v4565
  %v4567 = vpop.xlane.xlu0 %4566
  %v4568 = vrcp.pop 256.0
  %v4569 = vmul.f32 %v4522, %v4568
  %v4570 = vmul.f32 %v4525, %v4568
  %v4571 = vmul.f32 %v4528, %v4568
  %v4572 = vmul.f32 %v4531, %v4568
  %v4573 = vmul.f32 %v4534, %v4568
  %v4574 = vmul.f32 %v4537, %v4568
  %v4575 = vmul.f32 %v4540, %v4568
  %v4576 = vmul.f32 %v4543, %v4568
  %v4577 = vmul.f32 %v4546, %v4568
  %v4578 = vmul.f32 %v4549, %v4568
  %v4579 = vmul.f32 %v4552, %v4568
  %v4580 = vmul.f32 %v4555, %v4568
  %v4581 = vmul.f32 %v4558, %v4568
  %v4582 = vmul.f32 %v4561, %v4568
  %v4583 = vmul.f32 %v4564, %v4568
  %v4584 = vmul.f32 %v4567, %v4568
  %v4585 = vsub.f32 %v4488, %v4569
  %v4586 = vsub.f32 %v4489, %v4569
  %v4587 = vsub.f32 %v4490, %v4570
  %v4588 = vsub.f32 %v4491, %v4570
  %v4589 = vsub.f32 %v4492, %v4571
  %v4590 = vsub.f32 %v4493, %v4571
  %v4591 = vsub.f32 %v4494, %v4572
  %v4592 = vsub.f32 %v4495, %v4572
  %v4593 = vsub.f32 %v4496, %v4573
  %v4594 = vsub.f32 %v4497, %v4573
  %v4595 = vsub.f32 %v4498, %v4574
  %v4596 = vsub.f32 %v4499, %v4574
  %v4597 = vsub.f32 %v4500, %v4575
  %v4598 = vsub.f32 %v4501, %v4575
  %v4599 = vsub.f32 %v4502, %v4576
  %v4600 = vsub.f32 %v4503, %v4576
  %v4601 = vsub.f32 %v4504, %v4577
  %v4602 = vsub.f32 %v4505, %v4577
  %v4603 = vsub.f32 %v4506, %v4578
  %v4604 = vsub.f32 %v4507, %v4578
  %v4605 = vsub.f32 %v4508, %v4579
  %v4606 = vsub.f32 %v4509, %v4579
  %v4607 = vsub.f32 %v4510, %v4580
  %v4608 = vsub.f32 %v4511, %v4580
  %v4609 = vsub.f32 %v4512, %v4581
  %v4610 = vsub.f32 %v4513, %v4581
  %v4611 = vsub.f32 %v4514, %v4582
  %v4612 = vsub.f32 %v4515, %v4582
  %v4613 = vsub.f32 %v4516, %v4583
  %v4614 = vsub.f32 %v4517, %v4583
  %v4615 = vsub.f32 %v4518, %v4584
  %v4616 = vsub.f32 %v4519, %v4584
  %v4617 = vmul.f32 %v4585, %v4585
  %v4618 = vmul.f32 %v4586, %v4586
  %v4619 = vmul.f32 %v4587, %v4587
  %v4620 = vmul.f32 %v4588, %v4588
  %v4621 = vmul.f32 %v4589, %v4589
  %v4622 = vmul.f32 %v4590, %v4590
  %v4623 = vmul.f32 %v4591, %v4591
  %v4624 = vmul.f32 %v4592, %v4592
  %v4625 = vmul.f32 %v4593, %v4593
  %v4626 = vmul.f32 %v4594, %v4594
  %v4627 = vmul.f32 %v4595, %v4595
  %v4628 = vmul.f32 %v4596, %v4596
  %v4629 = vmul.f32 %v4597, %v4597
  %v4630 = vmul.f32 %v4598, %v4598
  %v4631 = vmul.f32 %v4599, %v4599
  %v4632 = vmul.f32 %v4600, %v4600
  %v4633 = vmul.f32 %v4601, %v4601
  %v4634 = vmul.f32 %v4602, %v4602
  %v4635 = vmul.f32 %v4603, %v4603
  %v4636 = vmul.f32 %v4604, %v4604
  %v4637 = vmul.f32 %v4605, %v4605
  %v4638 = vmul.f32 %v4606, %v4606
  %v4639 = vmul.f32 %v4607, %v4607
  %v4640 = vmul.f32 %v4608, %v4608
  %v4641 = vmul.f32 %v4609, %v4609
  %v4642 = vmul.f32 %v4610, %v4610
  %v4643 = vmul.f32 %v4611, %v4611
  %v4644 = vmul.f32 %v4612, %v4612
  %v4645 = vmul.f32 %v4613, %v4613
  %v4646 = vmul.f32 %v4614, %v4614
  %v4647 = vmul.f32 %v4615, %v4615
  %v4648 = vmul.f32 %v4616, %v4616
  %v4649 = vadd.f32 %v4617, %v4618
  %4650 = vadd.xlane.f32.xlu0 %v4649
  %v4651 = vpop.xlane.xlu0 %4650
  %v4652 = vadd.f32 %v4619, %v4620
  %4653 = vadd.xlane.f32.xlu0 %v4652
  %v4654 = vpop.xlane.xlu0 %4653
  %v4655 = vadd.f32 %v4621, %v4622
  %4656 = vadd.xlane.f32.xlu0 %v4655
  %v4657 = vpop.xlane.xlu0 %4656
  %v4658 = vadd.f32 %v4623, %v4624
  %4659 = vadd.xlane.f32.xlu0 %v4658
  %v4660 = vpop.xlane.xlu0 %4659
  %v4661 = vadd.f32 %v4625, %v4626
  %4662 = vadd.xlane.f32.xlu0 %v4661
  %v4663 = vpop.xlane.xlu0 %4662
  %v4664 = vadd.f32 %v4627, %v4628
  %4665 = vadd.xlane.f32.xlu0 %v4664
  %v4666 = vpop.xlane.xlu0 %4665
  %v4667 = vadd.f32 %v4629, %v4630
  %4668 = vadd.xlane.f32.xlu0 %v4667
  %v4669 = vpop.xlane.xlu0 %4668
  %v4670 = vadd.f32 %v4631, %v4632
  %4671 = vadd.xlane.f32.xlu0 %v4670
  %v4672 = vpop.xlane.xlu0 %4671
  %v4673 = vadd.f32 %v4633, %v4634
  %4674 = vadd.xlane.f32.xlu0 %v4673
  %v4675 = vpop.xlane.xlu0 %4674
  %v4676 = vadd.f32 %v4635, %v4636
  %4677 = vadd.xlane.f32.xlu0 %v4676
  %v4678 = vpop.xlane.xlu0 %4677
  %v4679 = vadd.f32 %v4637, %v4638
  %4680 = vadd.xlane.f32.xlu0 %v4679
  %v4681 = vpop.xlane.xlu0 %4680
  %v4682 = vadd.f32 %v4639, %v4640
  %4683 = vadd.xlane.f32.xlu0 %v4682
  %v4684 = vpop.xlane.xlu0 %4683
  %v4685 = vadd.f32 %v4641, %v4642
  %4686 = vadd.xlane.f32.xlu0 %v4685
  %v4687 = vpop.xlane.xlu0 %4686
  %v4688 = vadd.f32 %v4643, %v4644
  %4689 = vadd.xlane.f32.xlu0 %v4688
  %v4690 = vpop.xlane.xlu0 %4689
  %v4691 = vadd.f32 %v4645, %v4646
  %4692 = vadd.xlane.f32.xlu0 %v4691
  %v4693 = vpop.xlane.xlu0 %4692
  %v4694 = vadd.f32 %v4647, %v4648
  %4695 = vadd.xlane.f32.xlu0 %v4694
  %v4696 = vpop.xlane.xlu0 %4695
  %v4697 = vmul.f32 %v4651, %v4568
  %v4698 = vmul.f32 %v4654, %v4568
  %v4699 = vmul.f32 %v4657, %v4568
  %v4700 = vmul.f32 %v4660, %v4568
  %v4701 = vmul.f32 %v4663, %v4568
  %v4702 = vmul.f32 %v4666, %v4568
  %v4703 = vmul.f32 %v4669, %v4568
  %v4704 = vmul.f32 %v4672, %v4568
  %v4705 = vmul.f32 %v4675, %v4568
  %v4706 = vmul.f32 %v4678, %v4568
  %v4707 = vmul.f32 %v4681, %v4568
  %v4708 = vmul.f32 %v4684, %v4568
  %v4709 = vmul.f32 %v4687, %v4568
  %v4710 = vmul.f32 %v4690, %v4568
  %v4711 = vmul.f32 %v4693, %v4568
  %v4712 = vmul.f32 %v4696, %v4568
  %v4713 = vadd.f32 %v4697, 1e-05
  %v4714 = vadd.f32 %v4698, 1e-05
  %v4715 = vadd.f32 %v4699, 1e-05
  %v4716 = vadd.f32 %v4700, 1e-05
  %v4717 = vadd.f32 %v4701, 1e-05
  %v4718 = vadd.f32 %v4702, 1e-05
  %v4719 = vadd.f32 %v4703, 1e-05
  %v4720 = vadd.f32 %v4704, 1e-05
  %v4721 = vadd.f32 %v4705, 1e-05
  %v4722 = vadd.f32 %v4706, 1e-05
  %v4723 = vadd.f32 %v4707, 1e-05
  %v4724 = vadd.f32 %v4708, 1e-05
  %v4725 = vadd.f32 %v4709, 1e-05
  %v4726 = vadd.f32 %v4710, 1e-05
  %v4727 = vadd.f32 %v4711, 1e-05
  %v4728 = vadd.f32 %v4712, 1e-05
  %v4729 = vrsqrt.pop %v4713
  %v4730 = vrsqrt.pop %v4714
  %v4731 = vrsqrt.pop %v4715
  %v4732 = vrsqrt.pop %v4716
  %v4733 = vrsqrt.pop %v4717
  %v4734 = vrsqrt.pop %v4718
  %v4735 = vrsqrt.pop %v4719
  %v4736 = vrsqrt.pop %v4720
  %v4737 = vrsqrt.pop %v4721
  %v4738 = vrsqrt.pop %v4722
  %v4739 = vrsqrt.pop %v4723
  %v4740 = vrsqrt.pop %v4724
  %v4741 = vrsqrt.pop %v4725
  %v4742 = vrsqrt.pop %v4726
  %v4743 = vrsqrt.pop %v4727
  %v4744 = vrsqrt.pop %v4728
  %v4745 = vmul.f32 %v4585, %v4729
  %v4746 = vmul.f32 %v4586, %v4729
  %v4747 = vmul.f32 %v4587, %v4730
  %v4748 = vmul.f32 %v4588, %v4730
  %v4749 = vmul.f32 %v4589, %v4731
  %v4750 = vmul.f32 %v4590, %v4731
  %v4751 = vmul.f32 %v4591, %v4732
  %v4752 = vmul.f32 %v4592, %v4732
  %v4753 = vmul.f32 %v4593, %v4733
  %v4754 = vmul.f32 %v4594, %v4733
  %v4755 = vmul.f32 %v4595, %v4734
  %v4756 = vmul.f32 %v4596, %v4734
  %v4757 = vmul.f32 %v4597, %v4735
  %v4758 = vmul.f32 %v4598, %v4735
  %v4759 = vmul.f32 %v4599, %v4736
  %v4760 = vmul.f32 %v4600, %v4736
  %v4761 = vmul.f32 %v4601, %v4737
  %v4762 = vmul.f32 %v4602, %v4737
  %v4763 = vmul.f32 %v4603, %v4738
  %v4764 = vmul.f32 %v4604, %v4738
  %v4765 = vmul.f32 %v4605, %v4739
  %v4766 = vmul.f32 %v4606, %v4739
  %v4767 = vmul.f32 %v4607, %v4740
  %v4768 = vmul.f32 %v4608, %v4740
  %v4769 = vmul.f32 %v4609, %v4741
  %v4770 = vmul.f32 %v4610, %v4741
  %v4771 = vmul.f32 %v4611, %v4742
  %v4772 = vmul.f32 %v4612, %v4742
  %v4773 = vmul.f32 %v4613, %v4743
  %v4774 = vmul.f32 %v4614, %v4743
  %v4775 = vmul.f32 %v4615, %v4744
  %v4776 = vmul.f32 %v4616, %v4744
  %v4777 = vld [vmem:[%s9] sm:$0x3]
  %v4779 = vlaneseq
  %v4780 = vshrl.u32 %v4779, 7
  %v4781 = vsub.s32 0, %v4780
  %v4782 = vrot.slane %v4777, %v4781
  %v4783 = vlaneseq
  %v4784 = vshrl.u32 %v4783, 7
  %v4785 = vsub.s32 1, %v4784
  %v4786 = vrot.slane %v4777, %v4785
  %v4789 = vmul.f32 %v4745, %v4782
  %v4790 = vmul.f32 %v4746, %v4786
  %v4791 = vmul.f32 %v4747, %v4782
  %v4792 = vmul.f32 %v4748, %v4786
  %v4793 = vmul.f32 %v4749, %v4782
  %v4794 = vmul.f32 %v4750, %v4786
  %v4795 = vmul.f32 %v4751, %v4782
  %v4796 = vmul.f32 %v4752, %v4786
  %v4797 = vmul.f32 %v4753, %v4782
  %v4798 = vmul.f32 %v4754, %v4786
  %v4799 = vmul.f32 %v4755, %v4782
  %v4800 = vmul.f32 %v4756, %v4786
  %v4801 = vmul.f32 %v4757, %v4782
  %v4802 = vmul.f32 %v4758, %v4786
  %v4803 = vmul.f32 %v4759, %v4782
  %v4804 = vmul.f32 %v4760, %v4786
  %v4805 = vmul.f32 %v4761, %v4782
  %v4806 = vmul.f32 %v4762, %v4786
  %v4807 = vmul.f32 %v4763, %v4782
  %v4808 = vmul.f32 %v4764, %v4786
  %v4809 = vmul.f32 %v4765, %v4782
  %v4810 = vmul.f32 %v4766, %v4786
  %v4811 = vmul.f32 %v4767, %v4782
  %v4812 = vmul.f32 %v4768, %v4786
  %v4813 = vmul.f32 %v4769, %v4782
  %v4814 = vmul.f32 %v4770, %v4786
  %v4815 = vmul.f32 %v4771, %v4782
  %v4816 = vmul.f32 %v4772, %v4786
  %v4817 = vmul.f32 %v4773, %v4782
  %v4818 = vmul.f32 %v4774, %v4786
  %v4819 = vmul.f32 %v4775, %v4782
  %v4820 = vmul.f32 %v4776, %v4786
  %v4821 = vld [vmem:[%s10] sm:$0x3]
  %v4823 = vlaneseq
  %v4824 = vshrl.u32 %v4823, 7
  %v4825 = vsub.s32 0, %v4824
  %v4826 = vrot.slane %v4821, %v4825
  %v4827 = vlaneseq
  %v4828 = vshrl.u32 %v4827, 7
  %v4829 = vsub.s32 1, %v4828
  %v4830 = vrot.slane %v4821, %v4829
  %v4833 = vadd.f32 %v4789, %v4826
  %v4834 = vadd.f32 %v4790, %v4830
  %v4835 = vadd.f32 %v4791, %v4826
  %v4836 = vadd.f32 %v4792, %v4830
  %v4837 = vadd.f32 %v4793, %v4826
  %v4838 = vadd.f32 %v4794, %v4830
  %v4839 = vadd.f32 %v4795, %v4826
  %v4840 = vadd.f32 %v4796, %v4830
  %v4841 = vadd.f32 %v4797, %v4826
  %v4842 = vadd.f32 %v4798, %v4830
  %v4843 = vadd.f32 %v4799, %v4826
  %v4844 = vadd.f32 %v4800, %v4830
  %v4845 = vadd.f32 %v4801, %v4826
  %v4846 = vadd.f32 %v4802, %v4830
  %v4847 = vadd.f32 %v4803, %v4826
  %v4848 = vadd.f32 %v4804, %v4830
  %v4849 = vadd.f32 %v4805, %v4826
  %v4850 = vadd.f32 %v4806, %v4830
  %v4851 = vadd.f32 %v4807, %v4826
  %v4852 = vadd.f32 %v4808, %v4830
  %v4853 = vadd.f32 %v4809, %v4826
  %v4854 = vadd.f32 %v4810, %v4830
  %v4855 = vadd.f32 %v4811, %v4826
  %v4856 = vadd.f32 %v4812, %v4830
  %v4857 = vadd.f32 %v4813, %v4826
  %v4858 = vadd.f32 %v4814, %v4830
  %v4859 = vadd.f32 %v4815, %v4826
  %v4860 = vadd.f32 %v4816, %v4830
  %v4861 = vadd.f32 %v4817, %v4826
  %v4862 = vadd.f32 %v4818, %v4830
  %v4863 = vadd.f32 %v4819, %v4826
  %v4864 = vadd.f32 %v4820, %v4830
  %4865 = vst [vmem:[%s12] sm:$0xff] %v4833
  %4866 = vst [vmem:[%s12 + $0x8] sm:$0xff] %v4834
  %4867 = vst [vmem:[%s12 + $0x10] sm:$0xff] %v4835
  %4868 = vst [vmem:[%s12 + $0x18] sm:$0xff] %v4836
  %4869 = vst [vmem:[%s12 + $0x20] sm:$0xff] %v4837
  %4870 = vst [vmem:[%s12 + $0x28] sm:$0xff] %v4838
  %4871 = vst [vmem:[%s12 + $0x30] sm:$0xff] %v4839
  %4872 = vst [vmem:[%s12 + $0x38] sm:$0xff] %v4840
  %4873 = vst [vmem:[%s12 + $0x40] sm:$0xff] %v4841
  %4874 = vst [vmem:[%s12 + $0x48] sm:$0xff] %v4842
  %4875 = vst [vmem:[%s12 + $0x50] sm:$0xff] %v4843
  %4876 = vst [vmem:[%s12 + $0x58] sm:$0xff] %v4844
  %4877 = vst [vmem:[%s12 + $0x60] sm:$0xff] %v4845
  %4878 = vst [vmem:[%s12 + $0x68] sm:$0xff] %v4846
  %4879 = vst [vmem:[%s12 + $0x70] sm:$0xff] %v4847
  %4880 = vst [vmem:[%s12 + $0x78] sm:$0xff] %v4848
  %4881 = vst [vmem:[%s12 + $0x80] sm:$0xff] %v4849
  %4882 = vst [vmem:[%s12 + $0x88] sm:$0xff] %v4850
  %4883 = vst [vmem:[%s12 + $0x90] sm:$0xff] %v4851
  %4884 = vst [vmem:[%s12 + $0x98] sm:$0xff] %v4852
  %4885 = vst [vmem:[%s12 + $0xa0] sm:$0xff] %v4853
  %4886 = vst [vmem:[%s12 + $0xa8] sm:$0xff] %v4854
  %4887 = vst [vmem:[%s12 + $0xb0] sm:$0xff] %v4855
  %4888 = vst [vmem:[%s12 + $0xb8] sm:$0xff] %v4856
  %4889 = vst [vmem:[%s12 + $0xc0] sm:$0xff] %v4857
  %4890 = vst [vmem:[%s12 + $0xc8] sm:$0xff] %v4858
  %4891 = vst [vmem:[%s12 + $0xd0] sm:$0xff] %v4859
  %4892 = vst [vmem:[%s12 + $0xd8] sm:$0xff] %v4860
  %4893 = vst [vmem:[%s12 + $0xe0] sm:$0xff] %v4861
  %4894 = vst [vmem:[%s12 + $0xe8] sm:$0xff] %v4862
  %4895 = vst [vmem:[%s12 + $0xf0] sm:$0xff] %v4863
  %4896 = vst [vmem:[%s12 + $0xf8] sm:$0xff] %v4864
  // Predicated region
  $region50: #{cross_attention.1} parent=0 // pred_check
    _
  $region51: #{cross_attention.1} parent=0 // pred_check_branch
    %4898 = sbr.rel (0) target = $region53
  $region52: #{cross_attention.1} parent=0 // pred_region
    _
  $region53: #{cross_attention.1} parent=0 // pred_fallthru
    _
  // Predicated region
  $region54: #{cross_attention.1} parent=0 // pred_check
    _
  $region55: #{cross_attention.1} parent=0 // pred_check_branch
    %4900 = sbr.rel (0) target = $region57
  $region56: #{cross_attention.1} parent=0 // pred_region
    _
  $region57: #{cross_attention.1} parent=0 // pred_fallthru
    _

</llo_original>
